<compile_context>
chip_gen: v7x
topology: tpu7x:2x2x1
jax: 0.10.0
libtpu: 0.0.40
codegen_flags: <defaults>
</compile_context>

<pallas_src>
import jax
import jax.numpy as jnp
from jax.experimental import pallas as pl
from jax.experimental.pallas import tpu as pltpu


STATE_SHAPE = 8
ACTION_SIZE = 4
DURATION_SIZE = 1
OUT_DIM = ACTION_SIZE + DURATION_SIZE   # 5 real output columns
OUT_PAD = 128                           # fc3 head padded to a full lane width
HID1 = 1024
HID2 = 512


def _round_up(n, m):
    return ((n + m - 1) // m) * m


def dqn_kernel(x_ref, w1_ref, b1_ref, w2_ref, b2_ref, w3_ref, b3_ref, out_ref):
    # fc1 + relu  (bf16 MXU operands, f32 accumulation)
    x = x_ref[...].astype(jnp.bfloat16)
    h1 = jnp.dot(x, w1_ref[...], preferred_element_type=jnp.float32)
    h1 = jnp.maximum(h1 + b1_ref[...], 0.0)
    # fc2 + relu
    h2 = jnp.dot(h1.astype(jnp.bfloat16), w2_ref[...],
                 preferred_element_type=jnp.float32)
    h2 = jnp.maximum(h2 + b2_ref[...], 0.0)
    # fc3 (padded to 128 output lanes -> lane-dense store, non-degenerate MXU N).
    # Raw q only: the softplus on the single duration column is applied in the
    # wrapper after slicing, so no iota/select/EUP work over 128 lanes here.
    q = jnp.dot(h2.astype(jnp.bfloat16), w3_ref[...],
                preferred_element_type=jnp.float32) + b3_ref[...]
    out_ref[...] = q.astype(out_ref.dtype)


def _make_call(TB, B_pad, out_dtype, single_buffer_consts, cost):
    if single_buffer_consts:
        def const_spec(shape):
            # Constant block index across the whole grid -> one buffer suffices.
            return pl.BlockSpec(shape, lambda i: (0, 0),
                                pipeline_mode=pl.Buffered(1))
    else:
        def const_spec(shape):
            return pl.BlockSpec(shape, lambda i: (0, 0))

    return pl.pallas_call(
        dqn_kernel,
        out_shape=jax.ShapeDtypeStruct((B_pad, OUT_PAD), out_dtype),
        grid=(B_pad // TB,),
        in_specs=[
            pl.BlockSpec((TB, STATE_SHAPE), lambda i: (i, 0)),   # x tile
            const_spec((STATE_SHAPE, HID1)),                     # w1
            const_spec((1, HID1)),                               # b1
            const_spec((HID1, HID2)),                            # w2
            const_spec((1, HID2)),                               # b2
            const_spec((HID2, OUT_PAD)),                         # w3 (padded)
            const_spec((1, OUT_PAD)),                            # b3 (padded)
        ],
        out_specs=pl.BlockSpec((TB, OUT_PAD), lambda i: (i, 0)),
        compiler_params=pltpu.CompilerParams(
            dimension_semantics=("parallel",),
            vmem_limit_bytes=48 * 1024 * 1024,
        ),
        cost_estimate=cost,
    )


def dqn_forward(x, params, *, tb=2048, out_dtype=jnp.float32):
    w1, b1, w2, b2, w3, b3 = params
    B = x.shape[0]

    # Batch tile: multiple of 8 sublanes, capped by tb. At TB=2048 the f32/bf16
    # intermediates are ~23-25 MiB -> fits v5e/v6e (128 MiB) and v7x (64 MiB).
    TB = min(tb, _round_up(B, 8))
    # Keep >= 2 grid steps whenever the batch allows it so both v7x TensorCores
    # get work along the "parallel" batch axis.
    if B >= 16:
        TB = min(TB, _round_up(-(-B // 2), 8))
    B_pad = _round_up(B, TB)
    if B_pad != B:
        x = jnp.pad(x, ((0, B_pad - B), (0, 0)))

    weight_bytes = sum(int(a.size) * a.dtype.itemsize
                       for a in (w1, b1, w2, b2, w3, b3))
    cost = pl.CostEstimate(
        flops=2 * B_pad * (STATE_SHAPE * HID1 + HID1 * HID2 + HID2 * OUT_PAD),
        transcendentals=0,  # softplus moved to the wrapper
        bytes_accessed=weight_bytes
        + B_pad * (STATE_SHAPE * 4 + OUT_PAD * jnp.dtype(out_dtype).itemsize),
    )

    args = (x, w1, b1, w2, b2, w3, b3)
    try:
        q = _make_call(TB, B_pad, out_dtype, True, cost)(*args)
    except Exception:
        # Fallback if this JAX build rejects single-buffered constant blocks.
        q = _make_call(TB, B_pad, out_dtype, False, cost)(*args)

    q = q[:B, :OUT_DIM].astype(jnp.float32)
    # softplus only on the duration column; logaddexp(q, 0) == log(1 + exp(q)),
    # numerically stable and matches torch.nn.functional.softplus.
    return jnp.concatenate([q[:, :-1], jnp.logaddexp(q[:, -1:], 0.0)], axis=1)


def init_params(key):
    """Deterministic init matching nn.Linear shapes; weights stored (in, out).
    Matmul weights are bf16; biases stay f32. w3/b3 are zero-padded to 128 lanes."""
    ks = jax.random.split(key, 6)

    def uniform(k, shape, fan_in, dtype=jnp.float32):
        bound = 1.0 / jnp.sqrt(fan_in)
        return jax.random.uniform(k, shape, jnp.float32, -bound, bound).astype(dtype)

    w1 = uniform(ks[0], (STATE_SHAPE, HID1), STATE_SHAPE, jnp.bfloat16)
    b1 = uniform(ks[1], (1, HID1), STATE_SHAPE)
    w2 = uniform(ks[2], (HID1, HID2), HID1, jnp.bfloat16)
    b2 = uniform(ks[3], (1, HID2), HID1)
    w3_core = uniform(ks[4], (HID2, OUT_DIM), HID2, jnp.bfloat16)
    b3_core = uniform(ks[5], (1, OUT_DIM), HID2)
    w3 = jnp.zeros((HID2, OUT_PAD), jnp.bfloat16).at[:, :OUT_DIM].set(w3_core)
    b3 = jnp.zeros((1, OUT_PAD), jnp.float32).at[:, :OUT_DIM].set(b3_core)
    return (w1, b1, w2, b2, w3, b3)


def dqn_reference(x, params):
    """Pure-JAX reference mirroring the kernel arithmetic (bf16 matmul operands,
    f32 accumulation) and the original PyTorch forward semantics.
    Note: bf16 operands deviate from a true f32 PyTorch forward by up to ~1e-2
    relative after three layers -- acceptable for DQN inference."""
    w1, b1, w2, b2, w3, b3 = params
    h1 = jnp.maximum(jnp.dot(x.astype(jnp.bfloat16), w1,
                             preferred_element_type=jnp.float32) + b1, 0.0)
    h2 = jnp.maximum(jnp.dot(h1.astype(jnp.bfloat16), w2,
                             preferred_element_type=jnp.float32) + b2, 0.0)
    q = jnp.dot(h2.astype(jnp.bfloat16), w3,
                preferred_element_type=jnp.float32) + b3
    q = q[:, :OUT_DIM]
    return jnp.concatenate([q[:, :-1], jnp.logaddexp(q[:, -1:], 0.0)], axis=1)


if __name__ == "__main__":
    key = jax.random.PRNGKey(0)
    pkey, xkey, xkey2 = jax.random.split(key, 3)
    params = init_params(pkey)

    # Small batch (single tile, padded to 8 rows internally).
    B = 4
    x = jax.random.normal(xkey, (B, STATE_SHAPE), jnp.float32)
    out = jax.block_until_ready(dqn_forward(x, params))
    ref = dqn_reference(x, params)
    assert out.shape == (B, OUT_DIM)
    assert jnp.allclose(out, ref, atol=1e-3, rtol=1e-3), float(jnp.max(jnp.abs(out - ref)))

    # Larger non-multiple batch: exercises >= 2 grid steps + tail padding.
    B2 = 600
    x2 = jax.random.normal(xkey2, (B2, STATE_SHAPE), jnp.float32)
    out2 = jax.block_until_ready(dqn_forward(x2, params))
    ref2 = dqn_reference(x2, params)
    assert out2.shape == (B2, OUT_DIM)
    assert jnp.allclose(out2, ref2, atol=1e-3, rtol=1e-3), float(jnp.max(jnp.abs(out2 - ref2)))

    print("KERNEL_OK")
</pallas_src>

<mosaic_0001>
module attributes {stable_mosaic.version = 11 : i64} {
  func.func @dqn_kernel(%arg0: i32, %arg1: memref<8x8xf32, #tpu.memory_space<vmem>>, %arg2: memref<8x1024xbf16, #tpu.memory_space<vmem>>, %arg3: memref<1x1024xf32, #tpu.memory_space<vmem>>, %arg4: memref<1024x512xbf16, #tpu.memory_space<vmem>>, %arg5: memref<1x512xf32, #tpu.memory_space<vmem>>, %arg6: memref<512x128xbf16, #tpu.memory_space<vmem>>, %arg7: memref<1x128xf32, #tpu.memory_space<vmem>>, %arg8: memref<8x128xf32, #tpu.memory_space<vmem>>) attributes {dimension_semantics = [#tpu.dimension_semantics<parallel>], iteration_bounds = array<i64: 1>, scalar_prefetch = 0 : i64, scratch_operands = 0 : i64, tpu.core_type = #tpu.core_type<tc>, window_params = [{transform_indices = @transform_0, window_bounds = array<i64: 8, 8>}, {pipeline_mode = #tpu.pipeline_mode<synchronous>, transform_indices = @transform_1, window_bounds = array<i64: 8, 1024>}, {pipeline_mode = #tpu.pipeline_mode<synchronous>, transform_indices = @transform_2, window_bounds = array<i64: 1, 1024>}, {pipeline_mode = #tpu.pipeline_mode<synchronous>, transform_indices = @transform_3, window_bounds = array<i64: 1024, 512>}, {pipeline_mode = #tpu.pipeline_mode<synchronous>, transform_indices = @transform_4, window_bounds = array<i64: 1, 512>}, {pipeline_mode = #tpu.pipeline_mode<synchronous>, transform_indices = @transform_5, window_bounds = array<i64: 512, 128>}, {pipeline_mode = #tpu.pipeline_mode<synchronous>, transform_indices = @transform_6, window_bounds = array<i64: 1, 128>}, {transform_indices = @transform_7, window_bounds = array<i64: 8, 128>}]} {
    %c0 = arith.constant 0 : index
    %c0_0 = arith.constant 0 : index
    %0 = vector.load %arg1[%c0, %c0_0] : memref<8x8xf32, #tpu.memory_space<vmem>>, vector<8x8xf32>
    %1 = arith.truncf %0 : vector<8x8xf32> to vector<8x8xbf16>
    %c0_1 = arith.constant 0 : index
    %c0_2 = arith.constant 0 : index
    %2 = vector.load %arg2[%c0_1, %c0_2] : memref<8x1024xbf16, #tpu.memory_space<vmem>>, vector<8x1024xbf16>
    %cst = arith.constant dense<0.000000e+00> : vector<8x1024xf32>
    %3 = tpu.matmul %1, %2, %cst {dimension_numbers = #tpu.dot_dimension_numbers<[1], [0], [0], [1], [0, 0, 1, 1], [], []>} : vector<8x8xbf16>, vector<8x1024xbf16>, vector<8x1024xf32> -> vector<8x1024xf32>
    %c0_3 = arith.constant 0 : index
    %c0_4 = arith.constant 0 : index
    %4 = vector.load %arg3[%c0_3, %c0_4] : memref<1x1024xf32, #tpu.memory_space<vmem>>, vector<1x1024xf32>
    %5 = vector.broadcast %4 : vector<1x1024xf32> to vector<8x1024xf32>
    %6 = arith.addf %3, %5 : vector<8x1024xf32>
    %cst_5 = arith.constant 0.000000e+00 : f32
    %7 = vector.broadcast %cst_5 : f32 to vector<8x1024xf32>
    %8 = arith.maximumf %6, %7 : vector<8x1024xf32>
    %9 = arith.truncf %8 : vector<8x1024xf32> to vector<8x1024xbf16>
    %c0_6 = arith.constant 0 : index
    %c0_7 = arith.constant 0 : index
    %10 = vector.load %arg4[%c0_6, %c0_7] : memref<1024x512xbf16, #tpu.memory_space<vmem>>, vector<1024x512xbf16>
    %cst_8 = arith.constant dense<0.000000e+00> : vector<8x512xf32>
    %11 = tpu.matmul %9, %10, %cst_8 {dimension_numbers = #tpu.dot_dimension_numbers<[1], [0], [0], [1], [0, 0, 1, 1], [], []>} : vector<8x1024xbf16>, vector<1024x512xbf16>, vector<8x512xf32> -> vector<8x512xf32>
    %c0_9 = arith.constant 0 : index
    %c0_10 = arith.constant 0 : index
    %12 = vector.load %arg5[%c0_9, %c0_10] : memref<1x512xf32, #tpu.memory_space<vmem>>, vector<1x512xf32>
    %13 = vector.broadcast %12 : vector<1x512xf32> to vector<8x512xf32>
    %14 = arith.addf %11, %13 : vector<8x512xf32>
    %cst_11 = arith.constant 0.000000e+00 : f32
    %15 = vector.broadcast %cst_11 : f32 to vector<8x512xf32>
    %16 = arith.maximumf %14, %15 : vector<8x512xf32>
    %17 = arith.truncf %16 : vector<8x512xf32> to vector<8x512xbf16>
    %c0_12 = arith.constant 0 : index
    %c0_13 = arith.constant 0 : index
    %18 = vector.load %arg6[%c0_12, %c0_13] : memref<512x128xbf16, #tpu.memory_space<vmem>>, vector<512x128xbf16>
    %cst_14 = arith.constant dense<0.000000e+00> : vector<8x128xf32>
    %19 = tpu.matmul %17, %18, %cst_14 {dimension_numbers = #tpu.dot_dimension_numbers<[1], [0], [0], [1], [0, 0, 1, 1], [], []>} : vector<8x512xbf16>, vector<512x128xbf16>, vector<8x128xf32> -> vector<8x128xf32>
    %c0_15 = arith.constant 0 : index
    %c0_16 = arith.constant 0 : index
    %20 = vector.load %arg7[%c0_15, %c0_16] : memref<1x128xf32, #tpu.memory_space<vmem>>, vector<1x128xf32>
    %21 = vector.broadcast %20 : vector<1x128xf32> to vector<8x128xf32>
    %22 = arith.addf %19, %21 : vector<8x128xf32>
    %c0_17 = arith.constant 0 : index
    %c0_18 = arith.constant 0 : index
    %23 = vector.load %arg8[%c0_17, %c0_18] : memref<8x128xf32, #tpu.memory_space<vmem>>, vector<8x128xf32>
    tpu.vector_store %arg8[%c0_17, %c0_18], %22 {strides = array<i32>} : memref<8x128xf32, #tpu.memory_space<vmem>>, vector<8x128xf32>,
    return
  }
  func.func @transform_0(%arg0: i32) -> (i32, i32) {
    %c0_i32 = arith.constant 0 : i32
    %c0_i32_0 = arith.constant 0 : i32
    return %arg0, %c0_i32 : i32, i32
  }
  func.func @transform_1(%arg0: i32) -> (i32, i32) {
    %c0_i32 = arith.constant 0 : i32
    %c0_i32_0 = arith.constant 0 : i32
    %c0_i32_1 = arith.constant 0 : i32
    return %c0_i32, %c0_i32_0 : i32, i32
  }
  func.func @transform_2(%arg0: i32) -> (i32, i32) {
    %c0_i32 = arith.constant 0 : i32
    %c0_i32_0 = arith.constant 0 : i32
    %c0_i32_1 = arith.constant 0 : i32
    return %c0_i32, %c0_i32_0 : i32, i32
  }
  func.func @transform_3(%arg0: i32) -> (i32, i32) {
    %c0_i32 = arith.constant 0 : i32
    %c0_i32_0 = arith.constant 0 : i32
    %c0_i32_1 = arith.constant 0 : i32
    return %c0_i32, %c0_i32_0 : i32, i32
  }
  func.func @transform_4(%arg0: i32) -> (i32, i32) {
    %c0_i32 = arith.constant 0 : i32
    %c0_i32_0 = arith.constant 0 : i32
    %c0_i32_1 = arith.constant 0 : i32
    return %c0_i32, %c0_i32_0 : i32, i32
  }
  func.func @transform_5(%arg0: i32) -> (i32, i32) {
    %c0_i32 = arith.constant 0 : i32
    %c0_i32_0 = arith.constant 0 : i32
    %c0_i32_1 = arith.constant 0 : i32
    return %c0_i32, %c0_i32_0 : i32, i32
  }
  func.func @transform_6(%arg0: i32) -> (i32, i32) {
    %c0_i32 = arith.constant 0 : i32
    %c0_i32_0 = arith.constant 0 : i32
    %c0_i32_1 = arith.constant 0 : i32
    return %c0_i32, %c0_i32_0 : i32, i32
  }
  func.func @transform_7(%arg0: i32) -> (i32, i32) {
    %c0_i32 = arith.constant 0 : i32
    %c0_i32_0 = arith.constant 0 : i32
    return %arg0, %c0_i32 : i32, i32
  }
}

module attributes {stable_mosaic.version = 11 : i64} {
  func.func @dqn_kernel(%arg0: i32, %arg1: memref<8x8xf32, #tpu.memory_space<vmem>>, %arg2: memref<8x1024xbf16, #tpu.memory_space<vmem>>, %arg3: memref<1x1024xf32, #tpu.memory_space<vmem>>, %arg4: memref<1024x512xbf16, #tpu.memory_space<vmem>>, %arg5: memref<1x512xf32, #tpu.memory_space<vmem>>, %arg6: memref<512x128xbf16, #tpu.memory_space<vmem>>, %arg7: memref<1x128xf32, #tpu.memory_space<vmem>>, %arg8: memref<8x128xf32, #tpu.memory_space<vmem>>) attributes {dimension_semantics = [#tpu.dimension_semantics<parallel>], iteration_bounds = array<i64: 1>, scalar_prefetch = 0 : i64, scratch_operands = 0 : i64, tpu.core_type = #tpu.core_type<tc>, window_params = [{transform_indices = @transform_0, window_bounds = array<i64: 8, 8>}, {pipeline_mode = #tpu.pipeline_mode<synchronous>, transform_indices = @transform_1, window_bounds = array<i64: 8, 1024>}, {pipeline_mode = #tpu.pipeline_mode<synchronous>, transform_indices = @transform_2, window_bounds = array<i64: 1, 1024>}, {pipeline_mode = #tpu.pipeline_mode<synchronous>, transform_indices = @transform_3, window_bounds = array<i64: 1024, 512>}, {pipeline_mode = #tpu.pipeline_mode<synchronous>, transform_indices = @transform_4, window_bounds = array<i64: 1, 512>}, {pipeline_mode = #tpu.pipeline_mode<synchronous>, transform_indices = @transform_5, window_bounds = array<i64: 512, 128>}, {pipeline_mode = #tpu.pipeline_mode<synchronous>, transform_indices = @transform_6, window_bounds = array<i64: 1, 128>}, {transform_indices = @transform_7, window_bounds = array<i64: 8, 128>}]} {
    %c0 = arith.constant 0 : index
    %c0_0 = arith.constant 0 : index
    %0 = vector.load %arg1[%c0, %c0_0] : memref<8x8xf32, #tpu.memory_space<vmem>>, vector<8x8xf32>
    %1 = arith.truncf %0 : vector<8x8xf32> to vector<8x8xbf16>
    %c0_1 = arith.constant 0 : index
    %c0_2 = arith.constant 0 : index
    %2 = vector.load %arg2[%c0_1, %c0_2] : memref<8x1024xbf16, #tpu.memory_space<vmem>>, vector<8x1024xbf16>
    %cst = arith.constant dense<0.000000e+00> : vector<8x1024xf32>
    %3 = tpu.matmul %1, %2, %cst {dimension_numbers = #tpu.dot_dimension_numbers<[1], [0], [0], [1], [0, 0, 1, 1], [], []>} : vector<8x8xbf16>, vector<8x1024xbf16>, vector<8x1024xf32> -> vector<8x1024xf32>
    %c0_3 = arith.constant 0 : index
    %c0_4 = arith.constant 0 : index
    %4 = vector.load %arg3[%c0_3, %c0_4] : memref<1x1024xf32, #tpu.memory_space<vmem>>, vector<1x1024xf32>
    %5 = vector.broadcast %4 : vector<1x1024xf32> to vector<8x1024xf32>
    %6 = arith.addf %3, %5 : vector<8x1024xf32>
    %cst_5 = arith.constant 0.000000e+00 : f32
    %7 = vector.broadcast %cst_5 : f32 to vector<8x1024xf32>
    %8 = arith.maximumf %6, %7 : vector<8x1024xf32>
    %9 = arith.truncf %8 : vector<8x1024xf32> to vector<8x1024xbf16>
    %c0_6 = arith.constant 0 : index
    %c0_7 = arith.constant 0 : index
    %10 = vector.load %arg4[%c0_6, %c0_7] : memref<1024x512xbf16, #tpu.memory_space<vmem>>, vector<1024x512xbf16>
    %cst_8 = arith.constant dense<0.000000e+00> : vector<8x512xf32>
    %11 = tpu.matmul %9, %10, %cst_8 {dimension_numbers = #tpu.dot_dimension_numbers<[1], [0], [0], [1], [0, 0, 1, 1], [], []>} : vector<8x1024xbf16>, vector<1024x512xbf16>, vector<8x512xf32> -> vector<8x512xf32>
    %c0_9 = arith.constant 0 : index
    %c0_10 = arith.constant 0 : index
    %12 = vector.load %arg5[%c0_9, %c0_10] : memref<1x512xf32, #tpu.memory_space<vmem>>, vector<1x512xf32>
    %13 = vector.broadcast %12 : vector<1x512xf32> to vector<8x512xf32>
    %14 = arith.addf %11, %13 : vector<8x512xf32>
    %cst_11 = arith.constant 0.000000e+00 : f32
    %15 = vector.broadcast %cst_11 : f32 to vector<8x512xf32>
    %16 = arith.maximumf %14, %15 : vector<8x512xf32>
    %17 = arith.truncf %16 : vector<8x512xf32> to vector<8x512xbf16>
    %c0_12 = arith.constant 0 : index
    %c0_13 = arith.constant 0 : index
    %18 = vector.load %arg6[%c0_12, %c0_13] : memref<512x128xbf16, #tpu.memory_space<vmem>>, vector<512x128xbf16>
    %cst_14 = arith.constant dense<0.000000e+00> : vector<8x128xf32>
    %19 = tpu.matmul %17, %18, %cst_14 {dimension_numbers = #tpu.dot_dimension_numbers<[1], [0], [0], [1], [0, 0, 1, 1], [], []>} : vector<8x512xbf16>, vector<512x128xbf16>, vector<8x128xf32> -> vector<8x128xf32>
    %c0_15 = arith.constant 0 : index
    %c0_16 = arith.constant 0 : index
    %20 = vector.load %arg7[%c0_15, %c0_16] : memref<1x128xf32, #tpu.memory_space<vmem>>, vector<1x128xf32>
    %21 = vector.broadcast %20 : vector<1x128xf32> to vector<8x128xf32>
    %22 = arith.addf %19, %21 : vector<8x128xf32>
    %c0_17 = arith.constant 0 : index
    %c0_18 = arith.constant 0 : index
    %23 = vector.load %arg8[%c0_17, %c0_18] : memref<8x128xf32, #tpu.memory_space<vmem>>, vector<8x128xf32>
    tpu.vector_store %arg8[%c0_17, %c0_18], %22 {strides = array<i32>} : memref<8x128xf32, #tpu.memory_space<vmem>>, vector<8x128xf32>,
    return
  }
  func.func @transform_0(%arg0: i32) -> (i32, i32) {
    %c0_i32 = arith.constant 0 : i32
    %c0_i32_0 = arith.constant 0 : i32
    return %arg0, %c0_i32 : i32, i32
  }
  func.func @transform_1(%arg0: i32) -> (i32, i32) {
    %c0_i32 = arith.constant 0 : i32
    %c0_i32_0 = arith.constant 0 : i32
    %c0_i32_1 = arith.constant 0 : i32
    return %c0_i32, %c0_i32_0 : i32, i32
  }
  func.func @transform_2(%arg0: i32) -> (i32, i32) {
    %c0_i32 = arith.constant 0 : i32
    %c0_i32_0 = arith.constant 0 : i32
    %c0_i32_1 = arith.constant 0 : i32
    return %c0_i32, %c0_i32_0 : i32, i32
  }
  func.func @transform_3(%arg0: i32) -> (i32, i32) {
    %c0_i32 = arith.constant 0 : i32
    %c0_i32_0 = arith.constant 0 : i32
    %c0_i32_1 = arith.constant 0 : i32
    return %c0_i32, %c0_i32_0 : i32, i32
  }
  func.func @transform_4(%arg0: i32) -> (i32, i32) {
    %c0_i32 = arith.constant 0 : i32
    %c0_i32_0 = arith.constant 0 : i32
    %c0_i32_1 = arith.constant 0 : i32
    return %c0_i32, %c0_i32_0 : i32, i32
  }
  func.func @transform_5(%arg0: i32) -> (i32, i32) {
    %c0_i32 = arith.constant 0 : i32
    %c0_i32_0 = arith.constant 0 : i32
    %c0_i32_1 = arith.constant 0 : i32
    return %c0_i32, %c0_i32_0 : i32, i32
  }
  func.func @transform_6(%arg0: i32) -> (i32, i32) {
    %c0_i32 = arith.constant 0 : i32
    %c0_i32_0 = arith.constant 0 : i32
    %c0_i32_1 = arith.constant 0 : i32
    return %c0_i32, %c0_i32_0 : i32, i32
  }
  func.func @transform_7(%arg0: i32) -> (i32, i32) {
    %c0_i32 = arith.constant 0 : i32
    %c0_i32_0 = arith.constant 0 : i32
    return %arg0, %c0_i32 : i32, i32
  }
}

</mosaic_0001>

<llo_original>
// kernel: tpu_custom_call.1
$region0: #{tpu_custom_call.1}
  #allocation0 [shape = 'u32[]', space=smem, size = 0x4, offset = 0x4, fixed_abs, tag = 'smem constant byte address 0x4 - core index']
  #allocation1 [shape = 'u32[144,128]{1,0:T(1,128)}', space=vmem, size = 0x12000, scoped, tag = 'internal scratch']
  %s0 = inlined_call_operand.hbm [shape: f32[8,8], index: 0, kind: input, shape index: {}]
  %s1 = inlined_call_operand.hbm [shape: bf16[8,1024], index: 1, kind: input, shape index: {}]
  %s2 = inlined_call_operand.hbm [shape: f32[1,1024], index: 2, kind: input, shape index: {}]
  %s3 = inlined_call_operand.hbm [shape: bf16[1024,512], index: 3, kind: input, shape index: {}]
  %s4 = inlined_call_operand.vmem [shape: f32[1,512], index: 4, kind: input, shape index: {}]
  %s5 = inlined_call_operand.hbm [shape: bf16[512,128], index: 5, kind: input, shape index: {}]
  %s6 = inlined_call_operand.vmem [shape: f32[1,128], index: 6, kind: input, shape index: {}]
  %s7 = inlined_call_operand.hbm [shape: f32[8,128], index: 7, kind: output, shape index: {}]
  %s8 = sld [smem:[#allocation0]]
  $region58: #{tpu_custom_call.1} parent=0
    _
  %s10 = ssub.s32 1, %s8
  %s11 = scalar_select 0, %s10, %s8
  $region1: #{tpu_custom_call.1} parent=0
    #allocation2 [shape = 'u8[4096]{0}', space=vmem, size = 0x1000, scoped, tag = 'input window, operand 0, single buffered']
    #allocation3 [shape = 's32[1]{0}', space=sflag, size = 0x4, scoped, tag = 'scoped memory for tpu_custom_call.1']
    #allocation4 [shape = 's32[1]{0}', space=sflag, size = 0x4, scoped, tag = 'scoped memory for tpu_custom_call.1']
    #allocation5 [shape = 'u8[16384]{0}', space=vmem, size = 0x4000, scoped, tag = 'input window, operand 1, single buffered']
    #allocation6 [shape = 's32[1]{0}', space=sflag, size = 0x4, scoped, tag = 'scoped memory for tpu_custom_call.1']
    #allocation7 [shape = 'u8[4096]{0}', space=vmem, size = 0x1000, scoped, tag = 'input window, operand 2, single buffered']
    #allocation8 [shape = 'u8[1048576]{0}', space=vmem, size = 0x100000, scoped, tag = 'input window, operand 3, single buffered']
    #allocation9 [shape = 's32[1]{0}', space=sflag, size = 0x4, scoped, tag = 'scoped memory for tpu_custom_call.1']
    #allocation10 [shape = 'u8[131072]{0}', space=vmem, size = 0x20000, scoped, tag = 'input window, operand 5, single buffered']
    #allocation11 [shape = 'u8[4096]{0}', space=vmem, size = 0x1000, scoped, tag = 'output window, operand 0, single buffered']
    %12 = vsyncpa [#allocation3], 0
    %13 = vsyncpa [#allocation6], 0
    %14 = vsyncpa [#allocation9], 0
    %15 = vsyncpa [#allocation4], 0
    // Predicated region
    $region2: #{tpu_custom_call.1} parent=1 // pred_check
      _
    $region3: #{tpu_custom_call.1} parent=1 // pred_check_branch
      %17 = sbr.rel (0) target = $region5
    $region4: #{tpu_custom_call.1} parent=1 // pred_region
      %s19 = ssub.s32 128, 128
      %20 = vsyncadd [#allocation3], %s19
      %s22 = sshll.u32 [#allocation2], 4
      %s23 = int_to_ptr.vmem [resolvable:$true] %s22
      %25 = dma.hbm_to_vmem [thread:$0]  %s0, 128, %s23, [#allocation3]
    $region5: #{tpu_custom_call.1} parent=1 // pred_fallthru
      _
    // Predicated region
    $region6: #{tpu_custom_call.1} parent=1 // pred_check
      _
    $region7: #{tpu_custom_call.1} parent=1 // pred_check_branch
      %27 = sbr.rel (0) target = $region9
    $region8: #{tpu_custom_call.1} parent=1 // pred_region
      %s29 = ssub.s32 512, 512
      %30 = vsyncadd [#allocation6], %s29
      %s32 = sshll.u32 [#allocation5], 4
      %s33 = int_to_ptr.vmem [resolvable:$true] %s32
      %35 = dma.hbm_to_vmem [thread:$0]  %s1, 512, %s33, [#allocation6]
    $region9: #{tpu_custom_call.1} parent=1 // pred_fallthru
      _
    // Predicated region
    $region10: #{tpu_custom_call.1} parent=1 // pred_check
      _
    $region11: #{tpu_custom_call.1} parent=1 // pred_check_branch
      %37 = sbr.rel (0) target = $region13
    $region12: #{tpu_custom_call.1} parent=1 // pred_region
      %s39 = ssub.s32 128, 128
      %40 = vsyncadd [#allocation6], %s39
      %s42 = sshll.u32 [#allocation7], 4
      %s43 = int_to_ptr.vmem [resolvable:$true] %s42
      %45 = dma.hbm_to_vmem [thread:$0]  %s2, 128, %s43, [#allocation6]
    $region13: #{tpu_custom_call.1} parent=1 // pred_fallthru
      _
    // Predicated region
    $region14: #{tpu_custom_call.1} parent=1 // pred_check
      _
    $region15: #{tpu_custom_call.1} parent=1 // pred_check_branch
      %47 = sbr.rel (0) target = $region17
    $region16: #{tpu_custom_call.1} parent=1 // pred_region
      %s49 = ssub.s32 32768, 32768
      %50 = vsyncadd [#allocation9], %s49
      %s51 = sshll.u32 [#allocation8], 4
      %s52 = int_to_ptr.vmem [resolvable:$true] %s51
      %57 = dma.hbm_to_vmem [thread:$0]  %s3, 32768, %s52, [#allocation9], 256, 256, 16
    $region17: #{tpu_custom_call.1} parent=1 // pred_fallthru
      _
    // Predicated region
    $region18: #{tpu_custom_call.1} parent=1 // pred_check
      _
    $region19: #{tpu_custom_call.1} parent=1 // pred_check_branch
      %59 = sbr.rel (0) target = $region21
    $region20: #{tpu_custom_call.1} parent=1 // pred_region
      _
    $region21: #{tpu_custom_call.1} parent=1 // pred_fallthru
      _
    // Predicated region
    $region22: #{tpu_custom_call.1} parent=1 // pred_check
      _
    $region23: #{tpu_custom_call.1} parent=1 // pred_check_branch
      %61 = sbr.rel (0) target = $region25
    $region24: #{tpu_custom_call.1} parent=1 // pred_region
      %s63 = ssub.s32 4096, 4096
      %64 = vsyncadd [#allocation9], %s63
      %s65 = sshll.u32 [#allocation10], 4
      %s66 = int_to_ptr.vmem [resolvable:$true] %s65
      %71 = dma.hbm_to_vmem [thread:$0]  %s5, 4096, %s66, [#allocation9], 64, 64, 4
    $region25: #{tpu_custom_call.1} parent=1 // pred_fallthru
      _
    // Predicated region
    $region26: #{tpu_custom_call.1} parent=1 // pred_check
      _
    $region27: #{tpu_custom_call.1} parent=1 // pred_check_branch
      %73 = sbr.rel (0) target = $region29
    $region28: #{tpu_custom_call.1} parent=1 // pred_region
      _
    $region29: #{tpu_custom_call.1} parent=1 // pred_fallthru
      _
    // Predicated region
    $region30: #{tpu_custom_call.1} parent=1 // pred_check
      _
    $region31: #{tpu_custom_call.1} parent=1 // pred_check_branch
      %75 = sbr.rel (0) target = $region33
    $region32: #{tpu_custom_call.1} parent=1 // pred_region
      %76 = dma.done [#allocation3], 128
    $region33: #{tpu_custom_call.1} parent=1 // pred_fallthru
      _
    // Predicated region
    $region34: #{tpu_custom_call.1} parent=1 // pred_check
      _
    $region35: #{tpu_custom_call.1} parent=1 // pred_check_branch
      %78 = sbr.rel (0) target = $region37
    $region36: #{tpu_custom_call.1} parent=1 // pred_region
      %79 = dma.done [#allocation6], 512
    $region37: #{tpu_custom_call.1} parent=1 // pred_fallthru
      _
    // Predicated region
    $region38: #{tpu_custom_call.1} parent=1 // pred_check
      _
    $region39: #{tpu_custom_call.1} parent=1 // pred_check_branch
      %81 = sbr.rel (0) target = $region41
    $region40: #{tpu_custom_call.1} parent=1 // pred_region
      %82 = dma.done [#allocation6], 128
    $region41: #{tpu_custom_call.1} parent=1 // pred_fallthru
      _
    // Predicated region
    $region42: #{tpu_custom_call.1} parent=1 // pred_check
      _
    $region43: #{tpu_custom_call.1} parent=1 // pred_check_branch
      %84 = sbr.rel (0) target = $region45
    $region44: #{tpu_custom_call.1} parent=1 // pred_region
      %85 = dma.done [#allocation9], 32768
    $region45: #{tpu_custom_call.1} parent=1 // pred_fallthru
      _
    // Predicated region
    $region46: #{tpu_custom_call.1} parent=1 // pred_check
      _
    $region47: #{tpu_custom_call.1} parent=1 // pred_check_branch
      %87 = sbr.rel (0) target = $region49
    $region48: #{tpu_custom_call.1} parent=1 // pred_region
      %88 = dma.done [#allocation9], 4096
    $region49: #{tpu_custom_call.1} parent=1 // pred_fallthru
      _
    %v90 = vld [vmem:[#allocation2] sm:$0xff]
    %v91 = vpack.c.bf16 %v90, %v90
    %v92 = vld [vmem:[#allocation5] sm:$0xff]
    %v93 = vld [vmem:[#allocation5 + $0x8] sm:$0xff]
    %v94 = vld [vmem:[#allocation5 + $0x10] sm:$0xff]
    %v95 = vld [vmem:[#allocation5 + $0x18] sm:$0xff]
    %v96 = vld [vmem:[#allocation7] sm:$0xff]
    %v98 = vlaneseq
    %v99 = vshrl.u32 %v98, 7
    %v100 = vsub.s32 0, %v99
    %v101 = vrot.slane %v96, %v100
    %v102 = vlaneseq
    %v103 = vshrl.u32 %v102, 7
    %v104 = vsub.s32 1, %v103
    %v105 = vrot.slane %v96, %v104
    %v106 = vlaneseq
    %v107 = vshrl.u32 %v106, 7
    %v108 = vsub.s32 2, %v107
    %v109 = vrot.slane %v96, %v108
    %v110 = vlaneseq
    %v111 = vshrl.u32 %v110, 7
    %v112 = vsub.s32 3, %v111
    %v113 = vrot.slane %v96, %v112
    %v114 = vlaneseq
    %v115 = vshrl.u32 %v114, 7
    %v116 = vsub.s32 4, %v115
    %v117 = vrot.slane %v96, %v116
    %v118 = vlaneseq
    %v119 = vshrl.u32 %v118, 7
    %v120 = vsub.s32 5, %v119
    %v121 = vrot.slane %v96, %v120
    %v122 = vlaneseq
    %v123 = vshrl.u32 %v122, 7
    %v124 = vsub.s32 6, %v123
    %v125 = vrot.slane %v96, %v124
    %v126 = vlaneseq
    %v127 = vshrl.u32 %v126, 7
    %v128 = vsub.s32 7, %v127
    %v129 = vrot.slane %v96, %v128
    %v142 = vunpack.c.l.b16 %v92
    %v143 = vunpack.c.h.b16 %v92
    %v144 = vunpack.c.l.b16 %v93
    %v145 = vunpack.c.h.b16 %v93
    %v146 = vunpack.c.l.b16 %v94
    %v147 = vunpack.c.h.b16 %v94
    %v148 = vunpack.c.l.b16 %v95
    %v149 = vunpack.c.h.b16 %v95
    %v150 = vpack.c.b16 %v142, %v142
    %v151 = vpack.c.b16 %v143, %v143
    %v152 = vpack.c.b16 %v144, %v144
    %v153 = vpack.c.b16 %v145, %v145
    %v154 = vpack.c.b16 %v146, %v146
    %v155 = vpack.c.b16 %v147, %v147
    %v156 = vpack.c.b16 %v148, %v148
    %v157 = vpack.c.b16 %v149, %v149
    %vm158 = vcmask 64512
    %v160 = vsel %vm158, %v91, 0
    %vm162 = vcmask 1043456
    %v164 = vsel %vm162, %v150, 0
    %v167 = vsel %vm162, %v151, 0
    %v170 = vsel %vm162, %v152, 0
    %v173 = vsel %vm162, %v153, 0
    %v176 = vsel %vm162, %v154, 0
    %v179 = vsel %vm162, %v155, 0
    %v182 = vsel %vm162, %v156, 0
    %v185 = vsel %vm162, %v157, 0
    %187 = vmatprep.subr.bf16.mxu0 %v167
    %188 = vmatpush1.bf16.msra.mxu0 %v164
    %189 = vmatprep.subr.bf16.mxu0 0
    %190 = vmatpush1.bf16.msra.mxu0 0
    %191 = vmatprep.subr.bf16.mxu0 0
    %192 = vmatpush1.bf16.msra.mxu0 0
    %193 = vmatprep.subr.bf16.mxu0 0
    %194 = vmatpush1.bf16.msra.mxu0 0
    %195 = vmatprep.subr.bf16.mxu0 0
    %196 = vmatpush1.bf16.msra.mxu0 0
    %197 = vmatprep.subr.bf16.mxu0 0
    %198 = vmatpush1.bf16.msra.mxu0 0
    %199 = vmatprep.subr.bf16.mxu0 0
    %200 = vmatpush1.bf16.msra.mxu0 0
    %201 = vmatprep.subr.bf16.mxu0 0
    %202 = vmatpush1.bf16.msra.mxu0 0
    %203 = vmatprep.subr.bf16.mxu0 0
    %204 = vmatpush1.bf16.msra.mxu0 0
    %205 = vmatprep.subr.bf16.mxu0 0
    %206 = vmatpush1.bf16.msra.mxu0 0
    %207 = vmatprep.subr.bf16.mxu0 0
    %208 = vmatpush1.bf16.msra.mxu0 0
    %209 = vmatprep.subr.bf16.mxu0 0
    %210 = vmatpush1.bf16.msra.mxu0 0
    %211 = vmatprep.subr.bf16.mxu0 0
    %212 = vmatpush1.bf16.msra.mxu0 0
    %213 = vmatprep.subr.bf16.mxu0 0
    %214 = vmatpush1.bf16.msra.mxu0 0
    %215 = vmatprep.subr.bf16.mxu0 0
    %216 = vmatpush1.bf16.msra.mxu0 0
    %217 = vmatprep.subr.bf16.mxu0 0
    %218 = vmatpush1.bf16.msra.mxu0 0
    %219 = vmatprep.mubr.bf16.mxu0 0
    %220 = vmatmul.mubr.bf16.gmra.mrb[0].mxu0 %v160
    %v221 = vpop.f32.mrb[0].mxu0
    %v222 = vadd.f32 %v101, %v221
    %v223 = vpop.f32.mrb[0].mxu0
    %v224 = vadd.f32 %v105, %v223
    %v225 = vpop.f32.mrb[0].mxu0
    %v226 = vpop.f32.mrb[0].mxu0
    %227 = vdwg.mxu0
    %228 = vmatprep.subr.bf16.mxu0 %v173
    %229 = vmatpush1.bf16.msra.mxu0 %v170
    %230 = vmatprep.subr.bf16.mxu0 0
    %231 = vmatpush1.bf16.msra.mxu0 0
    %232 = vmatprep.subr.bf16.mxu0 0
    %233 = vmatpush1.bf16.msra.mxu0 0
    %234 = vmatprep.subr.bf16.mxu0 0
    %235 = vmatpush1.bf16.msra.mxu0 0
    %236 = vmatprep.subr.bf16.mxu0 0
    %237 = vmatpush1.bf16.msra.mxu0 0
    %238 = vmatprep.subr.bf16.mxu0 0
    %239 = vmatpush1.bf16.msra.mxu0 0
    %240 = vmatprep.subr.bf16.mxu0 0
    %241 = vmatpush1.bf16.msra.mxu0 0
    %242 = vmatprep.subr.bf16.mxu0 0
    %243 = vmatpush1.bf16.msra.mxu0 0
    %244 = vmatprep.subr.bf16.mxu0 0
    %245 = vmatpush1.bf16.msra.mxu0 0
    %246 = vmatprep.subr.bf16.mxu0 0
    %247 = vmatpush1.bf16.msra.mxu0 0
    %248 = vmatprep.subr.bf16.mxu0 0
    %249 = vmatpush1.bf16.msra.mxu0 0
    %250 = vmatprep.subr.bf16.mxu0 0
    %251 = vmatpush1.bf16.msra.mxu0 0
    %252 = vmatprep.subr.bf16.mxu0 0
    %253 = vmatpush1.bf16.msra.mxu0 0
    %254 = vmatprep.subr.bf16.mxu0 0
    %255 = vmatpush1.bf16.msra.mxu0 0
    %256 = vmatprep.subr.bf16.mxu0 0
    %257 = vmatpush1.bf16.msra.mxu0 0
    %258 = vmatprep.subr.bf16.mxu0 0
    %259 = vmatpush1.bf16.msra.mxu0 0
    %260 = vmatprep.mubr.bf16.mxu0 0
    %261 = vmatmul.mubr.bf16.gmra.mrb[0].mxu0 %v160
    %v262 = vpop.f32.mrb[0].mxu0
    %v263 = vadd.f32 %v109, %v262
    %v264 = vpop.f32.mrb[0].mxu0
    %v265 = vadd.f32 %v113, %v264
    %v266 = vpop.f32.mrb[0].mxu0
    %v267 = vpop.f32.mrb[0].mxu0
    %268 = vdwg.mxu0
    %269 = vmatprep.subr.bf16.mxu0 %v179
    %270 = vmatpush1.bf16.msra.mxu0 %v176
    %271 = vmatprep.subr.bf16.mxu0 0
    %272 = vmatpush1.bf16.msra.mxu0 0
    %273 = vmatprep.subr.bf16.mxu0 0
    %274 = vmatpush1.bf16.msra.mxu0 0
    %275 = vmatprep.subr.bf16.mxu0 0
    %276 = vmatpush1.bf16.msra.mxu0 0
    %277 = vmatprep.subr.bf16.mxu0 0
    %278 = vmatpush1.bf16.msra.mxu0 0
    %279 = vmatprep.subr.bf16.mxu0 0
    %280 = vmatpush1.bf16.msra.mxu0 0
    %281 = vmatprep.subr.bf16.mxu0 0
    %282 = vmatpush1.bf16.msra.mxu0 0
    %283 = vmatprep.subr.bf16.mxu0 0
    %284 = vmatpush1.bf16.msra.mxu0 0
    %285 = vmatprep.subr.bf16.mxu0 0
    %286 = vmatpush1.bf16.msra.mxu0 0
    %287 = vmatprep.subr.bf16.mxu0 0
    %288 = vmatpush1.bf16.msra.mxu0 0
    %289 = vmatprep.subr.bf16.mxu0 0
    %290 = vmatpush1.bf16.msra.mxu0 0
    %291 = vmatprep.subr.bf16.mxu0 0
    %292 = vmatpush1.bf16.msra.mxu0 0
    %293 = vmatprep.subr.bf16.mxu0 0
    %294 = vmatpush1.bf16.msra.mxu0 0
    %295 = vmatprep.subr.bf16.mxu0 0
    %296 = vmatpush1.bf16.msra.mxu0 0
    %297 = vmatprep.subr.bf16.mxu0 0
    %298 = vmatpush1.bf16.msra.mxu0 0
    %299 = vmatprep.subr.bf16.mxu0 0
    %300 = vmatpush1.bf16.msra.mxu0 0
    %301 = vmatprep.mubr.bf16.mxu0 0
    %302 = vmatmul.mubr.bf16.gmra.mrb[0].mxu0 %v160
    %v303 = vpop.f32.mrb[0].mxu0
    %v304 = vadd.f32 %v117, %v303
    %v305 = vpop.f32.mrb[0].mxu0
    %v306 = vadd.f32 %v121, %v305
    %v307 = vpop.f32.mrb[0].mxu0
    %v308 = vpop.f32.mrb[0].mxu0
    %309 = vdwg.mxu0
    %310 = vmatprep.subr.bf16.mxu0 %v185
    %311 = vmatpush1.bf16.msra.mxu0 %v182
    %312 = vmatprep.subr.bf16.mxu0 0
    %313 = vmatpush1.bf16.msra.mxu0 0
    %314 = vmatprep.subr.bf16.mxu0 0
    %315 = vmatpush1.bf16.msra.mxu0 0
    %316 = vmatprep.subr.bf16.mxu0 0
    %317 = vmatpush1.bf16.msra.mxu0 0
    %318 = vmatprep.subr.bf16.mxu0 0
    %319 = vmatpush1.bf16.msra.mxu0 0
    %320 = vmatprep.subr.bf16.mxu0 0
    %321 = vmatpush1.bf16.msra.mxu0 0
    %322 = vmatprep.subr.bf16.mxu0 0
    %323 = vmatpush1.bf16.msra.mxu0 0
    %324 = vmatprep.subr.bf16.mxu0 0
    %325 = vmatpush1.bf16.msra.mxu0 0
    %326 = vmatprep.subr.bf16.mxu0 0
    %327 = vmatpush1.bf16.msra.mxu0 0
    %328 = vmatprep.subr.bf16.mxu0 0
    %329 = vmatpush1.bf16.msra.mxu0 0
    %330 = vmatprep.subr.bf16.mxu0 0
    %331 = vmatpush1.bf16.msra.mxu0 0
    %332 = vmatprep.subr.bf16.mxu0 0
    %333 = vmatpush1.bf16.msra.mxu0 0
    %334 = vmatprep.subr.bf16.mxu0 0
    %335 = vmatpush1.bf16.msra.mxu0 0
    %336 = vmatprep.subr.bf16.mxu0 0
    %337 = vmatpush1.bf16.msra.mxu0 0
    %338 = vmatprep.subr.bf16.mxu0 0
    %339 = vmatpush1.bf16.msra.mxu0 0
    %340 = vmatprep.subr.bf16.mxu0 0
    %341 = vmatpush1.bf16.msra.mxu0 0
    %342 = vmatprep.mubr.bf16.mxu0 0
    %343 = vmatmul.mubr.bf16.gmra.mrb[0].mxu0 %v160
    %v344 = vpop.f32.mrb[0].mxu0
    %v345 = vadd.f32 %v125, %v344
    %v346 = vpop.f32.mrb[0].mxu0
    %v347 = vadd.f32 %v129, %v346
    %v348 = vpop.f32.mrb[0].mxu0
    %v349 = vpop.f32.mrb[0].mxu0
    %350 = vdwg.mxu0
    %v351 = vmax.f32 %v222, 0.0
    %v352 = vmax.f32 %v224, 0.0
    %v353 = vmax.f32 %v263, 0.0
    %v354 = vmax.f32 %v265, 0.0
    %v355 = vmax.f32 %v304, 0.0
    %v356 = vmax.f32 %v306, 0.0
    %v357 = vmax.f32 %v345, 0.0
    %v358 = vmax.f32 %v347, 0.0
    %v359 = vpack.c.bf16 %v351, %v351
    %v360 = vpack.c.bf16 %v352, %v352
    %v361 = vpack.c.bf16 %v353, %v353
    %v362 = vpack.c.bf16 %v354, %v354
    %v363 = vpack.c.bf16 %v355, %v355
    %v364 = vpack.c.bf16 %v356, %v356
    %v365 = vpack.c.bf16 %v357, %v357
    %v366 = vpack.c.bf16 %v358, %v358
    %v367 = vld [vmem:[#allocation8] sm:$0xff]
    %v368 = vld [vmem:[#allocation8 + $0x8] sm:$0xff]
    %v369 = vld [vmem:[#allocation8 + $0x10] sm:$0xff]
    %v370 = vld [vmem:[#allocation8 + $0x18] sm:$0xff]
    %v371 = vld [vmem:[#allocation8 + $0x20] sm:$0xff]
    %v372 = vld [vmem:[#allocation8 + $0x28] sm:$0xff]
    %v373 = vld [vmem:[#allocation8 + $0x30] sm:$0xff]
    %v374 = vld [vmem:[#allocation8 + $0x38] sm:$0xff]
    %v375 = vld [vmem:[#allocation8 + $0x40] sm:$0xff]
    %v376 = vld [vmem:[#allocation8 + $0x48] sm:$0xff]
    %v377 = vld [vmem:[#allocation8 + $0x50] sm:$0xff]
    %v378 = vld [vmem:[#allocation8 + $0x58] sm:$0xff]
    %v379 = vld [vmem:[#allocation8 + $0x60] sm:$0xff]
    %v380 = vld [vmem:[#allocation8 + $0x68] sm:$0xff]
    %v381 = vld [vmem:[#allocation8 + $0x70] sm:$0xff]
    %v382 = vld [vmem:[#allocation8 + $0x78] sm:$0xff]
    %v383 = vld [vmem:[#allocation8 + $0x80] sm:$0xff]
    %v384 = vld [vmem:[#allocation8 + $0x88] sm:$0xff]
    %v385 = vld [vmem:[#allocation8 + $0x90] sm:$0xff]
    %v386 = vld [vmem:[#allocation8 + $0x98] sm:$0xff]
    %v387 = vld [vmem:[#allocation8 + $0xa0] sm:$0xff]
    %v388 = vld [vmem:[#allocation8 + $0xa8] sm:$0xff]
    %v389 = vld [vmem:[#allocation8 + $0xb0] sm:$0xff]
    %v390 = vld [vmem:[#allocation8 + $0xb8] sm:$0xff]
    %v391 = vld [vmem:[#allocation8 + $0xc0] sm:$0xff]
    %v392 = vld [vmem:[#allocation8 + $0xc8] sm:$0xff]
    %v393 = vld [vmem:[#allocation8 + $0xd0] sm:$0xff]
    %v394 = vld [vmem:[#allocation8 + $0xd8] sm:$0xff]
    %v395 = vld [vmem:[#allocation8 + $0xe0] sm:$0xff]
    %v396 = vld [vmem:[#allocation8 + $0xe8] sm:$0xff]
    %v397 = vld [vmem:[#allocation8 + $0xf0] sm:$0xff]
    %v398 = vld [vmem:[#allocation8 + $0xf8] sm:$0xff]
    %v399 = vld [vmem:[#allocation8 + $0x100] sm:$0xff]
    %v400 = vld [vmem:[#allocation8 + $0x108] sm:$0xff]
    %v401 = vld [vmem:[#allocation8 + $0x110] sm:$0xff]
    %v402 = vld [vmem:[#allocation8 + $0x118] sm:$0xff]
    %v403 = vld [vmem:[#allocation8 + $0x120] sm:$0xff]
    %v404 = vld [vmem:[#allocation8 + $0x128] sm:$0xff]
    %v405 = vld [vmem:[#allocation8 + $0x130] sm:$0xff]
    %v406 = vld [vmem:[#allocation8 + $0x138] sm:$0xff]
    %v407 = vld [vmem:[#allocation8 + $0x140] sm:$0xff]
    %v408 = vld [vmem:[#allocation8 + $0x148] sm:$0xff]
    %v409 = vld [vmem:[#allocation8 + $0x150] sm:$0xff]
    %v410 = vld [vmem:[#allocation8 + $0x158] sm:$0xff]
    %v411 = vld [vmem:[#allocation8 + $0x160] sm:$0xff]
    %v412 = vld [vmem:[#allocation8 + $0x168] sm:$0xff]
    %v413 = vld [vmem:[#allocation8 + $0x170] sm:$0xff]
    %v414 = vld [vmem:[#allocation8 + $0x178] sm:$0xff]
    %v415 = vld [vmem:[#allocation8 + $0x180] sm:$0xff]
    %v416 = vld [vmem:[#allocation8 + $0x188] sm:$0xff]
    %v417 = vld [vmem:[#allocation8 + $0x190] sm:$0xff]
    %v418 = vld [vmem:[#allocation8 + $0x198] sm:$0xff]
    %v419 = vld [vmem:[#allocation8 + $0x1a0] sm:$0xff]
    %v420 = vld [vmem:[#allocation8 + $0x1a8] sm:$0xff]
    %v421 = vld [vmem:[#allocation8 + $0x1b0] sm:$0xff]
    %v422 = vld [vmem:[#allocation8 + $0x1b8] sm:$0xff]
    %v423 = vld [vmem:[#allocation8 + $0x1c0] sm:$0xff]
    %v424 = vld [vmem:[#allocation8 + $0x1c8] sm:$0xff]
    %v425 = vld [vmem:[#allocation8 + $0x1d0] sm:$0xff]
    %v426 = vld [vmem:[#allocation8 + $0x1d8] sm:$0xff]
    %v427 = vld [vmem:[#allocation8 + $0x1e0] sm:$0xff]
    %v428 = vld [vmem:[#allocation8 + $0x1e8] sm:$0xff]
    %v429 = vld [vmem:[#allocation8 + $0x1f0] sm:$0xff]
    %v430 = vld [vmem:[#allocation8 + $0x1f8] sm:$0xff]
    %v431 = vld [vmem:[#allocation8 + $0x200] sm:$0xff]
    %v432 = vld [vmem:[#allocation8 + $0x208] sm:$0xff]
    %v433 = vld [vmem:[#allocation8 + $0x210] sm:$0xff]
    %v434 = vld [vmem:[#allocation8 + $0x218] sm:$0xff]
    %v435 = vld [vmem:[#allocation8 + $0x220] sm:$0xff]
    %v436 = vld [vmem:[#allocation8 + $0x228] sm:$0xff]
    %v437 = vld [vmem:[#allocation8 + $0x230] sm:$0xff]
    %v438 = vld [vmem:[#allocation8 + $0x238] sm:$0xff]
    %v439 = vld [vmem:[#allocation8 + $0x240] sm:$0xff]
    %v440 = vld [vmem:[#allocation8 + $0x248] sm:$0xff]
    %v441 = vld [vmem:[#allocation8 + $0x250] sm:$0xff]
    %v442 = vld [vmem:[#allocation8 + $0x258] sm:$0xff]
    %v443 = vld [vmem:[#allocation8 + $0x260] sm:$0xff]
    %v444 = vld [vmem:[#allocation8 + $0x268] sm:$0xff]
    %v445 = vld [vmem:[#allocation8 + $0x270] sm:$0xff]
    %v446 = vld [vmem:[#allocation8 + $0x278] sm:$0xff]
    %v447 = vld [vmem:[#allocation8 + $0x280] sm:$0xff]
    %v448 = vld [vmem:[#allocation8 + $0x288] sm:$0xff]
    %v449 = vld [vmem:[#allocation8 + $0x290] sm:$0xff]
    %v450 = vld [vmem:[#allocation8 + $0x298] sm:$0xff]
    %v451 = vld [vmem:[#allocation8 + $0x2a0] sm:$0xff]
    %v452 = vld [vmem:[#allocation8 + $0x2a8] sm:$0xff]
    %v453 = vld [vmem:[#allocation8 + $0x2b0] sm:$0xff]
    %v454 = vld [vmem:[#allocation8 + $0x2b8] sm:$0xff]
    %v455 = vld [vmem:[#allocation8 + $0x2c0] sm:$0xff]
    %v456 = vld [vmem:[#allocation8 + $0x2c8] sm:$0xff]
    %v457 = vld [vmem:[#allocation8 + $0x2d0] sm:$0xff]
    %v458 = vld [vmem:[#allocation8 + $0x2d8] sm:$0xff]
    %v459 = vld [vmem:[#allocation8 + $0x2e0] sm:$0xff]
    %v460 = vld [vmem:[#allocation8 + $0x2e8] sm:$0xff]
    %v461 = vld [vmem:[#allocation8 + $0x2f0] sm:$0xff]
    %v462 = vld [vmem:[#allocation8 + $0x2f8] sm:$0xff]
    %v463 = vld [vmem:[#allocation8 + $0x300] sm:$0xff]
    %v464 = vld [vmem:[#allocation8 + $0x308] sm:$0xff]
    %v465 = vld [vmem:[#allocation8 + $0x310] sm:$0xff]
    %v466 = vld [vmem:[#allocation8 + $0x318] sm:$0xff]
    %v467 = vld [vmem:[#allocation8 + $0x320] sm:$0xff]
    %v468 = vld [vmem:[#allocation8 + $0x328] sm:$0xff]
    %v469 = vld [vmem:[#allocation8 + $0x330] sm:$0xff]
    %v470 = vld [vmem:[#allocation8 + $0x338] sm:$0xff]
    %v471 = vld [vmem:[#allocation8 + $0x340] sm:$0xff]
    %v472 = vld [vmem:[#allocation8 + $0x348] sm:$0xff]
    %v473 = vld [vmem:[#allocation8 + $0x350] sm:$0xff]
    %v474 = vld [vmem:[#allocation8 + $0x358] sm:$0xff]
    %v475 = vld [vmem:[#allocation8 + $0x360] sm:$0xff]
    %v476 = vld [vmem:[#allocation8 + $0x368] sm:$0xff]
    %v477 = vld [vmem:[#allocation8 + $0x370] sm:$0xff]
    %v478 = vld [vmem:[#allocation8 + $0x378] sm:$0xff]
    %v479 = vld [vmem:[#allocation8 + $0x380] sm:$0xff]
    %v480 = vld [vmem:[#allocation8 + $0x388] sm:$0xff]
    %v481 = vld [vmem:[#allocation8 + $0x390] sm:$0xff]
    %v482 = vld [vmem:[#allocation8 + $0x398] sm:$0xff]
    %v483 = vld [vmem:[#allocation8 + $0x3a0] sm:$0xff]
    %v484 = vld [vmem:[#allocation8 + $0x3a8] sm:$0xff]
    %v485 = vld [vmem:[#allocation8 + $0x3b0] sm:$0xff]
    %v486 = vld [vmem:[#allocation8 + $0x3b8] sm:$0xff]
    %v487 = vld [vmem:[#allocation8 + $0x3c0] sm:$0xff]
    %v488 = vld [vmem:[#allocation8 + $0x3c8] sm:$0xff]
    %v489 = vld [vmem:[#allocation8 + $0x3d0] sm:$0xff]
    %v490 = vld [vmem:[#allocation8 + $0x3d8] sm:$0xff]
    %v491 = vld [vmem:[#allocation8 + $0x3e0] sm:$0xff]
    %v492 = vld [vmem:[#allocation8 + $0x3e8] sm:$0xff]
    %v493 = vld [vmem:[#allocation8 + $0x3f0] sm:$0xff]
    %v494 = vld [vmem:[#allocation8 + $0x3f8] sm:$0xff]
    %v495 = vld [vmem:[#allocation8 + $0x400] sm:$0xff]
    %v496 = vld [vmem:[#allocation8 + $0x408] sm:$0xff]
    %v497 = vld [vmem:[#allocation8 + $0x410] sm:$0xff]
    %v498 = vld [vmem:[#allocation8 + $0x418] sm:$0xff]
    %v499 = vld [vmem:[#allocation8 + $0x420] sm:$0xff]
    %v500 = vld [vmem:[#allocation8 + $0x428] sm:$0xff]
    %v501 = vld [vmem:[#allocation8 + $0x430] sm:$0xff]
    %v502 = vld [vmem:[#allocation8 + $0x438] sm:$0xff]
    %v503 = vld [vmem:[#allocation8 + $0x440] sm:$0xff]
    %v504 = vld [vmem:[#allocation8 + $0x448] sm:$0xff]
    %v505 = vld [vmem:[#allocation8 + $0x450] sm:$0xff]
    %v506 = vld [vmem:[#allocation8 + $0x458] sm:$0xff]
    %v507 = vld [vmem:[#allocation8 + $0x460] sm:$0xff]
    %v508 = vld [vmem:[#allocation8 + $0x468] sm:$0xff]
    %v509 = vld [vmem:[#allocation8 + $0x470] sm:$0xff]
    %v510 = vld [vmem:[#allocation8 + $0x478] sm:$0xff]
    %v511 = vld [vmem:[#allocation8 + $0x480] sm:$0xff]
    %v512 = vld [vmem:[#allocation8 + $0x488] sm:$0xff]
    %v513 = vld [vmem:[#allocation8 + $0x490] sm:$0xff]
    %v514 = vld [vmem:[#allocation8 + $0x498] sm:$0xff]
    %v515 = vld [vmem:[#allocation8 + $0x4a0] sm:$0xff]
    %v516 = vld [vmem:[#allocation8 + $0x4a8] sm:$0xff]
    %v517 = vld [vmem:[#allocation8 + $0x4b0] sm:$0xff]
    %v518 = vld [vmem:[#allocation8 + $0x4b8] sm:$0xff]
    %v519 = vld [vmem:[#allocation8 + $0x4c0] sm:$0xff]
    %v520 = vld [vmem:[#allocation8 + $0x4c8] sm:$0xff]
    %v521 = vld [vmem:[#allocation8 + $0x4d0] sm:$0xff]
    %v522 = vld [vmem:[#allocation8 + $0x4d8] sm:$0xff]
    %v523 = vld [vmem:[#allocation8 + $0x4e0] sm:$0xff]
    %v524 = vld [vmem:[#allocation8 + $0x4e8] sm:$0xff]
    %v525 = vld [vmem:[#allocation8 + $0x4f0] sm:$0xff]
    %v526 = vld [vmem:[#allocation8 + $0x4f8] sm:$0xff]
    %v527 = vld [vmem:[#allocation8 + $0x500] sm:$0xff]
    %v528 = vld [vmem:[#allocation8 + $0x508] sm:$0xff]
    %v529 = vld [vmem:[#allocation8 + $0x510] sm:$0xff]
    %v530 = vld [vmem:[#allocation8 + $0x518] sm:$0xff]
    %v531 = vld [vmem:[#allocation8 + $0x520] sm:$0xff]
    %v532 = vld [vmem:[#allocation8 + $0x528] sm:$0xff]
    %v533 = vld [vmem:[#allocation8 + $0x530] sm:$0xff]
    %v534 = vld [vmem:[#allocation8 + $0x538] sm:$0xff]
    %v535 = vld [vmem:[#allocation8 + $0x540] sm:$0xff]
    %v536 = vld [vmem:[#allocation8 + $0x548] sm:$0xff]
    %v537 = vld [vmem:[#allocation8 + $0x550] sm:$0xff]
    %v538 = vld [vmem:[#allocation8 + $0x558] sm:$0xff]
    %v539 = vld [vmem:[#allocation8 + $0x560] sm:$0xff]
    %v540 = vld [vmem:[#allocation8 + $0x568] sm:$0xff]
    %v541 = vld [vmem:[#allocation8 + $0x570] sm:$0xff]
    %v542 = vld [vmem:[#allocation8 + $0x578] sm:$0xff]
    %v543 = vld [vmem:[#allocation8 + $0x580] sm:$0xff]
    %v544 = vld [vmem:[#allocation8 + $0x588] sm:$0xff]
    %v545 = vld [vmem:[#allocation8 + $0x590] sm:$0xff]
    %v546 = vld [vmem:[#allocation8 + $0x598] sm:$0xff]
    %v547 = vld [vmem:[#allocation8 + $0x5a0] sm:$0xff]
    %v548 = vld [vmem:[#allocation8 + $0x5a8] sm:$0xff]
    %v549 = vld [vmem:[#allocation8 + $0x5b0] sm:$0xff]
    %v550 = vld [vmem:[#allocation8 + $0x5b8] sm:$0xff]
    %v551 = vld [vmem:[#allocation8 + $0x5c0] sm:$0xff]
    %v552 = vld [vmem:[#allocation8 + $0x5c8] sm:$0xff]
    %v553 = vld [vmem:[#allocation8 + $0x5d0] sm:$0xff]
    %v554 = vld [vmem:[#allocation8 + $0x5d8] sm:$0xff]
    %v555 = vld [vmem:[#allocation8 + $0x5e0] sm:$0xff]
    %v556 = vld [vmem:[#allocation8 + $0x5e8] sm:$0xff]
    %v557 = vld [vmem:[#allocation8 + $0x5f0] sm:$0xff]
    %v558 = vld [vmem:[#allocation8 + $0x5f8] sm:$0xff]
    %v559 = vld [vmem:[#allocation8 + $0x600] sm:$0xff]
    %v560 = vld [vmem:[#allocation8 + $0x608] sm:$0xff]
    %v561 = vld [vmem:[#allocation8 + $0x610] sm:$0xff]
    %v562 = vld [vmem:[#allocation8 + $0x618] sm:$0xff]
    %v563 = vld [vmem:[#allocation8 + $0x620] sm:$0xff]
    %v564 = vld [vmem:[#allocation8 + $0x628] sm:$0xff]
    %v565 = vld [vmem:[#allocation8 + $0x630] sm:$0xff]
    %v566 = vld [vmem:[#allocation8 + $0x638] sm:$0xff]
    %v567 = vld [vmem:[#allocation8 + $0x640] sm:$0xff]
    %v568 = vld [vmem:[#allocation8 + $0x648] sm:$0xff]
    %v569 = vld [vmem:[#allocation8 + $0x650] sm:$0xff]
    %v570 = vld [vmem:[#allocation8 + $0x658] sm:$0xff]
    %v571 = vld [vmem:[#allocation8 + $0x660] sm:$0xff]
    %v572 = vld [vmem:[#allocation8 + $0x668] sm:$0xff]
    %v573 = vld [vmem:[#allocation8 + $0x670] sm:$0xff]
    %v574 = vld [vmem:[#allocation8 + $0x678] sm:$0xff]
    %v575 = vld [vmem:[#allocation8 + $0x680] sm:$0xff]
    %v576 = vld [vmem:[#allocation8 + $0x688] sm:$0xff]
    %v577 = vld [vmem:[#allocation8 + $0x690] sm:$0xff]
    %v578 = vld [vmem:[#allocation8 + $0x698] sm:$0xff]
    %v579 = vld [vmem:[#allocation8 + $0x6a0] sm:$0xff]
    %v580 = vld [vmem:[#allocation8 + $0x6a8] sm:$0xff]
    %v581 = vld [vmem:[#allocation8 + $0x6b0] sm:$0xff]
    %v582 = vld [vmem:[#allocation8 + $0x6b8] sm:$0xff]
    %v583 = vld [vmem:[#allocation8 + $0x6c0] sm:$0xff]
    %v584 = vld [vmem:[#allocation8 + $0x6c8] sm:$0xff]
    %v585 = vld [vmem:[#allocation8 + $0x6d0] sm:$0xff]
    %v586 = vld [vmem:[#allocation8 + $0x6d8] sm:$0xff]
    %v587 = vld [vmem:[#allocation8 + $0x6e0] sm:$0xff]
    %v588 = vld [vmem:[#allocation8 + $0x6e8] sm:$0xff]
    %v589 = vld [vmem:[#allocation8 + $0x6f0] sm:$0xff]
    %v590 = vld [vmem:[#allocation8 + $0x6f8] sm:$0xff]
    %v591 = vld [vmem:[#allocation8 + $0x700] sm:$0xff]
    %v592 = vld [vmem:[#allocation8 + $0x708] sm:$0xff]
    %v593 = vld [vmem:[#allocation8 + $0x710] sm:$0xff]
    %v594 = vld [vmem:[#allocation8 + $0x718] sm:$0xff]
    %v595 = vld [vmem:[#allocation8 + $0x720] sm:$0xff]
    %v596 = vld [vmem:[#allocation8 + $0x728] sm:$0xff]
    %v597 = vld [vmem:[#allocation8 + $0x730] sm:$0xff]
    %v598 = vld [vmem:[#allocation8 + $0x738] sm:$0xff]
    %v599 = vld [vmem:[#allocation8 + $0x740] sm:$0xff]
    %v600 = vld [vmem:[#allocation8 + $0x748] sm:$0xff]
    %v601 = vld [vmem:[#allocation8 + $0x750] sm:$0xff]
    %v602 = vld [vmem:[#allocation8 + $0x758] sm:$0xff]
    %v603 = vld [vmem:[#allocation8 + $0x760] sm:$0xff]
    %v604 = vld [vmem:[#allocation8 + $0x768] sm:$0xff]
    %v605 = vld [vmem:[#allocation8 + $0x770] sm:$0xff]
    %v606 = vld [vmem:[#allocation8 + $0x778] sm:$0xff]
    %v607 = vld [vmem:[#allocation8 + $0x780] sm:$0xff]
    %v608 = vld [vmem:[#allocation8 + $0x788] sm:$0xff]
    %v609 = vld [vmem:[#allocation8 + $0x790] sm:$0xff]
    %v610 = vld [vmem:[#allocation8 + $0x798] sm:$0xff]
    %v611 = vld [vmem:[#allocation8 + $0x7a0] sm:$0xff]
    %v612 = vld [vmem:[#allocation8 + $0x7a8] sm:$0xff]
    %v613 = vld [vmem:[#allocation8 + $0x7b0] sm:$0xff]
    %v614 = vld [vmem:[#allocation8 + $0x7b8] sm:$0xff]
    %v615 = vld [vmem:[#allocation8 + $0x7c0] sm:$0xff]
    %v616 = vld [vmem:[#allocation8 + $0x7c8] sm:$0xff]
    %v617 = vld [vmem:[#allocation8 + $0x7d0] sm:$0xff]
    %v618 = vld [vmem:[#allocation8 + $0x7d8] sm:$0xff]
    %v619 = vld [vmem:[#allocation8 + $0x7e0] sm:$0xff]
    %v620 = vld [vmem:[#allocation8 + $0x7e8] sm:$0xff]
    %v621 = vld [vmem:[#allocation8 + $0x7f0] sm:$0xff]
    %v622 = vld [vmem:[#allocation8 + $0x7f8] sm:$0xff]
    %v623 = vld [vmem:[%s4] sm:$0xf]
    %v625 = vlaneseq
    %v626 = vshrl.u32 %v625, 7
    %v627 = vsub.s32 0, %v626
    %v628 = vrot.slane %v623, %v627
    %v629 = vlaneseq
    %v630 = vshrl.u32 %v629, 7
    %v631 = vsub.s32 1, %v630
    %v632 = vrot.slane %v623, %v631
    %v633 = vlaneseq
    %v634 = vshrl.u32 %v633, 7
    %v635 = vsub.s32 2, %v634
    %v636 = vrot.slane %v623, %v635
    %v637 = vlaneseq
    %v638 = vshrl.u32 %v637, 7
    %v639 = vsub.s32 3, %v638
    %v640 = vrot.slane %v623, %v639
    %v901 = vunpack.c.l.b16 %v367
    %v902 = vunpack.c.h.b16 %v367
    %v903 = vunpack.c.l.b16 %v368
    %v904 = vunpack.c.h.b16 %v368
    %v905 = vunpack.c.l.b16 %v369
    %v906 = vunpack.c.h.b16 %v369
    %v907 = vunpack.c.l.b16 %v370
    %v908 = vunpack.c.h.b16 %v370
    %v909 = vunpack.c.l.b16 %v371
    %v910 = vunpack.c.h.b16 %v371
    %v911 = vunpack.c.l.b16 %v372
    %v912 = vunpack.c.h.b16 %v372
    %v913 = vunpack.c.l.b16 %v373
    %v914 = vunpack.c.h.b16 %v373
    %v915 = vunpack.c.l.b16 %v374
    %v916 = vunpack.c.h.b16 %v374
    %v917 = vunpack.c.l.b16 %v375
    %v918 = vunpack.c.h.b16 %v375
    %v919 = vunpack.c.l.b16 %v376
    %v920 = vunpack.c.h.b16 %v376
    %v921 = vunpack.c.l.b16 %v377
    %v922 = vunpack.c.h.b16 %v377
    %v923 = vunpack.c.l.b16 %v378
    %v924 = vunpack.c.h.b16 %v378
    %v925 = vunpack.c.l.b16 %v379
    %v926 = vunpack.c.h.b16 %v379
    %v927 = vunpack.c.l.b16 %v380
    %v928 = vunpack.c.h.b16 %v380
    %v929 = vunpack.c.l.b16 %v381
    %v930 = vunpack.c.h.b16 %v381
    %v931 = vunpack.c.l.b16 %v382
    %v932 = vunpack.c.h.b16 %v382
    %v933 = vunpack.c.l.b16 %v383
    %v934 = vunpack.c.h.b16 %v383
    %v935 = vunpack.c.l.b16 %v384
    %v936 = vunpack.c.h.b16 %v384
    %v937 = vunpack.c.l.b16 %v385
    %v938 = vunpack.c.h.b16 %v385
    %v939 = vunpack.c.l.b16 %v386
    %v940 = vunpack.c.h.b16 %v386
    %v941 = vunpack.c.l.b16 %v387
    %v942 = vunpack.c.h.b16 %v387
    %v943 = vunpack.c.l.b16 %v388
    %v944 = vunpack.c.h.b16 %v388
    %v945 = vunpack.c.l.b16 %v389
    %v946 = vunpack.c.h.b16 %v389
    %v947 = vunpack.c.l.b16 %v390
    %v948 = vunpack.c.h.b16 %v390
    %v949 = vunpack.c.l.b16 %v391
    %v950 = vunpack.c.h.b16 %v391
    %v951 = vunpack.c.l.b16 %v392
    %v952 = vunpack.c.h.b16 %v392
    %v953 = vunpack.c.l.b16 %v393
    %v954 = vunpack.c.h.b16 %v393
    %v955 = vunpack.c.l.b16 %v394
    %v956 = vunpack.c.h.b16 %v394
    %v957 = vunpack.c.l.b16 %v395
    %v958 = vunpack.c.h.b16 %v395
    %v959 = vunpack.c.l.b16 %v396
    %v960 = vunpack.c.h.b16 %v396
    %v961 = vunpack.c.l.b16 %v397
    %v962 = vunpack.c.h.b16 %v397
    %v963 = vunpack.c.l.b16 %v398
    %v964 = vunpack.c.h.b16 %v398
    %v965 = vunpack.c.l.b16 %v399
    %v966 = vunpack.c.h.b16 %v399
    %v967 = vunpack.c.l.b16 %v400
    %v968 = vunpack.c.h.b16 %v400
    %v969 = vunpack.c.l.b16 %v401
    %v970 = vunpack.c.h.b16 %v401
    %v971 = vunpack.c.l.b16 %v402
    %v972 = vunpack.c.h.b16 %v402
    %v973 = vunpack.c.l.b16 %v403
    %v974 = vunpack.c.h.b16 %v403
    %v975 = vunpack.c.l.b16 %v404
    %v976 = vunpack.c.h.b16 %v404
    %v977 = vunpack.c.l.b16 %v405
    %v978 = vunpack.c.h.b16 %v405
    %v979 = vunpack.c.l.b16 %v406
    %v980 = vunpack.c.h.b16 %v406
    %v981 = vunpack.c.l.b16 %v407
    %v982 = vunpack.c.h.b16 %v407
    %v983 = vunpack.c.l.b16 %v408
    %v984 = vunpack.c.h.b16 %v408
    %v985 = vunpack.c.l.b16 %v409
    %v986 = vunpack.c.h.b16 %v409
    %v987 = vunpack.c.l.b16 %v410
    %v988 = vunpack.c.h.b16 %v410
    %v989 = vunpack.c.l.b16 %v411
    %v990 = vunpack.c.h.b16 %v411
    %v991 = vunpack.c.l.b16 %v412
    %v992 = vunpack.c.h.b16 %v412
    %v993 = vunpack.c.l.b16 %v413
    %v994 = vunpack.c.h.b16 %v413
    %v995 = vunpack.c.l.b16 %v414
    %v996 = vunpack.c.h.b16 %v414
    %v997 = vunpack.c.l.b16 %v415
    %v998 = vunpack.c.h.b16 %v415
    %v999 = vunpack.c.l.b16 %v416
    %v1000 = vunpack.c.h.b16 %v416
    %v1001 = vunpack.c.l.b16 %v417
    %v1002 = vunpack.c.h.b16 %v417
    %v1003 = vunpack.c.l.b16 %v418
    %v1004 = vunpack.c.h.b16 %v418
    %v1005 = vunpack.c.l.b16 %v419
    %v1006 = vunpack.c.h.b16 %v419
    %v1007 = vunpack.c.l.b16 %v420
    %v1008 = vunpack.c.h.b16 %v420
    %v1009 = vunpack.c.l.b16 %v421
    %v1010 = vunpack.c.h.b16 %v421
    %v1011 = vunpack.c.l.b16 %v422
    %v1012 = vunpack.c.h.b16 %v422
    %v1013 = vunpack.c.l.b16 %v423
    %v1014 = vunpack.c.h.b16 %v423
    %v1015 = vunpack.c.l.b16 %v424
    %v1016 = vunpack.c.h.b16 %v424
    %v1017 = vunpack.c.l.b16 %v425
    %v1018 = vunpack.c.h.b16 %v425
    %v1019 = vunpack.c.l.b16 %v426
    %v1020 = vunpack.c.h.b16 %v426
    %v1021 = vunpack.c.l.b16 %v427
    %v1022 = vunpack.c.h.b16 %v427
    %v1023 = vunpack.c.l.b16 %v428
    %v1024 = vunpack.c.h.b16 %v428
    %v1025 = vunpack.c.l.b16 %v429
    %v1026 = vunpack.c.h.b16 %v429
    %v1027 = vunpack.c.l.b16 %v430
    %v1028 = vunpack.c.h.b16 %v430
    %v1029 = vunpack.c.l.b16 %v431
    %v1030 = vunpack.c.h.b16 %v431
    %v1031 = vunpack.c.l.b16 %v432
    %v1032 = vunpack.c.h.b16 %v432
    %v1033 = vunpack.c.l.b16 %v433
    %v1034 = vunpack.c.h.b16 %v433
    %v1035 = vunpack.c.l.b16 %v434
    %v1036 = vunpack.c.h.b16 %v434
    %v1037 = vunpack.c.l.b16 %v435
    %v1038 = vunpack.c.h.b16 %v435
    %v1039 = vunpack.c.l.b16 %v436
    %v1040 = vunpack.c.h.b16 %v436
    %v1041 = vunpack.c.l.b16 %v437
    %v1042 = vunpack.c.h.b16 %v437
    %v1043 = vunpack.c.l.b16 %v438
    %v1044 = vunpack.c.h.b16 %v438
    %v1045 = vunpack.c.l.b16 %v439
    %v1046 = vunpack.c.h.b16 %v439
    %v1047 = vunpack.c.l.b16 %v440
    %v1048 = vunpack.c.h.b16 %v440
    %v1049 = vunpack.c.l.b16 %v441
    %v1050 = vunpack.c.h.b16 %v441
    %v1051 = vunpack.c.l.b16 %v442
    %v1052 = vunpack.c.h.b16 %v442
    %v1053 = vunpack.c.l.b16 %v443
    %v1054 = vunpack.c.h.b16 %v443
    %v1055 = vunpack.c.l.b16 %v444
    %v1056 = vunpack.c.h.b16 %v444
    %v1057 = vunpack.c.l.b16 %v445
    %v1058 = vunpack.c.h.b16 %v445
    %v1059 = vunpack.c.l.b16 %v446
    %v1060 = vunpack.c.h.b16 %v446
    %v1061 = vunpack.c.l.b16 %v447
    %v1062 = vunpack.c.h.b16 %v447
    %v1063 = vunpack.c.l.b16 %v448
    %v1064 = vunpack.c.h.b16 %v448
    %v1065 = vunpack.c.l.b16 %v449
    %v1066 = vunpack.c.h.b16 %v449
    %v1067 = vunpack.c.l.b16 %v450
    %v1068 = vunpack.c.h.b16 %v450
    %v1069 = vunpack.c.l.b16 %v451
    %v1070 = vunpack.c.h.b16 %v451
    %v1071 = vunpack.c.l.b16 %v452
    %v1072 = vunpack.c.h.b16 %v452
    %v1073 = vunpack.c.l.b16 %v453
    %v1074 = vunpack.c.h.b16 %v453
    %v1075 = vunpack.c.l.b16 %v454
    %v1076 = vunpack.c.h.b16 %v454
    %v1077 = vunpack.c.l.b16 %v455
    %v1078 = vunpack.c.h.b16 %v455
    %v1079 = vunpack.c.l.b16 %v456
    %v1080 = vunpack.c.h.b16 %v456
    %v1081 = vunpack.c.l.b16 %v457
    %v1082 = vunpack.c.h.b16 %v457
    %v1083 = vunpack.c.l.b16 %v458
    %v1084 = vunpack.c.h.b16 %v458
    %v1085 = vunpack.c.l.b16 %v459
    %v1086 = vunpack.c.h.b16 %v459
    %v1087 = vunpack.c.l.b16 %v460
    %v1088 = vunpack.c.h.b16 %v460
    %v1089 = vunpack.c.l.b16 %v461
    %v1090 = vunpack.c.h.b16 %v461
    %v1091 = vunpack.c.l.b16 %v462
    %v1092 = vunpack.c.h.b16 %v462
    %v1093 = vunpack.c.l.b16 %v463
    %v1094 = vunpack.c.h.b16 %v463
    %v1095 = vunpack.c.l.b16 %v464
    %v1096 = vunpack.c.h.b16 %v464
    %v1097 = vunpack.c.l.b16 %v465
    %v1098 = vunpack.c.h.b16 %v465
    %v1099 = vunpack.c.l.b16 %v466
    %v1100 = vunpack.c.h.b16 %v466
    %v1101 = vunpack.c.l.b16 %v467
    %v1102 = vunpack.c.h.b16 %v467
    %v1103 = vunpack.c.l.b16 %v468
    %v1104 = vunpack.c.h.b16 %v468
    %v1105 = vunpack.c.l.b16 %v469
    %v1106 = vunpack.c.h.b16 %v469
    %v1107 = vunpack.c.l.b16 %v470
    %v1108 = vunpack.c.h.b16 %v470
    %v1109 = vunpack.c.l.b16 %v471
    %v1110 = vunpack.c.h.b16 %v471
    %v1111 = vunpack.c.l.b16 %v472
    %v1112 = vunpack.c.h.b16 %v472
    %v1113 = vunpack.c.l.b16 %v473
    %v1114 = vunpack.c.h.b16 %v473
    %v1115 = vunpack.c.l.b16 %v474
    %v1116 = vunpack.c.h.b16 %v474
    %v1117 = vunpack.c.l.b16 %v475
    %v1118 = vunpack.c.h.b16 %v475
    %v1119 = vunpack.c.l.b16 %v476
    %v1120 = vunpack.c.h.b16 %v476
    %v1121 = vunpack.c.l.b16 %v477
    %v1122 = vunpack.c.h.b16 %v477
    %v1123 = vunpack.c.l.b16 %v478
    %v1124 = vunpack.c.h.b16 %v478
    %v1125 = vunpack.c.l.b16 %v479
    %v1126 = vunpack.c.h.b16 %v479
    %v1127 = vunpack.c.l.b16 %v480
    %v1128 = vunpack.c.h.b16 %v480
    %v1129 = vunpack.c.l.b16 %v481
    %v1130 = vunpack.c.h.b16 %v481
    %v1131 = vunpack.c.l.b16 %v482
    %v1132 = vunpack.c.h.b16 %v482
    %v1133 = vunpack.c.l.b16 %v483
    %v1134 = vunpack.c.h.b16 %v483
    %v1135 = vunpack.c.l.b16 %v484
    %v1136 = vunpack.c.h.b16 %v484
    %v1137 = vunpack.c.l.b16 %v485
    %v1138 = vunpack.c.h.b16 %v485
    %v1139 = vunpack.c.l.b16 %v486
    %v1140 = vunpack.c.h.b16 %v486
    %v1141 = vunpack.c.l.b16 %v487
    %v1142 = vunpack.c.h.b16 %v487
    %v1143 = vunpack.c.l.b16 %v488
    %v1144 = vunpack.c.h.b16 %v488
    %v1145 = vunpack.c.l.b16 %v489
    %v1146 = vunpack.c.h.b16 %v489
    %v1147 = vunpack.c.l.b16 %v490
    %v1148 = vunpack.c.h.b16 %v490
    %v1149 = vunpack.c.l.b16 %v491
    %v1150 = vunpack.c.h.b16 %v491
    %v1151 = vunpack.c.l.b16 %v492
    %v1152 = vunpack.c.h.b16 %v492
    %v1153 = vunpack.c.l.b16 %v493
    %v1154 = vunpack.c.h.b16 %v493
    %v1155 = vunpack.c.l.b16 %v494
    %v1156 = vunpack.c.h.b16 %v494
    %v1157 = vunpack.c.l.b16 %v495
    %v1158 = vunpack.c.h.b16 %v495
    %v1159 = vunpack.c.l.b16 %v496
    %v1160 = vunpack.c.h.b16 %v496
    %v1161 = vunpack.c.l.b16 %v497
    %v1162 = vunpack.c.h.b16 %v497
    %v1163 = vunpack.c.l.b16 %v498
    %v1164 = vunpack.c.h.b16 %v498
    %v1165 = vunpack.c.l.b16 %v499
    %v1166 = vunpack.c.h.b16 %v499
    %v1167 = vunpack.c.l.b16 %v500
    %v1168 = vunpack.c.h.b16 %v500
    %v1169 = vunpack.c.l.b16 %v501
    %v1170 = vunpack.c.h.b16 %v501
    %v1171 = vunpack.c.l.b16 %v502
    %v1172 = vunpack.c.h.b16 %v502
    %v1173 = vunpack.c.l.b16 %v503
    %v1174 = vunpack.c.h.b16 %v503
    %v1175 = vunpack.c.l.b16 %v504
    %v1176 = vunpack.c.h.b16 %v504
    %v1177 = vunpack.c.l.b16 %v505
    %v1178 = vunpack.c.h.b16 %v505
    %v1179 = vunpack.c.l.b16 %v506
    %v1180 = vunpack.c.h.b16 %v506
    %v1181 = vunpack.c.l.b16 %v507
    %v1182 = vunpack.c.h.b16 %v507
    %v1183 = vunpack.c.l.b16 %v508
    %v1184 = vunpack.c.h.b16 %v508
    %v1185 = vunpack.c.l.b16 %v509
    %v1186 = vunpack.c.h.b16 %v509
    %v1187 = vunpack.c.l.b16 %v510
    %v1188 = vunpack.c.h.b16 %v510
    %v1189 = vunpack.c.l.b16 %v511
    %v1190 = vunpack.c.h.b16 %v511
    %v1191 = vunpack.c.l.b16 %v512
    %v1192 = vunpack.c.h.b16 %v512
    %v1193 = vunpack.c.l.b16 %v513
    %v1194 = vunpack.c.h.b16 %v513
    %v1195 = vunpack.c.l.b16 %v514
    %v1196 = vunpack.c.h.b16 %v514
    %v1197 = vunpack.c.l.b16 %v515
    %v1198 = vunpack.c.h.b16 %v515
    %v1199 = vunpack.c.l.b16 %v516
    %v1200 = vunpack.c.h.b16 %v516
    %v1201 = vunpack.c.l.b16 %v517
    %v1202 = vunpack.c.h.b16 %v517
    %v1203 = vunpack.c.l.b16 %v518
    %v1204 = vunpack.c.h.b16 %v518
    %v1205 = vunpack.c.l.b16 %v519
    %v1206 = vunpack.c.h.b16 %v519
    %v1207 = vunpack.c.l.b16 %v520
    %v1208 = vunpack.c.h.b16 %v520
    %v1209 = vunpack.c.l.b16 %v521
    %v1210 = vunpack.c.h.b16 %v521
    %v1211 = vunpack.c.l.b16 %v522
    %v1212 = vunpack.c.h.b16 %v522
    %v1213 = vunpack.c.l.b16 %v523
    %v1214 = vunpack.c.h.b16 %v523
    %v1215 = vunpack.c.l.b16 %v524
    %v1216 = vunpack.c.h.b16 %v524
    %v1217 = vunpack.c.l.b16 %v525
    %v1218 = vunpack.c.h.b16 %v525
    %v1219 = vunpack.c.l.b16 %v526
    %v1220 = vunpack.c.h.b16 %v526
    %v1221 = vunpack.c.l.b16 %v527
    %v1222 = vunpack.c.h.b16 %v527
    %v1223 = vunpack.c.l.b16 %v528
    %v1224 = vunpack.c.h.b16 %v528
    %v1225 = vunpack.c.l.b16 %v529
    %v1226 = vunpack.c.h.b16 %v529
    %v1227 = vunpack.c.l.b16 %v530
    %v1228 = vunpack.c.h.b16 %v530
    %v1229 = vunpack.c.l.b16 %v531
    %v1230 = vunpack.c.h.b16 %v531
    %v1231 = vunpack.c.l.b16 %v532
    %v1232 = vunpack.c.h.b16 %v532
    %v1233 = vunpack.c.l.b16 %v533
    %v1234 = vunpack.c.h.b16 %v533
    %v1235 = vunpack.c.l.b16 %v534
    %v1236 = vunpack.c.h.b16 %v534
    %v1237 = vunpack.c.l.b16 %v535
    %v1238 = vunpack.c.h.b16 %v535
    %v1239 = vunpack.c.l.b16 %v536
    %v1240 = vunpack.c.h.b16 %v536
    %v1241 = vunpack.c.l.b16 %v537
    %v1242 = vunpack.c.h.b16 %v537
    %v1243 = vunpack.c.l.b16 %v538
    %v1244 = vunpack.c.h.b16 %v538
    %v1245 = vunpack.c.l.b16 %v539
    %v1246 = vunpack.c.h.b16 %v539
    %v1247 = vunpack.c.l.b16 %v540
    %v1248 = vunpack.c.h.b16 %v540
    %v1249 = vunpack.c.l.b16 %v541
    %v1250 = vunpack.c.h.b16 %v541
    %v1251 = vunpack.c.l.b16 %v542
    %v1252 = vunpack.c.h.b16 %v542
    %v1253 = vunpack.c.l.b16 %v543
    %v1254 = vunpack.c.h.b16 %v543
    %v1255 = vunpack.c.l.b16 %v544
    %v1256 = vunpack.c.h.b16 %v544
    %v1257 = vunpack.c.l.b16 %v545
    %v1258 = vunpack.c.h.b16 %v545
    %v1259 = vunpack.c.l.b16 %v546
    %v1260 = vunpack.c.h.b16 %v546
    %v1261 = vunpack.c.l.b16 %v547
    %v1262 = vunpack.c.h.b16 %v547
    %v1263 = vunpack.c.l.b16 %v548
    %v1264 = vunpack.c.h.b16 %v548
    %v1265 = vunpack.c.l.b16 %v549
    %v1266 = vunpack.c.h.b16 %v549
    %v1267 = vunpack.c.l.b16 %v550
    %v1268 = vunpack.c.h.b16 %v550
    %v1269 = vunpack.c.l.b16 %v551
    %v1270 = vunpack.c.h.b16 %v551
    %v1271 = vunpack.c.l.b16 %v552
    %v1272 = vunpack.c.h.b16 %v552
    %v1273 = vunpack.c.l.b16 %v553
    %v1274 = vunpack.c.h.b16 %v553
    %v1275 = vunpack.c.l.b16 %v554
    %v1276 = vunpack.c.h.b16 %v554
    %v1277 = vunpack.c.l.b16 %v555
    %v1278 = vunpack.c.h.b16 %v555
    %v1279 = vunpack.c.l.b16 %v556
    %v1280 = vunpack.c.h.b16 %v556
    %v1281 = vunpack.c.l.b16 %v557
    %v1282 = vunpack.c.h.b16 %v557
    %v1283 = vunpack.c.l.b16 %v558
    %v1284 = vunpack.c.h.b16 %v558
    %v1285 = vunpack.c.l.b16 %v559
    %v1286 = vunpack.c.h.b16 %v559
    %v1287 = vunpack.c.l.b16 %v560
    %v1288 = vunpack.c.h.b16 %v560
    %v1289 = vunpack.c.l.b16 %v561
    %v1290 = vunpack.c.h.b16 %v561
    %v1291 = vunpack.c.l.b16 %v562
    %v1292 = vunpack.c.h.b16 %v562
    %v1293 = vunpack.c.l.b16 %v563
    %v1294 = vunpack.c.h.b16 %v563
    %v1295 = vunpack.c.l.b16 %v564
    %v1296 = vunpack.c.h.b16 %v564
    %v1297 = vunpack.c.l.b16 %v565
    %v1298 = vunpack.c.h.b16 %v565
    %v1299 = vunpack.c.l.b16 %v566
    %v1300 = vunpack.c.h.b16 %v566
    %v1301 = vunpack.c.l.b16 %v567
    %v1302 = vunpack.c.h.b16 %v567
    %v1303 = vunpack.c.l.b16 %v568
    %v1304 = vunpack.c.h.b16 %v568
    %v1305 = vunpack.c.l.b16 %v569
    %v1306 = vunpack.c.h.b16 %v569
    %v1307 = vunpack.c.l.b16 %v570
    %v1308 = vunpack.c.h.b16 %v570
    %v1309 = vunpack.c.l.b16 %v571
    %v1310 = vunpack.c.h.b16 %v571
    %v1311 = vunpack.c.l.b16 %v572
    %v1312 = vunpack.c.h.b16 %v572
    %v1313 = vunpack.c.l.b16 %v573
    %v1314 = vunpack.c.h.b16 %v573
    %v1315 = vunpack.c.l.b16 %v574
    %v1316 = vunpack.c.h.b16 %v574
    %v1317 = vunpack.c.l.b16 %v575
    %v1318 = vunpack.c.h.b16 %v575
    %v1319 = vunpack.c.l.b16 %v576
    %v1320 = vunpack.c.h.b16 %v576
    %v1321 = vunpack.c.l.b16 %v577
    %v1322 = vunpack.c.h.b16 %v577
    %v1323 = vunpack.c.l.b16 %v578
    %v1324 = vunpack.c.h.b16 %v578
    %v1325 = vunpack.c.l.b16 %v579
    %v1326 = vunpack.c.h.b16 %v579
    %v1327 = vunpack.c.l.b16 %v580
    %v1328 = vunpack.c.h.b16 %v580
    %v1329 = vunpack.c.l.b16 %v581
    %v1330 = vunpack.c.h.b16 %v581
    %v1331 = vunpack.c.l.b16 %v582
    %v1332 = vunpack.c.h.b16 %v582
    %v1333 = vunpack.c.l.b16 %v583
    %v1334 = vunpack.c.h.b16 %v583
    %v1335 = vunpack.c.l.b16 %v584
    %v1336 = vunpack.c.h.b16 %v584
    %v1337 = vunpack.c.l.b16 %v585
    %v1338 = vunpack.c.h.b16 %v585
    %v1339 = vunpack.c.l.b16 %v586
    %v1340 = vunpack.c.h.b16 %v586
    %v1341 = vunpack.c.l.b16 %v587
    %v1342 = vunpack.c.h.b16 %v587
    %v1343 = vunpack.c.l.b16 %v588
    %v1344 = vunpack.c.h.b16 %v588
    %v1345 = vunpack.c.l.b16 %v589
    %v1346 = vunpack.c.h.b16 %v589
    %v1347 = vunpack.c.l.b16 %v590
    %v1348 = vunpack.c.h.b16 %v590
    %v1349 = vunpack.c.l.b16 %v591
    %v1350 = vunpack.c.h.b16 %v591
    %v1351 = vunpack.c.l.b16 %v592
    %v1352 = vunpack.c.h.b16 %v592
    %v1353 = vunpack.c.l.b16 %v593
    %v1354 = vunpack.c.h.b16 %v593
    %v1355 = vunpack.c.l.b16 %v594
    %v1356 = vunpack.c.h.b16 %v594
    %v1357 = vunpack.c.l.b16 %v595
    %v1358 = vunpack.c.h.b16 %v595
    %v1359 = vunpack.c.l.b16 %v596
    %v1360 = vunpack.c.h.b16 %v596
    %v1361 = vunpack.c.l.b16 %v597
    %v1362 = vunpack.c.h.b16 %v597
    %v1363 = vunpack.c.l.b16 %v598
    %v1364 = vunpack.c.h.b16 %v598
    %v1365 = vunpack.c.l.b16 %v599
    %v1366 = vunpack.c.h.b16 %v599
    %v1367 = vunpack.c.l.b16 %v600
    %v1368 = vunpack.c.h.b16 %v600
    %v1369 = vunpack.c.l.b16 %v601
    %v1370 = vunpack.c.h.b16 %v601
    %v1371 = vunpack.c.l.b16 %v602
    %v1372 = vunpack.c.h.b16 %v602
    %v1373 = vunpack.c.l.b16 %v603
    %v1374 = vunpack.c.h.b16 %v603
    %v1375 = vunpack.c.l.b16 %v604
    %v1376 = vunpack.c.h.b16 %v604
    %v1377 = vunpack.c.l.b16 %v605
    %v1378 = vunpack.c.h.b16 %v605
    %v1379 = vunpack.c.l.b16 %v606
    %v1380 = vunpack.c.h.b16 %v606
    %v1381 = vunpack.c.l.b16 %v607
    %v1382 = vunpack.c.h.b16 %v607
    %v1383 = vunpack.c.l.b16 %v608
    %v1384 = vunpack.c.h.b16 %v608
    %v1385 = vunpack.c.l.b16 %v609
    %v1386 = vunpack.c.h.b16 %v609
    %v1387 = vunpack.c.l.b16 %v610
    %v1388 = vunpack.c.h.b16 %v610
    %v1389 = vunpack.c.l.b16 %v611
    %v1390 = vunpack.c.h.b16 %v611
    %v1391 = vunpack.c.l.b16 %v612
    %v1392 = vunpack.c.h.b16 %v612
    %v1393 = vunpack.c.l.b16 %v613
    %v1394 = vunpack.c.h.b16 %v613
    %v1395 = vunpack.c.l.b16 %v614
    %v1396 = vunpack.c.h.b16 %v614
    %v1397 = vunpack.c.l.b16 %v615
    %v1398 = vunpack.c.h.b16 %v615
    %v1399 = vunpack.c.l.b16 %v616
    %v1400 = vunpack.c.h.b16 %v616
    %v1401 = vunpack.c.l.b16 %v617
    %v1402 = vunpack.c.h.b16 %v617
    %v1403 = vunpack.c.l.b16 %v618
    %v1404 = vunpack.c.h.b16 %v618
    %v1405 = vunpack.c.l.b16 %v619
    %v1406 = vunpack.c.h.b16 %v619
    %v1407 = vunpack.c.l.b16 %v620
    %v1408 = vunpack.c.h.b16 %v620
    %v1409 = vunpack.c.l.b16 %v621
    %v1410 = vunpack.c.h.b16 %v621
    %v1411 = vunpack.c.l.b16 %v622
    %v1412 = vunpack.c.h.b16 %v622
    %v1413 = vpack.c.b16 %v905, %v901
    %v1414 = vpack.c.b16 %v906, %v902
    %v1415 = vpack.c.b16 %v907, %v903
    %v1416 = vpack.c.b16 %v908, %v904
    %v1417 = vpack.c.b16 %v913, %v909
    %v1418 = vpack.c.b16 %v914, %v910
    %v1419 = vpack.c.b16 %v915, %v911
    %v1420 = vpack.c.b16 %v916, %v912
    %v1421 = vpack.c.b16 %v921, %v917
    %v1422 = vpack.c.b16 %v922, %v918
    %v1423 = vpack.c.b16 %v923, %v919
    %v1424 = vpack.c.b16 %v924, %v920
    %v1425 = vpack.c.b16 %v929, %v925
    %v1426 = vpack.c.b16 %v930, %v926
    %v1427 = vpack.c.b16 %v931, %v927
    %v1428 = vpack.c.b16 %v932, %v928
    %v1429 = vpack.c.b16 %v937, %v933
    %v1430 = vpack.c.b16 %v938, %v934
    %v1431 = vpack.c.b16 %v939, %v935
    %v1432 = vpack.c.b16 %v940, %v936
    %v1433 = vpack.c.b16 %v945, %v941
    %v1434 = vpack.c.b16 %v946, %v942
    %v1435 = vpack.c.b16 %v947, %v943
    %v1436 = vpack.c.b16 %v948, %v944
    %v1437 = vpack.c.b16 %v953, %v949
    %v1438 = vpack.c.b16 %v954, %v950
    %v1439 = vpack.c.b16 %v955, %v951
    %v1440 = vpack.c.b16 %v956, %v952
    %v1441 = vpack.c.b16 %v961, %v957
    %v1442 = vpack.c.b16 %v962, %v958
    %v1443 = vpack.c.b16 %v963, %v959
    %v1444 = vpack.c.b16 %v964, %v960
    %v1445 = vpack.c.b16 %v969, %v965
    %v1446 = vpack.c.b16 %v970, %v966
    %v1447 = vpack.c.b16 %v971, %v967
    %v1448 = vpack.c.b16 %v972, %v968
    %v1449 = vpack.c.b16 %v977, %v973
    %v1450 = vpack.c.b16 %v978, %v974
    %v1451 = vpack.c.b16 %v979, %v975
    %v1452 = vpack.c.b16 %v980, %v976
    %v1453 = vpack.c.b16 %v985, %v981
    %v1454 = vpack.c.b16 %v986, %v982
    %v1455 = vpack.c.b16 %v987, %v983
    %v1456 = vpack.c.b16 %v988, %v984
    %v1457 = vpack.c.b16 %v993, %v989
    %v1458 = vpack.c.b16 %v994, %v990
    %v1459 = vpack.c.b16 %v995, %v991
    %v1460 = vpack.c.b16 %v996, %v992
    %v1461 = vpack.c.b16 %v1001, %v997
    %v1462 = vpack.c.b16 %v1002, %v998
    %v1463 = vpack.c.b16 %v1003, %v999
    %v1464 = vpack.c.b16 %v1004, %v1000
    %v1465 = vpack.c.b16 %v1009, %v1005
    %v1466 = vpack.c.b16 %v1010, %v1006
    %v1467 = vpack.c.b16 %v1011, %v1007
    %v1468 = vpack.c.b16 %v1012, %v1008
    %v1469 = vpack.c.b16 %v1017, %v1013
    %v1470 = vpack.c.b16 %v1018, %v1014
    %v1471 = vpack.c.b16 %v1019, %v1015
    %v1472 = vpack.c.b16 %v1020, %v1016
    %v1473 = vpack.c.b16 %v1025, %v1021
    %v1474 = vpack.c.b16 %v1026, %v1022
    %v1475 = vpack.c.b16 %v1027, %v1023
    %v1476 = vpack.c.b16 %v1028, %v1024
    %v1477 = vpack.c.b16 %v1033, %v1029
    %v1478 = vpack.c.b16 %v1034, %v1030
    %v1479 = vpack.c.b16 %v1035, %v1031
    %v1480 = vpack.c.b16 %v1036, %v1032
    %v1481 = vpack.c.b16 %v1041, %v1037
    %v1482 = vpack.c.b16 %v1042, %v1038
    %v1483 = vpack.c.b16 %v1043, %v1039
    %v1484 = vpack.c.b16 %v1044, %v1040
    %v1485 = vpack.c.b16 %v1049, %v1045
    %v1486 = vpack.c.b16 %v1050, %v1046
    %v1487 = vpack.c.b16 %v1051, %v1047
    %v1488 = vpack.c.b16 %v1052, %v1048
    %v1489 = vpack.c.b16 %v1057, %v1053
    %v1490 = vpack.c.b16 %v1058, %v1054
    %v1491 = vpack.c.b16 %v1059, %v1055
    %v1492 = vpack.c.b16 %v1060, %v1056
    %v1493 = vpack.c.b16 %v1065, %v1061
    %v1494 = vpack.c.b16 %v1066, %v1062
    %v1495 = vpack.c.b16 %v1067, %v1063
    %v1496 = vpack.c.b16 %v1068, %v1064
    %v1497 = vpack.c.b16 %v1073, %v1069
    %v1498 = vpack.c.b16 %v1074, %v1070
    %v1499 = vpack.c.b16 %v1075, %v1071
    %v1500 = vpack.c.b16 %v1076, %v1072
    %v1501 = vpack.c.b16 %v1081, %v1077
    %v1502 = vpack.c.b16 %v1082, %v1078
    %v1503 = vpack.c.b16 %v1083, %v1079
    %v1504 = vpack.c.b16 %v1084, %v1080
    %v1505 = vpack.c.b16 %v1089, %v1085
    %v1506 = vpack.c.b16 %v1090, %v1086
    %v1507 = vpack.c.b16 %v1091, %v1087
    %v1508 = vpack.c.b16 %v1092, %v1088
    %v1509 = vpack.c.b16 %v1097, %v1093
    %v1510 = vpack.c.b16 %v1098, %v1094
    %v1511 = vpack.c.b16 %v1099, %v1095
    %v1512 = vpack.c.b16 %v1100, %v1096
    %v1513 = vpack.c.b16 %v1105, %v1101
    %v1514 = vpack.c.b16 %v1106, %v1102
    %v1515 = vpack.c.b16 %v1107, %v1103
    %v1516 = vpack.c.b16 %v1108, %v1104
    %v1517 = vpack.c.b16 %v1113, %v1109
    %v1518 = vpack.c.b16 %v1114, %v1110
    %v1519 = vpack.c.b16 %v1115, %v1111
    %v1520 = vpack.c.b16 %v1116, %v1112
    %v1521 = vpack.c.b16 %v1121, %v1117
    %v1522 = vpack.c.b16 %v1122, %v1118
    %v1523 = vpack.c.b16 %v1123, %v1119
    %v1524 = vpack.c.b16 %v1124, %v1120
    %v1525 = vpack.c.b16 %v1129, %v1125
    %v1526 = vpack.c.b16 %v1130, %v1126
    %v1527 = vpack.c.b16 %v1131, %v1127
    %v1528 = vpack.c.b16 %v1132, %v1128
    %v1529 = vpack.c.b16 %v1137, %v1133
    %v1530 = vpack.c.b16 %v1138, %v1134
    %v1531 = vpack.c.b16 %v1139, %v1135
    %v1532 = vpack.c.b16 %v1140, %v1136
    %v1533 = vpack.c.b16 %v1145, %v1141
    %v1534 = vpack.c.b16 %v1146, %v1142
    %v1535 = vpack.c.b16 %v1147, %v1143
    %v1536 = vpack.c.b16 %v1148, %v1144
    %v1537 = vpack.c.b16 %v1153, %v1149
    %v1538 = vpack.c.b16 %v1154, %v1150
    %v1539 = vpack.c.b16 %v1155, %v1151
    %v1540 = vpack.c.b16 %v1156, %v1152
    %v1541 = vpack.c.b16 %v1161, %v1157
    %v1542 = vpack.c.b16 %v1162, %v1158
    %v1543 = vpack.c.b16 %v1163, %v1159
    %v1544 = vpack.c.b16 %v1164, %v1160
    %v1545 = vpack.c.b16 %v1169, %v1165
    %v1546 = vpack.c.b16 %v1170, %v1166
    %v1547 = vpack.c.b16 %v1171, %v1167
    %v1548 = vpack.c.b16 %v1172, %v1168
    %v1549 = vpack.c.b16 %v1177, %v1173
    %v1550 = vpack.c.b16 %v1178, %v1174
    %v1551 = vpack.c.b16 %v1179, %v1175
    %v1552 = vpack.c.b16 %v1180, %v1176
    %v1553 = vpack.c.b16 %v1185, %v1181
    %v1554 = vpack.c.b16 %v1186, %v1182
    %v1555 = vpack.c.b16 %v1187, %v1183
    %v1556 = vpack.c.b16 %v1188, %v1184
    %v1557 = vpack.c.b16 %v1193, %v1189
    %v1558 = vpack.c.b16 %v1194, %v1190
    %v1559 = vpack.c.b16 %v1195, %v1191
    %v1560 = vpack.c.b16 %v1196, %v1192
    %v1561 = vpack.c.b16 %v1201, %v1197
    %v1562 = vpack.c.b16 %v1202, %v1198
    %v1563 = vpack.c.b16 %v1203, %v1199
    %v1564 = vpack.c.b16 %v1204, %v1200
    %v1565 = vpack.c.b16 %v1209, %v1205
    %v1566 = vpack.c.b16 %v1210, %v1206
    %v1567 = vpack.c.b16 %v1211, %v1207
    %v1568 = vpack.c.b16 %v1212, %v1208
    %v1569 = vpack.c.b16 %v1217, %v1213
    %v1570 = vpack.c.b16 %v1218, %v1214
    %v1571 = vpack.c.b16 %v1219, %v1215
    %v1572 = vpack.c.b16 %v1220, %v1216
    %v1573 = vpack.c.b16 %v1225, %v1221
    %v1574 = vpack.c.b16 %v1226, %v1222
    %v1575 = vpack.c.b16 %v1227, %v1223
    %v1576 = vpack.c.b16 %v1228, %v1224
    %v1577 = vpack.c.b16 %v1233, %v1229
    %v1578 = vpack.c.b16 %v1234, %v1230
    %v1579 = vpack.c.b16 %v1235, %v1231
    %v1580 = vpack.c.b16 %v1236, %v1232
    %v1581 = vpack.c.b16 %v1241, %v1237
    %v1582 = vpack.c.b16 %v1242, %v1238
    %v1583 = vpack.c.b16 %v1243, %v1239
    %v1584 = vpack.c.b16 %v1244, %v1240
    %v1585 = vpack.c.b16 %v1249, %v1245
    %v1586 = vpack.c.b16 %v1250, %v1246
    %v1587 = vpack.c.b16 %v1251, %v1247
    %v1588 = vpack.c.b16 %v1252, %v1248
    %v1589 = vpack.c.b16 %v1257, %v1253
    %v1590 = vpack.c.b16 %v1258, %v1254
    %v1591 = vpack.c.b16 %v1259, %v1255
    %v1592 = vpack.c.b16 %v1260, %v1256
    %v1593 = vpack.c.b16 %v1265, %v1261
    %v1594 = vpack.c.b16 %v1266, %v1262
    %v1595 = vpack.c.b16 %v1267, %v1263
    %v1596 = vpack.c.b16 %v1268, %v1264
    %v1597 = vpack.c.b16 %v1273, %v1269
    %v1598 = vpack.c.b16 %v1274, %v1270
    %v1599 = vpack.c.b16 %v1275, %v1271
    %v1600 = vpack.c.b16 %v1276, %v1272
    %v1601 = vpack.c.b16 %v1281, %v1277
    %v1602 = vpack.c.b16 %v1282, %v1278
    %v1603 = vpack.c.b16 %v1283, %v1279
    %v1604 = vpack.c.b16 %v1284, %v1280
    %v1605 = vpack.c.b16 %v1289, %v1285
    %v1606 = vpack.c.b16 %v1290, %v1286
    %v1607 = vpack.c.b16 %v1291, %v1287
    %v1608 = vpack.c.b16 %v1292, %v1288
    %v1609 = vpack.c.b16 %v1297, %v1293
    %v1610 = vpack.c.b16 %v1298, %v1294
    %v1611 = vpack.c.b16 %v1299, %v1295
    %v1612 = vpack.c.b16 %v1300, %v1296
    %v1613 = vpack.c.b16 %v1305, %v1301
    %v1614 = vpack.c.b16 %v1306, %v1302
    %v1615 = vpack.c.b16 %v1307, %v1303
    %v1616 = vpack.c.b16 %v1308, %v1304
    %v1617 = vpack.c.b16 %v1313, %v1309
    %v1618 = vpack.c.b16 %v1314, %v1310
    %v1619 = vpack.c.b16 %v1315, %v1311
    %v1620 = vpack.c.b16 %v1316, %v1312
    %v1621 = vpack.c.b16 %v1321, %v1317
    %v1622 = vpack.c.b16 %v1322, %v1318
    %v1623 = vpack.c.b16 %v1323, %v1319
    %v1624 = vpack.c.b16 %v1324, %v1320
    %v1625 = vpack.c.b16 %v1329, %v1325
    %v1626 = vpack.c.b16 %v1330, %v1326
    %v1627 = vpack.c.b16 %v1331, %v1327
    %v1628 = vpack.c.b16 %v1332, %v1328
    %v1629 = vpack.c.b16 %v1337, %v1333
    %v1630 = vpack.c.b16 %v1338, %v1334
    %v1631 = vpack.c.b16 %v1339, %v1335
    %v1632 = vpack.c.b16 %v1340, %v1336
    %v1633 = vpack.c.b16 %v1345, %v1341
    %v1634 = vpack.c.b16 %v1346, %v1342
    %v1635 = vpack.c.b16 %v1347, %v1343
    %v1636 = vpack.c.b16 %v1348, %v1344
    %v1637 = vpack.c.b16 %v1353, %v1349
    %v1638 = vpack.c.b16 %v1354, %v1350
    %v1639 = vpack.c.b16 %v1355, %v1351
    %v1640 = vpack.c.b16 %v1356, %v1352
    %v1641 = vpack.c.b16 %v1361, %v1357
    %v1642 = vpack.c.b16 %v1362, %v1358
    %v1643 = vpack.c.b16 %v1363, %v1359
    %v1644 = vpack.c.b16 %v1364, %v1360
    %v1645 = vpack.c.b16 %v1369, %v1365
    %v1646 = vpack.c.b16 %v1370, %v1366
    %v1647 = vpack.c.b16 %v1371, %v1367
    %v1648 = vpack.c.b16 %v1372, %v1368
    %v1649 = vpack.c.b16 %v1377, %v1373
    %v1650 = vpack.c.b16 %v1378, %v1374
    %v1651 = vpack.c.b16 %v1379, %v1375
    %v1652 = vpack.c.b16 %v1380, %v1376
    %v1653 = vpack.c.b16 %v1385, %v1381
    %v1654 = vpack.c.b16 %v1386, %v1382
    %v1655 = vpack.c.b16 %v1387, %v1383
    %v1656 = vpack.c.b16 %v1388, %v1384
    %v1657 = vpack.c.b16 %v1393, %v1389
    %v1658 = vpack.c.b16 %v1394, %v1390
    %v1659 = vpack.c.b16 %v1395, %v1391
    %v1660 = vpack.c.b16 %v1396, %v1392
    %v1661 = vpack.c.b16 %v1401, %v1397
    %v1662 = vpack.c.b16 %v1402, %v1398
    %v1663 = vpack.c.b16 %v1403, %v1399
    %v1664 = vpack.c.b16 %v1404, %v1400
    %v1665 = vpack.c.b16 %v1409, %v1405
    %v1666 = vpack.c.b16 %v1410, %v1406
    %v1667 = vpack.c.b16 %v1411, %v1407
    %v1668 = vpack.c.b16 %v1412, %v1408
    %1925 = vmatprep.subr.bf16.mxu0 %v1414
    %1926 = vmatpush1.bf16.msra.mxu0 %v1413
    %1927 = vmatprep.subr.bf16.mxu0 %v1418
    %1928 = vmatpush1.bf16.msra.mxu0 %v1417
    %1929 = vmatprep.subr.bf16.mxu0 %v1422
    %1930 = vmatpush1.bf16.msra.mxu0 %v1421
    %1931 = vmatprep.subr.bf16.mxu0 %v1426
    %1932 = vmatpush1.bf16.msra.mxu0 %v1425
    %1933 = vmatprep.subr.bf16.mxu0 %v1430
    %1934 = vmatpush1.bf16.msra.mxu0 %v1429
    %1935 = vmatprep.subr.bf16.mxu0 %v1434
    %1936 = vmatpush1.bf16.msra.mxu0 %v1433
    %1937 = vmatprep.subr.bf16.mxu0 %v1438
    %1938 = vmatpush1.bf16.msra.mxu0 %v1437
    %1939 = vmatprep.subr.bf16.mxu0 %v1442
    %1940 = vmatpush1.bf16.msra.mxu0 %v1441
    %1941 = vmatprep.subr.bf16.mxu0 %v1446
    %1942 = vmatpush1.bf16.msra.mxu0 %v1445
    %1943 = vmatprep.subr.bf16.mxu0 %v1450
    %1944 = vmatpush1.bf16.msra.mxu0 %v1449
    %1945 = vmatprep.subr.bf16.mxu0 %v1454
    %1946 = vmatpush1.bf16.msra.mxu0 %v1453
    %1947 = vmatprep.subr.bf16.mxu0 %v1458
    %1948 = vmatpush1.bf16.msra.mxu0 %v1457
    %1949 = vmatprep.subr.bf16.mxu0 %v1462
    %1950 = vmatpush1.bf16.msra.mxu0 %v1461
    %1951 = vmatprep.subr.bf16.mxu0 %v1466
    %1952 = vmatpush1.bf16.msra.mxu0 %v1465
    %1953 = vmatprep.subr.bf16.mxu0 %v1470
    %1954 = vmatpush1.bf16.msra.mxu0 %v1469
    %1955 = vmatprep.subr.bf16.mxu0 %v1474
    %1956 = vmatpush1.bf16.msra.mxu0 %v1473
    %1957 = vmatprep.mubr.bf16.mxu0 %v360
    %1958 = vmatmul.mubr.bf16.gmra.mrb[0].mxu0 %v359
    %v1959 = vpop.f32.mrb[0].mxu0
    %v1960 = vadd.f32 %v628, %v1959
    %v1961 = vpop.f32.mrb[0].mxu0
    %v1962 = vadd.f32 %v632, %v1961
    %v1963 = vpop.f32.mrb[0].mxu0
    %v1964 = vpop.f32.mrb[0].mxu0
    %1965 = vdwg.mxu0
    %1966 = vmatprep.subr.bf16.mxu0 %v1478
    %1967 = vmatpush1.bf16.msra.mxu0 %v1477
    %1968 = vmatprep.subr.bf16.mxu0 %v1482
    %1969 = vmatpush1.bf16.msra.mxu0 %v1481
    %1970 = vmatprep.subr.bf16.mxu0 %v1486
    %1971 = vmatpush1.bf16.msra.mxu0 %v1485
    %1972 = vmatprep.subr.bf16.mxu0 %v1490
    %1973 = vmatpush1.bf16.msra.mxu0 %v1489
    %1974 = vmatprep.subr.bf16.mxu0 %v1494
    %1975 = vmatpush1.bf16.msra.mxu0 %v1493
    %1976 = vmatprep.subr.bf16.mxu0 %v1498
    %1977 = vmatpush1.bf16.msra.mxu0 %v1497
    %1978 = vmatprep.subr.bf16.mxu0 %v1502
    %1979 = vmatpush1.bf16.msra.mxu0 %v1501
    %1980 = vmatprep.subr.bf16.mxu0 %v1506
    %1981 = vmatpush1.bf16.msra.mxu0 %v1505
    %1982 = vmatprep.subr.bf16.mxu0 %v1510
    %1983 = vmatpush1.bf16.msra.mxu0 %v1509
    %1984 = vmatprep.subr.bf16.mxu0 %v1514
    %1985 = vmatpush1.bf16.msra.mxu0 %v1513
    %1986 = vmatprep.subr.bf16.mxu0 %v1518
    %1987 = vmatpush1.bf16.msra.mxu0 %v1517
    %1988 = vmatprep.subr.bf16.mxu0 %v1522
    %1989 = vmatpush1.bf16.msra.mxu0 %v1521
    %1990 = vmatprep.subr.bf16.mxu0 %v1526
    %1991 = vmatpush1.bf16.msra.mxu0 %v1525
    %1992 = vmatprep.subr.bf16.mxu0 %v1530
    %1993 = vmatpush1.bf16.msra.mxu0 %v1529
    %1994 = vmatprep.subr.bf16.mxu0 %v1534
    %1995 = vmatpush1.bf16.msra.mxu0 %v1533
    %1996 = vmatprep.subr.bf16.mxu0 %v1538
    %1997 = vmatpush1.bf16.msra.mxu0 %v1537
    %1998 = vmatprep.mubr.bf16.mxu0 %v362
    %1999 = vmatmul.mubr.bf16.gmra.mrb[0].mxu0 %v361
    %v2000 = vpop.f32.mrb[0].mxu0
    %v2001 = vadd.f32 %v1960, %v2000
    %v2002 = vpop.f32.mrb[0].mxu0
    %v2003 = vadd.f32 %v1962, %v2002
    %v2004 = vpop.f32.mrb[0].mxu0
    %v2005 = vpop.f32.mrb[0].mxu0
    %2006 = vdwg.mxu0
    %2007 = vmatprep.subr.bf16.mxu0 %v1542
    %2008 = vmatpush1.bf16.msra.mxu0 %v1541
    %2009 = vmatprep.subr.bf16.mxu0 %v1546
    %2010 = vmatpush1.bf16.msra.mxu0 %v1545
    %2011 = vmatprep.subr.bf16.mxu0 %v1550
    %2012 = vmatpush1.bf16.msra.mxu0 %v1549
    %2013 = vmatprep.subr.bf16.mxu0 %v1554
    %2014 = vmatpush1.bf16.msra.mxu0 %v1553
    %2015 = vmatprep.subr.bf16.mxu0 %v1558
    %2016 = vmatpush1.bf16.msra.mxu0 %v1557
    %2017 = vmatprep.subr.bf16.mxu0 %v1562
    %2018 = vmatpush1.bf16.msra.mxu0 %v1561
    %2019 = vmatprep.subr.bf16.mxu0 %v1566
    %2020 = vmatpush1.bf16.msra.mxu0 %v1565
    %2021 = vmatprep.subr.bf16.mxu0 %v1570
    %2022 = vmatpush1.bf16.msra.mxu0 %v1569
    %2023 = vmatprep.subr.bf16.mxu0 %v1574
    %2024 = vmatpush1.bf16.msra.mxu0 %v1573
    %2025 = vmatprep.subr.bf16.mxu0 %v1578
    %2026 = vmatpush1.bf16.msra.mxu0 %v1577
    %2027 = vmatprep.subr.bf16.mxu0 %v1582
    %2028 = vmatpush1.bf16.msra.mxu0 %v1581
    %2029 = vmatprep.subr.bf16.mxu0 %v1586
    %2030 = vmatpush1.bf16.msra.mxu0 %v1585
    %2031 = vmatprep.subr.bf16.mxu0 %v1590
    %2032 = vmatpush1.bf16.msra.mxu0 %v1589
    %2033 = vmatprep.subr.bf16.mxu0 %v1594
    %2034 = vmatpush1.bf16.msra.mxu0 %v1593
    %2035 = vmatprep.subr.bf16.mxu0 %v1598
    %2036 = vmatpush1.bf16.msra.mxu0 %v1597
    %2037 = vmatprep.subr.bf16.mxu0 %v1602
    %2038 = vmatpush1.bf16.msra.mxu0 %v1601
    %2039 = vmatprep.mubr.bf16.mxu0 %v364
    %2040 = vmatmul.mubr.bf16.gmra.mrb[0].mxu0 %v363
    %v2041 = vpop.f32.mrb[0].mxu0
    %v2042 = vadd.f32 %v2001, %v2041
    %v2043 = vpop.f32.mrb[0].mxu0
    %v2044 = vadd.f32 %v2003, %v2043
    %v2045 = vpop.f32.mrb[0].mxu0
    %v2046 = vpop.f32.mrb[0].mxu0
    %2047 = vdwg.mxu0
    %2048 = vmatprep.subr.bf16.mxu0 %v1606
    %2049 = vmatpush1.bf16.msra.mxu0 %v1605
    %2050 = vmatprep.subr.bf16.mxu0 %v1610
    %2051 = vmatpush1.bf16.msra.mxu0 %v1609
    %2052 = vmatprep.subr.bf16.mxu0 %v1614
    %2053 = vmatpush1.bf16.msra.mxu0 %v1613
    %2054 = vmatprep.subr.bf16.mxu0 %v1618
    %2055 = vmatpush1.bf16.msra.mxu0 %v1617
    %2056 = vmatprep.subr.bf16.mxu0 %v1622
    %2057 = vmatpush1.bf16.msra.mxu0 %v1621
    %2058 = vmatprep.subr.bf16.mxu0 %v1626
    %2059 = vmatpush1.bf16.msra.mxu0 %v1625
    %2060 = vmatprep.subr.bf16.mxu0 %v1630
    %2061 = vmatpush1.bf16.msra.mxu0 %v1629
    %2062 = vmatprep.subr.bf16.mxu0 %v1634
    %2063 = vmatpush1.bf16.msra.mxu0 %v1633
    %2064 = vmatprep.subr.bf16.mxu0 %v1638
    %2065 = vmatpush1.bf16.msra.mxu0 %v1637
    %2066 = vmatprep.subr.bf16.mxu0 %v1642
    %2067 = vmatpush1.bf16.msra.mxu0 %v1641
    %2068 = vmatprep.subr.bf16.mxu0 %v1646
    %2069 = vmatpush1.bf16.msra.mxu0 %v1645
    %2070 = vmatprep.subr.bf16.mxu0 %v1650
    %2071 = vmatpush1.bf16.msra.mxu0 %v1649
    %2072 = vmatprep.subr.bf16.mxu0 %v1654
    %2073 = vmatpush1.bf16.msra.mxu0 %v1653
    %2074 = vmatprep.subr.bf16.mxu0 %v1658
    %2075 = vmatpush1.bf16.msra.mxu0 %v1657
    %2076 = vmatprep.subr.bf16.mxu0 %v1662
    %2077 = vmatpush1.bf16.msra.mxu0 %v1661
    %2078 = vmatprep.subr.bf16.mxu0 %v1666
    %2079 = vmatpush1.bf16.msra.mxu0 %v1665
    %2080 = vmatprep.mubr.bf16.mxu0 %v366
    %2081 = vmatmul.mubr.bf16.gmra.mrb[0].mxu0 %v365
    %v2082 = vpop.f32.mrb[0].mxu0
    %v2083 = vadd.f32 %v2042, %v2082
    %v2084 = vpop.f32.mrb[0].mxu0
    %v2085 = vadd.f32 %v2044, %v2084
    %v2086 = vpop.f32.mrb[0].mxu0
    %v2087 = vpop.f32.mrb[0].mxu0
    %2088 = vdwg.mxu0
    %2089 = vmatprep.subr.bf16.mxu0 %v1416
    %2090 = vmatpush1.bf16.msra.mxu0 %v1415
    %2091 = vmatprep.subr.bf16.mxu0 %v1420
    %2092 = vmatpush1.bf16.msra.mxu0 %v1419
    %2093 = vmatprep.subr.bf16.mxu0 %v1424
    %2094 = vmatpush1.bf16.msra.mxu0 %v1423
    %2095 = vmatprep.subr.bf16.mxu0 %v1428
    %2096 = vmatpush1.bf16.msra.mxu0 %v1427
    %2097 = vmatprep.subr.bf16.mxu0 %v1432
    %2098 = vmatpush1.bf16.msra.mxu0 %v1431
    %2099 = vmatprep.subr.bf16.mxu0 %v1436
    %2100 = vmatpush1.bf16.msra.mxu0 %v1435
    %2101 = vmatprep.subr.bf16.mxu0 %v1440
    %2102 = vmatpush1.bf16.msra.mxu0 %v1439
    %2103 = vmatprep.subr.bf16.mxu0 %v1444
    %2104 = vmatpush1.bf16.msra.mxu0 %v1443
    %2105 = vmatprep.subr.bf16.mxu0 %v1448
    %2106 = vmatpush1.bf16.msra.mxu0 %v1447
    %2107 = vmatprep.subr.bf16.mxu0 %v1452
    %2108 = vmatpush1.bf16.msra.mxu0 %v1451
    %2109 = vmatprep.subr.bf16.mxu0 %v1456
    %2110 = vmatpush1.bf16.msra.mxu0 %v1455
    %2111 = vmatprep.subr.bf16.mxu0 %v1460
    %2112 = vmatpush1.bf16.msra.mxu0 %v1459
    %2113 = vmatprep.subr.bf16.mxu0 %v1464
    %2114 = vmatpush1.bf16.msra.mxu0 %v1463
    %2115 = vmatprep.subr.bf16.mxu0 %v1468
    %2116 = vmatpush1.bf16.msra.mxu0 %v1467
    %2117 = vmatprep.subr.bf16.mxu0 %v1472
    %2118 = vmatpush1.bf16.msra.mxu0 %v1471
    %2119 = vmatprep.subr.bf16.mxu0 %v1476
    %2120 = vmatpush1.bf16.msra.mxu0 %v1475
    %2121 = vmatprep.mubr.bf16.mxu0 %v360
    %2122 = vmatmul.mubr.bf16.gmra.mrb[0].mxu0 %v359
    %v2123 = vpop.f32.mrb[0].mxu0
    %v2124 = vadd.f32 %v636, %v2123
    %v2125 = vpop.f32.mrb[0].mxu0
    %v2126 = vadd.f32 %v640, %v2125
    %v2127 = vpop.f32.mrb[0].mxu0
    %v2128 = vpop.f32.mrb[0].mxu0
    %2129 = vdwg.mxu0
    %2130 = vmatprep.subr.bf16.mxu0 %v1480
    %2131 = vmatpush1.bf16.msra.mxu0 %v1479
    %2132 = vmatprep.subr.bf16.mxu0 %v1484
    %2133 = vmatpush1.bf16.msra.mxu0 %v1483
    %2134 = vmatprep.subr.bf16.mxu0 %v1488
    %2135 = vmatpush1.bf16.msra.mxu0 %v1487
    %2136 = vmatprep.subr.bf16.mxu0 %v1492
    %2137 = vmatpush1.bf16.msra.mxu0 %v1491
    %2138 = vmatprep.subr.bf16.mxu0 %v1496
    %2139 = vmatpush1.bf16.msra.mxu0 %v1495
    %2140 = vmatprep.subr.bf16.mxu0 %v1500
    %2141 = vmatpush1.bf16.msra.mxu0 %v1499
    %2142 = vmatprep.subr.bf16.mxu0 %v1504
    %2143 = vmatpush1.bf16.msra.mxu0 %v1503
    %2144 = vmatprep.subr.bf16.mxu0 %v1508
    %2145 = vmatpush1.bf16.msra.mxu0 %v1507
    %2146 = vmatprep.subr.bf16.mxu0 %v1512
    %2147 = vmatpush1.bf16.msra.mxu0 %v1511
    %2148 = vmatprep.subr.bf16.mxu0 %v1516
    %2149 = vmatpush1.bf16.msra.mxu0 %v1515
    %2150 = vmatprep.subr.bf16.mxu0 %v1520
    %2151 = vmatpush1.bf16.msra.mxu0 %v1519
    %2152 = vmatprep.subr.bf16.mxu0 %v1524
    %2153 = vmatpush1.bf16.msra.mxu0 %v1523
    %2154 = vmatprep.subr.bf16.mxu0 %v1528
    %2155 = vmatpush1.bf16.msra.mxu0 %v1527
    %2156 = vmatprep.subr.bf16.mxu0 %v1532
    %2157 = vmatpush1.bf16.msra.mxu0 %v1531
    %2158 = vmatprep.subr.bf16.mxu0 %v1536
    %2159 = vmatpush1.bf16.msra.mxu0 %v1535
    %2160 = vmatprep.subr.bf16.mxu0 %v1540
    %2161 = vmatpush1.bf16.msra.mxu0 %v1539
    %2162 = vmatprep.mubr.bf16.mxu0 %v362
    %2163 = vmatmul.mubr.bf16.gmra.mrb[0].mxu0 %v361
    %v2164 = vpop.f32.mrb[0].mxu0
    %v2165 = vadd.f32 %v2124, %v2164
    %v2166 = vpop.f32.mrb[0].mxu0
    %v2167 = vadd.f32 %v2126, %v2166
    %v2168 = vpop.f32.mrb[0].mxu0
    %v2169 = vpop.f32.mrb[0].mxu0
    %2170 = vdwg.mxu0
    %2171 = vmatprep.subr.bf16.mxu0 %v1544
    %2172 = vmatpush1.bf16.msra.mxu0 %v1543
    %2173 = vmatprep.subr.bf16.mxu0 %v1548
    %2174 = vmatpush1.bf16.msra.mxu0 %v1547
    %2175 = vmatprep.subr.bf16.mxu0 %v1552
    %2176 = vmatpush1.bf16.msra.mxu0 %v1551
    %2177 = vmatprep.subr.bf16.mxu0 %v1556
    %2178 = vmatpush1.bf16.msra.mxu0 %v1555
    %2179 = vmatprep.subr.bf16.mxu0 %v1560
    %2180 = vmatpush1.bf16.msra.mxu0 %v1559
    %2181 = vmatprep.subr.bf16.mxu0 %v1564
    %2182 = vmatpush1.bf16.msra.mxu0 %v1563
    %2183 = vmatprep.subr.bf16.mxu0 %v1568
    %2184 = vmatpush1.bf16.msra.mxu0 %v1567
    %2185 = vmatprep.subr.bf16.mxu0 %v1572
    %2186 = vmatpush1.bf16.msra.mxu0 %v1571
    %2187 = vmatprep.subr.bf16.mxu0 %v1576
    %2188 = vmatpush1.bf16.msra.mxu0 %v1575
    %2189 = vmatprep.subr.bf16.mxu0 %v1580
    %2190 = vmatpush1.bf16.msra.mxu0 %v1579
    %2191 = vmatprep.subr.bf16.mxu0 %v1584
    %2192 = vmatpush1.bf16.msra.mxu0 %v1583
    %2193 = vmatprep.subr.bf16.mxu0 %v1588
    %2194 = vmatpush1.bf16.msra.mxu0 %v1587
    %2195 = vmatprep.subr.bf16.mxu0 %v1592
    %2196 = vmatpush1.bf16.msra.mxu0 %v1591
    %2197 = vmatprep.subr.bf16.mxu0 %v1596
    %2198 = vmatpush1.bf16.msra.mxu0 %v1595
    %2199 = vmatprep.subr.bf16.mxu0 %v1600
    %2200 = vmatpush1.bf16.msra.mxu0 %v1599
    %2201 = vmatprep.subr.bf16.mxu0 %v1604
    %2202 = vmatpush1.bf16.msra.mxu0 %v1603
    %2203 = vmatprep.mubr.bf16.mxu0 %v364
    %2204 = vmatmul.mubr.bf16.gmra.mrb[0].mxu0 %v363
    %v2205 = vpop.f32.mrb[0].mxu0
    %v2206 = vadd.f32 %v2165, %v2205
    %v2207 = vpop.f32.mrb[0].mxu0
    %v2208 = vadd.f32 %v2167, %v2207
    %v2209 = vpop.f32.mrb[0].mxu0
    %v2210 = vpop.f32.mrb[0].mxu0
    %2211 = vdwg.mxu0
    %2212 = vmatprep.subr.bf16.mxu0 %v1608
    %2213 = vmatpush1.bf16.msra.mxu0 %v1607
    %2214 = vmatprep.subr.bf16.mxu0 %v1612
    %2215 = vmatpush1.bf16.msra.mxu0 %v1611
    %2216 = vmatprep.subr.bf16.mxu0 %v1616
    %2217 = vmatpush1.bf16.msra.mxu0 %v1615
    %2218 = vmatprep.subr.bf16.mxu0 %v1620
    %2219 = vmatpush1.bf16.msra.mxu0 %v1619
    %2220 = vmatprep.subr.bf16.mxu0 %v1624
    %2221 = vmatpush1.bf16.msra.mxu0 %v1623
    %2222 = vmatprep.subr.bf16.mxu0 %v1628
    %2223 = vmatpush1.bf16.msra.mxu0 %v1627
    %2224 = vmatprep.subr.bf16.mxu0 %v1632
    %2225 = vmatpush1.bf16.msra.mxu0 %v1631
    %2226 = vmatprep.subr.bf16.mxu0 %v1636
    %2227 = vmatpush1.bf16.msra.mxu0 %v1635
    %2228 = vmatprep.subr.bf16.mxu0 %v1640
    %2229 = vmatpush1.bf16.msra.mxu0 %v1639
    %2230 = vmatprep.subr.bf16.mxu0 %v1644
    %2231 = vmatpush1.bf16.msra.mxu0 %v1643
    %2232 = vmatprep.subr.bf16.mxu0 %v1648
    %2233 = vmatpush1.bf16.msra.mxu0 %v1647
    %2234 = vmatprep.subr.bf16.mxu0 %v1652
    %2235 = vmatpush1.bf16.msra.mxu0 %v1651
    %2236 = vmatprep.subr.bf16.mxu0 %v1656
    %2237 = vmatpush1.bf16.msra.mxu0 %v1655
    %2238 = vmatprep.subr.bf16.mxu0 %v1660
    %2239 = vmatpush1.bf16.msra.mxu0 %v1659
    %2240 = vmatprep.subr.bf16.mxu0 %v1664
    %2241 = vmatpush1.bf16.msra.mxu0 %v1663
    %2242 = vmatprep.subr.bf16.mxu0 %v1668
    %2243 = vmatpush1.bf16.msra.mxu0 %v1667
    %2244 = vmatprep.mubr.bf16.mxu0 %v366
    %2245 = vmatmul.mubr.bf16.gmra.mrb[0].mxu0 %v365
    %v2246 = vpop.f32.mrb[0].mxu0
    %v2247 = vadd.f32 %v2206, %v2246
    %v2248 = vpop.f32.mrb[0].mxu0
    %v2249 = vadd.f32 %v2208, %v2248
    %v2250 = vpop.f32.mrb[0].mxu0
    %v2251 = vpop.f32.mrb[0].mxu0
    %2252 = vdwg.mxu0
    %v2253 = vmax.f32 %v2083, 0.0
    %v2254 = vmax.f32 %v2085, 0.0
    %v2255 = vmax.f32 %v2247, 0.0
    %v2256 = vmax.f32 %v2249, 0.0
    %v2257 = vpack.c.bf16 %v2253, %v2253
    %v2258 = vpack.c.bf16 %v2254, %v2254
    %v2259 = vpack.c.bf16 %v2255, %v2255
    %v2260 = vpack.c.bf16 %v2256, %v2256
    %v2261 = vld [vmem:[#allocation10] sm:$0xf]
    %v2262 = vld [vmem:[#allocation10 + $0x4] sm:$0xf]
    %v2263 = vld [vmem:[#allocation10 + $0x8] sm:$0xf]
    %v2264 = vld [vmem:[#allocation10 + $0xc] sm:$0xf]
    %v2265 = vld [vmem:[#allocation10 + $0x10] sm:$0xf]
    %v2266 = vld [vmem:[#allocation10 + $0x14] sm:$0xf]
    %v2267 = vld [vmem:[#allocation10 + $0x18] sm:$0xf]
    %v2268 = vld [vmem:[#allocation10 + $0x1c] sm:$0xf]
    %v2269 = vld [vmem:[#allocation10 + $0x20] sm:$0xf]
    %v2270 = vld [vmem:[#allocation10 + $0x24] sm:$0xf]
    %v2271 = vld [vmem:[#allocation10 + $0x28] sm:$0xf]
    %v2272 = vld [vmem:[#allocation10 + $0x2c] sm:$0xf]
    %v2273 = vld [vmem:[#allocation10 + $0x30] sm:$0xf]
    %v2274 = vld [vmem:[#allocation10 + $0x34] sm:$0xf]
    %v2275 = vld [vmem:[#allocation10 + $0x38] sm:$0xf]
    %v2276 = vld [vmem:[#allocation10 + $0x3c] sm:$0xf]
    %v2277 = vld [vmem:[#allocation10 + $0x40] sm:$0xf]
    %v2278 = vld [vmem:[#allocation10 + $0x44] sm:$0xf]
    %v2279 = vld [vmem:[#allocation10 + $0x48] sm:$0xf]
    %v2280 = vld [vmem:[#allocation10 + $0x4c] sm:$0xf]
    %v2281 = vld [vmem:[#allocation10 + $0x50] sm:$0xf]
    %v2282 = vld [vmem:[#allocation10 + $0x54] sm:$0xf]
    %v2283 = vld [vmem:[#allocation10 + $0x58] sm:$0xf]
    %v2284 = vld [vmem:[#allocation10 + $0x5c] sm:$0xf]
    %v2285 = vld [vmem:[#allocation10 + $0x60] sm:$0xf]
    %v2286 = vld [vmem:[#allocation10 + $0x64] sm:$0xf]
    %v2287 = vld [vmem:[#allocation10 + $0x68] sm:$0xf]
    %v2288 = vld [vmem:[#allocation10 + $0x6c] sm:$0xf]
    %v2289 = vld [vmem:[#allocation10 + $0x70] sm:$0xf]
    %v2290 = vld [vmem:[#allocation10 + $0x74] sm:$0xf]
    %v2291 = vld [vmem:[#allocation10 + $0x78] sm:$0xf]
    %v2292 = vld [vmem:[#allocation10 + $0x7c] sm:$0xf]
    %v2293 = vld [vmem:[#allocation10 + $0x80] sm:$0xf]
    %v2294 = vld [vmem:[#allocation10 + $0x84] sm:$0xf]
    %v2295 = vld [vmem:[#allocation10 + $0x88] sm:$0xf]
    %v2296 = vld [vmem:[#allocation10 + $0x8c] sm:$0xf]
    %v2297 = vld [vmem:[#allocation10 + $0x90] sm:$0xf]
    %v2298 = vld [vmem:[#allocation10 + $0x94] sm:$0xf]
    %v2299 = vld [vmem:[#allocation10 + $0x98] sm:$0xf]
    %v2300 = vld [vmem:[#allocation10 + $0x9c] sm:$0xf]
    %v2301 = vld [vmem:[#allocation10 + $0xa0] sm:$0xf]
    %v2302 = vld [vmem:[#allocation10 + $0xa4] sm:$0xf]
    %v2303 = vld [vmem:[#allocation10 + $0xa8] sm:$0xf]
    %v2304 = vld [vmem:[#allocation10 + $0xac] sm:$0xf]
    %v2305 = vld [vmem:[#allocation10 + $0xb0] sm:$0xf]
    %v2306 = vld [vmem:[#allocation10 + $0xb4] sm:$0xf]
    %v2307 = vld [vmem:[#allocation10 + $0xb8] sm:$0xf]
    %v2308 = vld [vmem:[#allocation10 + $0xbc] sm:$0xf]
    %v2309 = vld [vmem:[#allocation10 + $0xc0] sm:$0xf]
    %v2310 = vld [vmem:[#allocation10 + $0xc4] sm:$0xf]
    %v2311 = vld [vmem:[#allocation10 + $0xc8] sm:$0xf]
    %v2312 = vld [vmem:[#allocation10 + $0xcc] sm:$0xf]
    %v2313 = vld [vmem:[#allocation10 + $0xd0] sm:$0xf]
    %v2314 = vld [vmem:[#allocation10 + $0xd4] sm:$0xf]
    %v2315 = vld [vmem:[#allocation10 + $0xd8] sm:$0xf]
    %v2316 = vld [vmem:[#allocation10 + $0xdc] sm:$0xf]
    %v2317 = vld [vmem:[#allocation10 + $0xe0] sm:$0xf]
    %v2318 = vld [vmem:[#allocation10 + $0xe4] sm:$0xf]
    %v2319 = vld [vmem:[#allocation10 + $0xe8] sm:$0xf]
    %v2320 = vld [vmem:[#allocation10 + $0xec] sm:$0xf]
    %v2321 = vld [vmem:[#allocation10 + $0xf0] sm:$0xf]
    %v2322 = vld [vmem:[#allocation10 + $0xf4] sm:$0xf]
    %v2323 = vld [vmem:[#allocation10 + $0xf8] sm:$0xf]
    %v2324 = vld [vmem:[#allocation10 + $0xfc] sm:$0xf]
    %v2325 = vld [vmem:[%s6] sm:$0x1]
    %v2327 = vlaneseq
    %v2328 = vshrl.u32 %v2327, 7
    %v2329 = vsub.s32 0, %v2328
    %v2330 = vrot.slane %v2325, %v2329
    %v2396 = vunpack.c.l.b16 %v2261
    %v2397 = vunpack.c.l.b16 %v2262
    %v2398 = vunpack.c.l.b16 %v2263
    %v2399 = vunpack.c.l.b16 %v2264
    %v2400 = vunpack.c.l.b16 %v2265
    %v2401 = vunpack.c.l.b16 %v2266
    %v2402 = vunpack.c.l.b16 %v2267
    %v2403 = vunpack.c.l.b16 %v2268
    %v2404 = vunpack.c.l.b16 %v2269
    %v2405 = vunpack.c.l.b16 %v2270
    %v2406 = vunpack.c.l.b16 %v2271
    %v2407 = vunpack.c.l.b16 %v2272
    %v2408 = vunpack.c.l.b16 %v2273
    %v2409 = vunpack.c.l.b16 %v2274
    %v2410 = vunpack.c.l.b16 %v2275
    %v2411 = vunpack.c.l.b16 %v2276
    %v2412 = vunpack.c.l.b16 %v2277
    %v2413 = vunpack.c.l.b16 %v2278
    %v2414 = vunpack.c.l.b16 %v2279
    %v2415 = vunpack.c.l.b16 %v2280
    %v2416 = vunpack.c.l.b16 %v2281
    %v2417 = vunpack.c.l.b16 %v2282
    %v2418 = vunpack.c.l.b16 %v2283
    %v2419 = vunpack.c.l.b16 %v2284
    %v2420 = vunpack.c.l.b16 %v2285
    %v2421 = vunpack.c.l.b16 %v2286
    %v2422 = vunpack.c.l.b16 %v2287
    %v2423 = vunpack.c.l.b16 %v2288
    %v2424 = vunpack.c.l.b16 %v2289
    %v2425 = vunpack.c.l.b16 %v2290
    %v2426 = vunpack.c.l.b16 %v2291
    %v2427 = vunpack.c.l.b16 %v2292
    %v2428 = vunpack.c.l.b16 %v2293
    %v2429 = vunpack.c.l.b16 %v2294
    %v2430 = vunpack.c.l.b16 %v2295
    %v2431 = vunpack.c.l.b16 %v2296
    %v2432 = vunpack.c.l.b16 %v2297
    %v2433 = vunpack.c.l.b16 %v2298
    %v2434 = vunpack.c.l.b16 %v2299
    %v2435 = vunpack.c.l.b16 %v2300
    %v2436 = vunpack.c.l.b16 %v2301
    %v2437 = vunpack.c.l.b16 %v2302
    %v2438 = vunpack.c.l.b16 %v2303
    %v2439 = vunpack.c.l.b16 %v2304
    %v2440 = vunpack.c.l.b16 %v2305
    %v2441 = vunpack.c.l.b16 %v2306
    %v2442 = vunpack.c.l.b16 %v2307
    %v2443 = vunpack.c.l.b16 %v2308
    %v2444 = vunpack.c.l.b16 %v2309
    %v2445 = vunpack.c.l.b16 %v2310
    %v2446 = vunpack.c.l.b16 %v2311
    %v2447 = vunpack.c.l.b16 %v2312
    %v2448 = vunpack.c.l.b16 %v2313
    %v2449 = vunpack.c.l.b16 %v2314
    %v2450 = vunpack.c.l.b16 %v2315
    %v2451 = vunpack.c.l.b16 %v2316
    %v2452 = vunpack.c.l.b16 %v2317
    %v2453 = vunpack.c.l.b16 %v2318
    %v2454 = vunpack.c.l.b16 %v2319
    %v2455 = vunpack.c.l.b16 %v2320
    %v2456 = vunpack.c.l.b16 %v2321
    %v2457 = vunpack.c.l.b16 %v2322
    %v2458 = vunpack.c.l.b16 %v2323
    %v2459 = vunpack.c.l.b16 %v2324
    %v2460 = vpack.c.b16 %v2397, %v2396
    %v2461 = vpack.c.b16 %v2399, %v2398
    %v2462 = vpack.c.b16 %v2401, %v2400
    %v2463 = vpack.c.b16 %v2403, %v2402
    %v2464 = vpack.c.b16 %v2405, %v2404
    %v2465 = vpack.c.b16 %v2407, %v2406
    %v2466 = vpack.c.b16 %v2409, %v2408
    %v2467 = vpack.c.b16 %v2411, %v2410
    %v2468 = vpack.c.b16 %v2413, %v2412
    %v2469 = vpack.c.b16 %v2415, %v2414
    %v2470 = vpack.c.b16 %v2417, %v2416
    %v2471 = vpack.c.b16 %v2419, %v2418
    %v2472 = vpack.c.b16 %v2421, %v2420
    %v2473 = vpack.c.b16 %v2423, %v2422
    %v2474 = vpack.c.b16 %v2425, %v2424
    %v2475 = vpack.c.b16 %v2427, %v2426
    %v2476 = vpack.c.b16 %v2429, %v2428
    %v2477 = vpack.c.b16 %v2431, %v2430
    %v2478 = vpack.c.b16 %v2433, %v2432
    %v2479 = vpack.c.b16 %v2435, %v2434
    %v2480 = vpack.c.b16 %v2437, %v2436
    %v2481 = vpack.c.b16 %v2439, %v2438
    %v2482 = vpack.c.b16 %v2441, %v2440
    %v2483 = vpack.c.b16 %v2443, %v2442
    %v2484 = vpack.c.b16 %v2445, %v2444
    %v2485 = vpack.c.b16 %v2447, %v2446
    %v2486 = vpack.c.b16 %v2449, %v2448
    %v2487 = vpack.c.b16 %v2451, %v2450
    %v2488 = vpack.c.b16 %v2453, %v2452
    %v2489 = vpack.c.b16 %v2455, %v2454
    %v2490 = vpack.c.b16 %v2457, %v2456
    %v2491 = vpack.c.b16 %v2459, %v2458
    %2524 = vmatprep.subr.bf16.mxu0 0
    %2525 = vmatpush1.bf16.msra.mxu0 %v2460
    %2526 = vmatprep.subr.bf16.mxu0 0
    %2527 = vmatpush1.bf16.msra.mxu0 %v2461
    %2528 = vmatprep.subr.bf16.mxu0 0
    %2529 = vmatpush1.bf16.msra.mxu0 %v2462
    %2530 = vmatprep.subr.bf16.mxu0 0
    %2531 = vmatpush1.bf16.msra.mxu0 %v2463
    %2532 = vmatprep.subr.bf16.mxu0 0
    %2533 = vmatpush1.bf16.msra.mxu0 %v2464
    %2534 = vmatprep.subr.bf16.mxu0 0
    %2535 = vmatpush1.bf16.msra.mxu0 %v2465
    %2536 = vmatprep.subr.bf16.mxu0 0
    %2537 = vmatpush1.bf16.msra.mxu0 %v2466
    %2538 = vmatprep.subr.bf16.mxu0 0
    %2539 = vmatpush1.bf16.msra.mxu0 %v2467
    %2540 = vmatprep.subr.bf16.mxu0 0
    %2541 = vmatpush1.bf16.msra.mxu0 %v2468
    %2542 = vmatprep.subr.bf16.mxu0 0
    %2543 = vmatpush1.bf16.msra.mxu0 %v2469
    %2544 = vmatprep.subr.bf16.mxu0 0
    %2545 = vmatpush1.bf16.msra.mxu0 %v2470
    %2546 = vmatprep.subr.bf16.mxu0 0
    %2547 = vmatpush1.bf16.msra.mxu0 %v2471
    %2548 = vmatprep.subr.bf16.mxu0 0
    %2549 = vmatpush1.bf16.msra.mxu0 %v2472
    %2550 = vmatprep.subr.bf16.mxu0 0
    %2551 = vmatpush1.bf16.msra.mxu0 %v2473
    %2552 = vmatprep.subr.bf16.mxu0 0
    %2553 = vmatpush1.bf16.msra.mxu0 %v2474
    %2554 = vmatprep.subr.bf16.mxu0 0
    %2555 = vmatpush1.bf16.msra.mxu0 %v2475
    %2556 = vmatprep.mubr.bf16.mxu0 %v2258
    %2557 = vmatmul.mubr.bf16.gmra.mrb[0].mxu0 %v2257
    %v2558 = vpop.f32.mrb[0].mxu0
    %v2559 = vadd.f32 %v2330, %v2558
    %v2560 = vpop.f32.mrb[0].mxu0
    %v2561 = vpop.f32.mrb[0].mxu0
    %v2562 = vpop.f32.mrb[0].mxu0
    %2563 = vdwg.mxu0
    %2564 = vmatprep.subr.bf16.mxu0 0
    %2565 = vmatpush1.bf16.msra.mxu0 %v2476
    %2566 = vmatprep.subr.bf16.mxu0 0
    %2567 = vmatpush1.bf16.msra.mxu0 %v2477
    %2568 = vmatprep.subr.bf16.mxu0 0
    %2569 = vmatpush1.bf16.msra.mxu0 %v2478
    %2570 = vmatprep.subr.bf16.mxu0 0
    %2571 = vmatpush1.bf16.msra.mxu0 %v2479
    %2572 = vmatprep.subr.bf16.mxu0 0
    %2573 = vmatpush1.bf16.msra.mxu0 %v2480
    %2574 = vmatprep.subr.bf16.mxu0 0
    %2575 = vmatpush1.bf16.msra.mxu0 %v2481
    %2576 = vmatprep.subr.bf16.mxu0 0
    %2577 = vmatpush1.bf16.msra.mxu0 %v2482
    %2578 = vmatprep.subr.bf16.mxu0 0
    %2579 = vmatpush1.bf16.msra.mxu0 %v2483
    %2580 = vmatprep.subr.bf16.mxu0 0
    %2581 = vmatpush1.bf16.msra.mxu0 %v2484
    %2582 = vmatprep.subr.bf16.mxu0 0
    %2583 = vmatpush1.bf16.msra.mxu0 %v2485
    %2584 = vmatprep.subr.bf16.mxu0 0
    %2585 = vmatpush1.bf16.msra.mxu0 %v2486
    %2586 = vmatprep.subr.bf16.mxu0 0
    %2587 = vmatpush1.bf16.msra.mxu0 %v2487
    %2588 = vmatprep.subr.bf16.mxu0 0
    %2589 = vmatpush1.bf16.msra.mxu0 %v2488
    %2590 = vmatprep.subr.bf16.mxu0 0
    %2591 = vmatpush1.bf16.msra.mxu0 %v2489
    %2592 = vmatprep.subr.bf16.mxu0 0
    %2593 = vmatpush1.bf16.msra.mxu0 %v2490
    %2594 = vmatprep.subr.bf16.mxu0 0
    %2595 = vmatpush1.bf16.msra.mxu0 %v2491
    %2596 = vmatprep.mubr.bf16.mxu0 %v2260
    %2597 = vmatmul.mubr.bf16.gmra.mrb[0].mxu0 %v2259
    %v2598 = vpop.f32.mrb[0].mxu0
    %v2599 = vadd.f32 %v2559, %v2598
    %v2600 = vpop.f32.mrb[0].mxu0
    %v2601 = vpop.f32.mrb[0].mxu0
    %v2602 = vpop.f32.mrb[0].mxu0
    %2603 = vdwg.mxu0
    %2604 = vst [vmem:[#allocation11] sm:$0xff] %v2599
    // Predicated region
    $region50: #{tpu_custom_call.1} parent=1 // pred_check
      _
    $region51: #{tpu_custom_call.1} parent=1 // pred_check_branch
      %2606 = sbr.rel (0) target = $region53
    $region52: #{tpu_custom_call.1} parent=1 // pred_region
      %s2608 = ssub.s32 128, 128
      %2609 = vsyncadd [#allocation4], %s2608
      %s2611 = sshll.u32 [#allocation11], 4
      %s2612 = int_to_ptr.vmem [resolvable:$true] %s2611
      %2614 = dma.vmem_to_hbm [thread:$0]  %s2612, 128, %s7, [#allocation4]
    $region53: #{tpu_custom_call.1} parent=1 // pred_fallthru
      _
    // Predicated region
    $region54: #{tpu_custom_call.1} parent=1 // pred_check
      _
    $region55: #{tpu_custom_call.1} parent=1 // pred_check_branch
      %2616 = sbr.rel (0) target = $region57
    $region56: #{tpu_custom_call.1} parent=1 // pred_region
      %2617 = dma.done [#allocation4], 128
    $region57: #{tpu_custom_call.1} parent=1 // pred_fallthru
      _
    %2618 = vsyncpa [#allocation3], 1
    %2619 = vsyncpa [#allocation6], 1
    %2620 = vsyncpa [#allocation9], 1
    %2621 = vsyncpa [#allocation4], 1

// kernel: tpu_custom_call.1
$region0: #{tpu_custom_call.1}
  #allocation0 [shape = 'u32[]', space=smem, size = 0x4, offset = 0x4, fixed_abs, tag = 'smem constant byte address 0x4 - core index']
  #allocation1 [shape = 'u32[144,128]{1,0:T(1,128)}', space=vmem, size = 0x12000, scoped, tag = 'internal scratch']
  %s0 = inlined_call_operand.hbm [shape: f32[8,8], index: 0, kind: input, shape index: {}]
  %s1 = inlined_call_operand.hbm [shape: bf16[8,1024], index: 1, kind: input, shape index: {}]
  %s2 = inlined_call_operand.hbm [shape: f32[1,1024], index: 2, kind: input, shape index: {}]
  %s3 = inlined_call_operand.hbm [shape: bf16[1024,512], index: 3, kind: input, shape index: {}]
  %s4 = inlined_call_operand.vmem [shape: f32[1,512], index: 4, kind: input, shape index: {}]
  %s5 = inlined_call_operand.hbm [shape: bf16[512,128], index: 5, kind: input, shape index: {}]
  %s6 = inlined_call_operand.vmem [shape: f32[1,128], index: 6, kind: input, shape index: {}]
  %s7 = inlined_call_operand.hbm [shape: f32[8,128], index: 7, kind: output, shape index: {}]
  %s8 = sld [smem:[#allocation0]]
  $region58: #{tpu_custom_call.1} parent=0
    _
  %s10 = ssub.s32 1, %s8
  %s11 = scalar_select 0, %s10, %s8
  $region1: #{tpu_custom_call.1} parent=0
    #allocation2 [shape = 'u8[4096]{0}', space=vmem, size = 0x1000, scoped, tag = 'input window, operand 0, single buffered']
    #allocation3 [shape = 's32[1]{0}', space=sflag, size = 0x4, scoped, tag = 'scoped memory for tpu_custom_call.1']
    #allocation4 [shape = 's32[1]{0}', space=sflag, size = 0x4, scoped, tag = 'scoped memory for tpu_custom_call.1']
    #allocation5 [shape = 'u8[16384]{0}', space=vmem, size = 0x4000, scoped, tag = 'input window, operand 1, single buffered']
    #allocation6 [shape = 's32[1]{0}', space=sflag, size = 0x4, scoped, tag = 'scoped memory for tpu_custom_call.1']
    #allocation7 [shape = 'u8[4096]{0}', space=vmem, size = 0x1000, scoped, tag = 'input window, operand 2, single buffered']
    #allocation8 [shape = 'u8[1048576]{0}', space=vmem, size = 0x100000, scoped, tag = 'input window, operand 3, single buffered']
    #allocation9 [shape = 's32[1]{0}', space=sflag, size = 0x4, scoped, tag = 'scoped memory for tpu_custom_call.1']
    #allocation10 [shape = 'u8[131072]{0}', space=vmem, size = 0x20000, scoped, tag = 'input window, operand 5, single buffered']
    #allocation11 [shape = 'u8[4096]{0}', space=vmem, size = 0x1000, scoped, tag = 'output window, operand 0, single buffered']
    %12 = vsyncpa [#allocation3], 0
    %13 = vsyncpa [#allocation6], 0
    %14 = vsyncpa [#allocation9], 0
    %15 = vsyncpa [#allocation4], 0
    // Predicated region
    $region2: #{tpu_custom_call.1} parent=1 // pred_check
      _
    $region3: #{tpu_custom_call.1} parent=1 // pred_check_branch
      %17 = sbr.rel (0) target = $region5
    $region4: #{tpu_custom_call.1} parent=1 // pred_region
      %s19 = ssub.s32 128, 128
      %20 = vsyncadd [#allocation3], %s19
      %s22 = sshll.u32 [#allocation2], 4
      %s23 = int_to_ptr.vmem [resolvable:$true] %s22
      %25 = dma.hbm_to_vmem [thread:$0]  %s0, 128, %s23, [#allocation3]
    $region5: #{tpu_custom_call.1} parent=1 // pred_fallthru
      _
    // Predicated region
    $region6: #{tpu_custom_call.1} parent=1 // pred_check
      _
    $region7: #{tpu_custom_call.1} parent=1 // pred_check_branch
      %27 = sbr.rel (0) target = $region9
    $region8: #{tpu_custom_call.1} parent=1 // pred_region
      %s29 = ssub.s32 512, 512
      %30 = vsyncadd [#allocation6], %s29
      %s32 = sshll.u32 [#allocation5], 4
      %s33 = int_to_ptr.vmem [resolvable:$true] %s32
      %35 = dma.hbm_to_vmem [thread:$0]  %s1, 512, %s33, [#allocation6]
    $region9: #{tpu_custom_call.1} parent=1 // pred_fallthru
      _
    // Predicated region
    $region10: #{tpu_custom_call.1} parent=1 // pred_check
      _
    $region11: #{tpu_custom_call.1} parent=1 // pred_check_branch
      %37 = sbr.rel (0) target = $region13
    $region12: #{tpu_custom_call.1} parent=1 // pred_region
      %s39 = ssub.s32 128, 128
      %40 = vsyncadd [#allocation6], %s39
      %s42 = sshll.u32 [#allocation7], 4
      %s43 = int_to_ptr.vmem [resolvable:$true] %s42
      %45 = dma.hbm_to_vmem [thread:$0]  %s2, 128, %s43, [#allocation6]
    $region13: #{tpu_custom_call.1} parent=1 // pred_fallthru
      _
    // Predicated region
    $region14: #{tpu_custom_call.1} parent=1 // pred_check
      _
    $region15: #{tpu_custom_call.1} parent=1 // pred_check_branch
      %47 = sbr.rel (0) target = $region17
    $region16: #{tpu_custom_call.1} parent=1 // pred_region
      %s49 = ssub.s32 32768, 32768
      %50 = vsyncadd [#allocation9], %s49
      %s51 = sshll.u32 [#allocation8], 4
      %s52 = int_to_ptr.vmem [resolvable:$true] %s51
      %57 = dma.hbm_to_vmem [thread:$0]  %s3, 32768, %s52, [#allocation9], 256, 256, 16
    $region17: #{tpu_custom_call.1} parent=1 // pred_fallthru
      _
    // Predicated region
    $region18: #{tpu_custom_call.1} parent=1 // pred_check
      _
    $region19: #{tpu_custom_call.1} parent=1 // pred_check_branch
      %59 = sbr.rel (0) target = $region21
    $region20: #{tpu_custom_call.1} parent=1 // pred_region
      _
    $region21: #{tpu_custom_call.1} parent=1 // pred_fallthru
      _
    // Predicated region
    $region22: #{tpu_custom_call.1} parent=1 // pred_check
      _
    $region23: #{tpu_custom_call.1} parent=1 // pred_check_branch
      %61 = sbr.rel (0) target = $region25
    $region24: #{tpu_custom_call.1} parent=1 // pred_region
      %s63 = ssub.s32 4096, 4096
      %64 = vsyncadd [#allocation9], %s63
      %s65 = sshll.u32 [#allocation10], 4
      %s66 = int_to_ptr.vmem [resolvable:$true] %s65
      %71 = dma.hbm_to_vmem [thread:$0]  %s5, 4096, %s66, [#allocation9], 64, 64, 4
    $region25: #{tpu_custom_call.1} parent=1 // pred_fallthru
      _
    // Predicated region
    $region26: #{tpu_custom_call.1} parent=1 // pred_check
      _
    $region27: #{tpu_custom_call.1} parent=1 // pred_check_branch
      %73 = sbr.rel (0) target = $region29
    $region28: #{tpu_custom_call.1} parent=1 // pred_region
      _
    $region29: #{tpu_custom_call.1} parent=1 // pred_fallthru
      _
    // Predicated region
    $region30: #{tpu_custom_call.1} parent=1 // pred_check
      _
    $region31: #{tpu_custom_call.1} parent=1 // pred_check_branch
      %75 = sbr.rel (0) target = $region33
    $region32: #{tpu_custom_call.1} parent=1 // pred_region
      %76 = dma.done [#allocation3], 128
    $region33: #{tpu_custom_call.1} parent=1 // pred_fallthru
      _
    // Predicated region
    $region34: #{tpu_custom_call.1} parent=1 // pred_check
      _
    $region35: #{tpu_custom_call.1} parent=1 // pred_check_branch
      %78 = sbr.rel (0) target = $region37
    $region36: #{tpu_custom_call.1} parent=1 // pred_region
      %79 = dma.done [#allocation6], 512
    $region37: #{tpu_custom_call.1} parent=1 // pred_fallthru
      _
    // Predicated region
    $region38: #{tpu_custom_call.1} parent=1 // pred_check
      _
    $region39: #{tpu_custom_call.1} parent=1 // pred_check_branch
      %81 = sbr.rel (0) target = $region41
    $region40: #{tpu_custom_call.1} parent=1 // pred_region
      %82 = dma.done [#allocation6], 128
    $region41: #{tpu_custom_call.1} parent=1 // pred_fallthru
      _
    // Predicated region
    $region42: #{tpu_custom_call.1} parent=1 // pred_check
      _
    $region43: #{tpu_custom_call.1} parent=1 // pred_check_branch
      %84 = sbr.rel (0) target = $region45
    $region44: #{tpu_custom_call.1} parent=1 // pred_region
      %85 = dma.done [#allocation9], 32768
    $region45: #{tpu_custom_call.1} parent=1 // pred_fallthru
      _
    // Predicated region
    $region46: #{tpu_custom_call.1} parent=1 // pred_check
      _
    $region47: #{tpu_custom_call.1} parent=1 // pred_check_branch
      %87 = sbr.rel (0) target = $region49
    $region48: #{tpu_custom_call.1} parent=1 // pred_region
      %88 = dma.done [#allocation9], 4096
    $region49: #{tpu_custom_call.1} parent=1 // pred_fallthru
      _
    %v90 = vld [vmem:[#allocation2] sm:$0xff]
    %v91 = vpack.c.bf16 %v90, %v90
    %v92 = vld [vmem:[#allocation5] sm:$0xff]
    %v93 = vld [vmem:[#allocation5 + $0x8] sm:$0xff]
    %v94 = vld [vmem:[#allocation5 + $0x10] sm:$0xff]
    %v95 = vld [vmem:[#allocation5 + $0x18] sm:$0xff]
    %v96 = vld [vmem:[#allocation7] sm:$0xff]
    %v98 = vlaneseq
    %v99 = vshrl.u32 %v98, 7
    %v100 = vsub.s32 0, %v99
    %v101 = vrot.slane %v96, %v100
    %v102 = vlaneseq
    %v103 = vshrl.u32 %v102, 7
    %v104 = vsub.s32 1, %v103
    %v105 = vrot.slane %v96, %v104
    %v106 = vlaneseq
    %v107 = vshrl.u32 %v106, 7
    %v108 = vsub.s32 2, %v107
    %v109 = vrot.slane %v96, %v108
    %v110 = vlaneseq
    %v111 = vshrl.u32 %v110, 7
    %v112 = vsub.s32 3, %v111
    %v113 = vrot.slane %v96, %v112
    %v114 = vlaneseq
    %v115 = vshrl.u32 %v114, 7
    %v116 = vsub.s32 4, %v115
    %v117 = vrot.slane %v96, %v116
    %v118 = vlaneseq
    %v119 = vshrl.u32 %v118, 7
    %v120 = vsub.s32 5, %v119
    %v121 = vrot.slane %v96, %v120
    %v122 = vlaneseq
    %v123 = vshrl.u32 %v122, 7
    %v124 = vsub.s32 6, %v123
    %v125 = vrot.slane %v96, %v124
    %v126 = vlaneseq
    %v127 = vshrl.u32 %v126, 7
    %v128 = vsub.s32 7, %v127
    %v129 = vrot.slane %v96, %v128
    %v142 = vunpack.c.l.b16 %v92
    %v143 = vunpack.c.h.b16 %v92
    %v144 = vunpack.c.l.b16 %v93
    %v145 = vunpack.c.h.b16 %v93
    %v146 = vunpack.c.l.b16 %v94
    %v147 = vunpack.c.h.b16 %v94
    %v148 = vunpack.c.l.b16 %v95
    %v149 = vunpack.c.h.b16 %v95
    %v150 = vpack.c.b16 %v142, %v142
    %v151 = vpack.c.b16 %v143, %v143
    %v152 = vpack.c.b16 %v144, %v144
    %v153 = vpack.c.b16 %v145, %v145
    %v154 = vpack.c.b16 %v146, %v146
    %v155 = vpack.c.b16 %v147, %v147
    %v156 = vpack.c.b16 %v148, %v148
    %v157 = vpack.c.b16 %v149, %v149
    %vm158 = vcmask 64512
    %v160 = vsel %vm158, %v91, 0
    %vm162 = vcmask 1043456
    %v164 = vsel %vm162, %v150, 0
    %v167 = vsel %vm162, %v151, 0
    %v170 = vsel %vm162, %v152, 0
    %v173 = vsel %vm162, %v153, 0
    %v176 = vsel %vm162, %v154, 0
    %v179 = vsel %vm162, %v155, 0
    %v182 = vsel %vm162, %v156, 0
    %v185 = vsel %vm162, %v157, 0
    %187 = vmatprep.subr.bf16.mxu0 %v167
    %188 = vmatpush1.bf16.msra.mxu0 %v164
    %189 = vmatprep.subr.bf16.mxu0 0
    %190 = vmatpush1.bf16.msra.mxu0 0
    %191 = vmatprep.subr.bf16.mxu0 0
    %192 = vmatpush1.bf16.msra.mxu0 0
    %193 = vmatprep.subr.bf16.mxu0 0
    %194 = vmatpush1.bf16.msra.mxu0 0
    %195 = vmatprep.subr.bf16.mxu0 0
    %196 = vmatpush1.bf16.msra.mxu0 0
    %197 = vmatprep.subr.bf16.mxu0 0
    %198 = vmatpush1.bf16.msra.mxu0 0
    %199 = vmatprep.subr.bf16.mxu0 0
    %200 = vmatpush1.bf16.msra.mxu0 0
    %201 = vmatprep.subr.bf16.mxu0 0
    %202 = vmatpush1.bf16.msra.mxu0 0
    %203 = vmatprep.subr.bf16.mxu0 0
    %204 = vmatpush1.bf16.msra.mxu0 0
    %205 = vmatprep.subr.bf16.mxu0 0
    %206 = vmatpush1.bf16.msra.mxu0 0
    %207 = vmatprep.subr.bf16.mxu0 0
    %208 = vmatpush1.bf16.msra.mxu0 0
    %209 = vmatprep.subr.bf16.mxu0 0
    %210 = vmatpush1.bf16.msra.mxu0 0
    %211 = vmatprep.subr.bf16.mxu0 0
    %212 = vmatpush1.bf16.msra.mxu0 0
    %213 = vmatprep.subr.bf16.mxu0 0
    %214 = vmatpush1.bf16.msra.mxu0 0
    %215 = vmatprep.subr.bf16.mxu0 0
    %216 = vmatpush1.bf16.msra.mxu0 0
    %217 = vmatprep.subr.bf16.mxu0 0
    %218 = vmatpush1.bf16.msra.mxu0 0
    %219 = vmatprep.mubr.bf16.mxu0 0
    %220 = vmatmul.mubr.bf16.gmra.mrb[0].mxu0 %v160
    %v221 = vpop.f32.mrb[0].mxu0
    %v222 = vadd.f32 %v101, %v221
    %v223 = vpop.f32.mrb[0].mxu0
    %v224 = vadd.f32 %v105, %v223
    %v225 = vpop.f32.mrb[0].mxu0
    %v226 = vpop.f32.mrb[0].mxu0
    %227 = vdwg.mxu0
    %228 = vmatprep.subr.bf16.mxu0 %v173
    %229 = vmatpush1.bf16.msra.mxu0 %v170
    %230 = vmatprep.subr.bf16.mxu0 0
    %231 = vmatpush1.bf16.msra.mxu0 0
    %232 = vmatprep.subr.bf16.mxu0 0
    %233 = vmatpush1.bf16.msra.mxu0 0
    %234 = vmatprep.subr.bf16.mxu0 0
    %235 = vmatpush1.bf16.msra.mxu0 0
    %236 = vmatprep.subr.bf16.mxu0 0
    %237 = vmatpush1.bf16.msra.mxu0 0
    %238 = vmatprep.subr.bf16.mxu0 0
    %239 = vmatpush1.bf16.msra.mxu0 0
    %240 = vmatprep.subr.bf16.mxu0 0
    %241 = vmatpush1.bf16.msra.mxu0 0
    %242 = vmatprep.subr.bf16.mxu0 0
    %243 = vmatpush1.bf16.msra.mxu0 0
    %244 = vmatprep.subr.bf16.mxu0 0
    %245 = vmatpush1.bf16.msra.mxu0 0
    %246 = vmatprep.subr.bf16.mxu0 0
    %247 = vmatpush1.bf16.msra.mxu0 0
    %248 = vmatprep.subr.bf16.mxu0 0
    %249 = vmatpush1.bf16.msra.mxu0 0
    %250 = vmatprep.subr.bf16.mxu0 0
    %251 = vmatpush1.bf16.msra.mxu0 0
    %252 = vmatprep.subr.bf16.mxu0 0
    %253 = vmatpush1.bf16.msra.mxu0 0
    %254 = vmatprep.subr.bf16.mxu0 0
    %255 = vmatpush1.bf16.msra.mxu0 0
    %256 = vmatprep.subr.bf16.mxu0 0
    %257 = vmatpush1.bf16.msra.mxu0 0
    %258 = vmatprep.subr.bf16.mxu0 0
    %259 = vmatpush1.bf16.msra.mxu0 0
    %260 = vmatprep.mubr.bf16.mxu0 0
    %261 = vmatmul.mubr.bf16.gmra.mrb[0].mxu0 %v160
    %v262 = vpop.f32.mrb[0].mxu0
    %v263 = vadd.f32 %v109, %v262
    %v264 = vpop.f32.mrb[0].mxu0
    %v265 = vadd.f32 %v113, %v264
    %v266 = vpop.f32.mrb[0].mxu0
    %v267 = vpop.f32.mrb[0].mxu0
    %268 = vdwg.mxu0
    %269 = vmatprep.subr.bf16.mxu0 %v179
    %270 = vmatpush1.bf16.msra.mxu0 %v176
    %271 = vmatprep.subr.bf16.mxu0 0
    %272 = vmatpush1.bf16.msra.mxu0 0
    %273 = vmatprep.subr.bf16.mxu0 0
    %274 = vmatpush1.bf16.msra.mxu0 0
    %275 = vmatprep.subr.bf16.mxu0 0
    %276 = vmatpush1.bf16.msra.mxu0 0
    %277 = vmatprep.subr.bf16.mxu0 0
    %278 = vmatpush1.bf16.msra.mxu0 0
    %279 = vmatprep.subr.bf16.mxu0 0
    %280 = vmatpush1.bf16.msra.mxu0 0
    %281 = vmatprep.subr.bf16.mxu0 0
    %282 = vmatpush1.bf16.msra.mxu0 0
    %283 = vmatprep.subr.bf16.mxu0 0
    %284 = vmatpush1.bf16.msra.mxu0 0
    %285 = vmatprep.subr.bf16.mxu0 0
    %286 = vmatpush1.bf16.msra.mxu0 0
    %287 = vmatprep.subr.bf16.mxu0 0
    %288 = vmatpush1.bf16.msra.mxu0 0
    %289 = vmatprep.subr.bf16.mxu0 0
    %290 = vmatpush1.bf16.msra.mxu0 0
    %291 = vmatprep.subr.bf16.mxu0 0
    %292 = vmatpush1.bf16.msra.mxu0 0
    %293 = vmatprep.subr.bf16.mxu0 0
    %294 = vmatpush1.bf16.msra.mxu0 0
    %295 = vmatprep.subr.bf16.mxu0 0
    %296 = vmatpush1.bf16.msra.mxu0 0
    %297 = vmatprep.subr.bf16.mxu0 0
    %298 = vmatpush1.bf16.msra.mxu0 0
    %299 = vmatprep.subr.bf16.mxu0 0
    %300 = vmatpush1.bf16.msra.mxu0 0
    %301 = vmatprep.mubr.bf16.mxu0 0
    %302 = vmatmul.mubr.bf16.gmra.mrb[0].mxu0 %v160
    %v303 = vpop.f32.mrb[0].mxu0
    %v304 = vadd.f32 %v117, %v303
    %v305 = vpop.f32.mrb[0].mxu0
    %v306 = vadd.f32 %v121, %v305
    %v307 = vpop.f32.mrb[0].mxu0
    %v308 = vpop.f32.mrb[0].mxu0
    %309 = vdwg.mxu0
    %310 = vmatprep.subr.bf16.mxu0 %v185
    %311 = vmatpush1.bf16.msra.mxu0 %v182
    %312 = vmatprep.subr.bf16.mxu0 0
    %313 = vmatpush1.bf16.msra.mxu0 0
    %314 = vmatprep.subr.bf16.mxu0 0
    %315 = vmatpush1.bf16.msra.mxu0 0
    %316 = vmatprep.subr.bf16.mxu0 0
    %317 = vmatpush1.bf16.msra.mxu0 0
    %318 = vmatprep.subr.bf16.mxu0 0
    %319 = vmatpush1.bf16.msra.mxu0 0
    %320 = vmatprep.subr.bf16.mxu0 0
    %321 = vmatpush1.bf16.msra.mxu0 0
    %322 = vmatprep.subr.bf16.mxu0 0
    %323 = vmatpush1.bf16.msra.mxu0 0
    %324 = vmatprep.subr.bf16.mxu0 0
    %325 = vmatpush1.bf16.msra.mxu0 0
    %326 = vmatprep.subr.bf16.mxu0 0
    %327 = vmatpush1.bf16.msra.mxu0 0
    %328 = vmatprep.subr.bf16.mxu0 0
    %329 = vmatpush1.bf16.msra.mxu0 0
    %330 = vmatprep.subr.bf16.mxu0 0
    %331 = vmatpush1.bf16.msra.mxu0 0
    %332 = vmatprep.subr.bf16.mxu0 0
    %333 = vmatpush1.bf16.msra.mxu0 0
    %334 = vmatprep.subr.bf16.mxu0 0
    %335 = vmatpush1.bf16.msra.mxu0 0
    %336 = vmatprep.subr.bf16.mxu0 0
    %337 = vmatpush1.bf16.msra.mxu0 0
    %338 = vmatprep.subr.bf16.mxu0 0
    %339 = vmatpush1.bf16.msra.mxu0 0
    %340 = vmatprep.subr.bf16.mxu0 0
    %341 = vmatpush1.bf16.msra.mxu0 0
    %342 = vmatprep.mubr.bf16.mxu0 0
    %343 = vmatmul.mubr.bf16.gmra.mrb[0].mxu0 %v160
    %v344 = vpop.f32.mrb[0].mxu0
    %v345 = vadd.f32 %v125, %v344
    %v346 = vpop.f32.mrb[0].mxu0
    %v347 = vadd.f32 %v129, %v346
    %v348 = vpop.f32.mrb[0].mxu0
    %v349 = vpop.f32.mrb[0].mxu0
    %350 = vdwg.mxu0
    %v351 = vmax.f32 %v222, 0.0
    %v352 = vmax.f32 %v224, 0.0
    %v353 = vmax.f32 %v263, 0.0
    %v354 = vmax.f32 %v265, 0.0
    %v355 = vmax.f32 %v304, 0.0
    %v356 = vmax.f32 %v306, 0.0
    %v357 = vmax.f32 %v345, 0.0
    %v358 = vmax.f32 %v347, 0.0
    %v359 = vpack.c.bf16 %v351, %v351
    %v360 = vpack.c.bf16 %v352, %v352
    %v361 = vpack.c.bf16 %v353, %v353
    %v362 = vpack.c.bf16 %v354, %v354
    %v363 = vpack.c.bf16 %v355, %v355
    %v364 = vpack.c.bf16 %v356, %v356
    %v365 = vpack.c.bf16 %v357, %v357
    %v366 = vpack.c.bf16 %v358, %v358
    %v367 = vld [vmem:[#allocation8] sm:$0xff]
    %v368 = vld [vmem:[#allocation8 + $0x8] sm:$0xff]
    %v369 = vld [vmem:[#allocation8 + $0x10] sm:$0xff]
    %v370 = vld [vmem:[#allocation8 + $0x18] sm:$0xff]
    %v371 = vld [vmem:[#allocation8 + $0x20] sm:$0xff]
    %v372 = vld [vmem:[#allocation8 + $0x28] sm:$0xff]
    %v373 = vld [vmem:[#allocation8 + $0x30] sm:$0xff]
    %v374 = vld [vmem:[#allocation8 + $0x38] sm:$0xff]
    %v375 = vld [vmem:[#allocation8 + $0x40] sm:$0xff]
    %v376 = vld [vmem:[#allocation8 + $0x48] sm:$0xff]
    %v377 = vld [vmem:[#allocation8 + $0x50] sm:$0xff]
    %v378 = vld [vmem:[#allocation8 + $0x58] sm:$0xff]
    %v379 = vld [vmem:[#allocation8 + $0x60] sm:$0xff]
    %v380 = vld [vmem:[#allocation8 + $0x68] sm:$0xff]
    %v381 = vld [vmem:[#allocation8 + $0x70] sm:$0xff]
    %v382 = vld [vmem:[#allocation8 + $0x78] sm:$0xff]
    %v383 = vld [vmem:[#allocation8 + $0x80] sm:$0xff]
    %v384 = vld [vmem:[#allocation8 + $0x88] sm:$0xff]
    %v385 = vld [vmem:[#allocation8 + $0x90] sm:$0xff]
    %v386 = vld [vmem:[#allocation8 + $0x98] sm:$0xff]
    %v387 = vld [vmem:[#allocation8 + $0xa0] sm:$0xff]
    %v388 = vld [vmem:[#allocation8 + $0xa8] sm:$0xff]
    %v389 = vld [vmem:[#allocation8 + $0xb0] sm:$0xff]
    %v390 = vld [vmem:[#allocation8 + $0xb8] sm:$0xff]
    %v391 = vld [vmem:[#allocation8 + $0xc0] sm:$0xff]
    %v392 = vld [vmem:[#allocation8 + $0xc8] sm:$0xff]
    %v393 = vld [vmem:[#allocation8 + $0xd0] sm:$0xff]
    %v394 = vld [vmem:[#allocation8 + $0xd8] sm:$0xff]
    %v395 = vld [vmem:[#allocation8 + $0xe0] sm:$0xff]
    %v396 = vld [vmem:[#allocation8 + $0xe8] sm:$0xff]
    %v397 = vld [vmem:[#allocation8 + $0xf0] sm:$0xff]
    %v398 = vld [vmem:[#allocation8 + $0xf8] sm:$0xff]
    %v399 = vld [vmem:[#allocation8 + $0x100] sm:$0xff]
    %v400 = vld [vmem:[#allocation8 + $0x108] sm:$0xff]
    %v401 = vld [vmem:[#allocation8 + $0x110] sm:$0xff]
    %v402 = vld [vmem:[#allocation8 + $0x118] sm:$0xff]
    %v403 = vld [vmem:[#allocation8 + $0x120] sm:$0xff]
    %v404 = vld [vmem:[#allocation8 + $0x128] sm:$0xff]
    %v405 = vld [vmem:[#allocation8 + $0x130] sm:$0xff]
    %v406 = vld [vmem:[#allocation8 + $0x138] sm:$0xff]
    %v407 = vld [vmem:[#allocation8 + $0x140] sm:$0xff]
    %v408 = vld [vmem:[#allocation8 + $0x148] sm:$0xff]
    %v409 = vld [vmem:[#allocation8 + $0x150] sm:$0xff]
    %v410 = vld [vmem:[#allocation8 + $0x158] sm:$0xff]
    %v411 = vld [vmem:[#allocation8 + $0x160] sm:$0xff]
    %v412 = vld [vmem:[#allocation8 + $0x168] sm:$0xff]
    %v413 = vld [vmem:[#allocation8 + $0x170] sm:$0xff]
    %v414 = vld [vmem:[#allocation8 + $0x178] sm:$0xff]
    %v415 = vld [vmem:[#allocation8 + $0x180] sm:$0xff]
    %v416 = vld [vmem:[#allocation8 + $0x188] sm:$0xff]
    %v417 = vld [vmem:[#allocation8 + $0x190] sm:$0xff]
    %v418 = vld [vmem:[#allocation8 + $0x198] sm:$0xff]
    %v419 = vld [vmem:[#allocation8 + $0x1a0] sm:$0xff]
    %v420 = vld [vmem:[#allocation8 + $0x1a8] sm:$0xff]
    %v421 = vld [vmem:[#allocation8 + $0x1b0] sm:$0xff]
    %v422 = vld [vmem:[#allocation8 + $0x1b8] sm:$0xff]
    %v423 = vld [vmem:[#allocation8 + $0x1c0] sm:$0xff]
    %v424 = vld [vmem:[#allocation8 + $0x1c8] sm:$0xff]
    %v425 = vld [vmem:[#allocation8 + $0x1d0] sm:$0xff]
    %v426 = vld [vmem:[#allocation8 + $0x1d8] sm:$0xff]
    %v427 = vld [vmem:[#allocation8 + $0x1e0] sm:$0xff]
    %v428 = vld [vmem:[#allocation8 + $0x1e8] sm:$0xff]
    %v429 = vld [vmem:[#allocation8 + $0x1f0] sm:$0xff]
    %v430 = vld [vmem:[#allocation8 + $0x1f8] sm:$0xff]
    %v431 = vld [vmem:[#allocation8 + $0x200] sm:$0xff]
    %v432 = vld [vmem:[#allocation8 + $0x208] sm:$0xff]
    %v433 = vld [vmem:[#allocation8 + $0x210] sm:$0xff]
    %v434 = vld [vmem:[#allocation8 + $0x218] sm:$0xff]
    %v435 = vld [vmem:[#allocation8 + $0x220] sm:$0xff]
    %v436 = vld [vmem:[#allocation8 + $0x228] sm:$0xff]
    %v437 = vld [vmem:[#allocation8 + $0x230] sm:$0xff]
    %v438 = vld [vmem:[#allocation8 + $0x238] sm:$0xff]
    %v439 = vld [vmem:[#allocation8 + $0x240] sm:$0xff]
    %v440 = vld [vmem:[#allocation8 + $0x248] sm:$0xff]
    %v441 = vld [vmem:[#allocation8 + $0x250] sm:$0xff]
    %v442 = vld [vmem:[#allocation8 + $0x258] sm:$0xff]
    %v443 = vld [vmem:[#allocation8 + $0x260] sm:$0xff]
    %v444 = vld [vmem:[#allocation8 + $0x268] sm:$0xff]
    %v445 = vld [vmem:[#allocation8 + $0x270] sm:$0xff]
    %v446 = vld [vmem:[#allocation8 + $0x278] sm:$0xff]
    %v447 = vld [vmem:[#allocation8 + $0x280] sm:$0xff]
    %v448 = vld [vmem:[#allocation8 + $0x288] sm:$0xff]
    %v449 = vld [vmem:[#allocation8 + $0x290] sm:$0xff]
    %v450 = vld [vmem:[#allocation8 + $0x298] sm:$0xff]
    %v451 = vld [vmem:[#allocation8 + $0x2a0] sm:$0xff]
    %v452 = vld [vmem:[#allocation8 + $0x2a8] sm:$0xff]
    %v453 = vld [vmem:[#allocation8 + $0x2b0] sm:$0xff]
    %v454 = vld [vmem:[#allocation8 + $0x2b8] sm:$0xff]
    %v455 = vld [vmem:[#allocation8 + $0x2c0] sm:$0xff]
    %v456 = vld [vmem:[#allocation8 + $0x2c8] sm:$0xff]
    %v457 = vld [vmem:[#allocation8 + $0x2d0] sm:$0xff]
    %v458 = vld [vmem:[#allocation8 + $0x2d8] sm:$0xff]
    %v459 = vld [vmem:[#allocation8 + $0x2e0] sm:$0xff]
    %v460 = vld [vmem:[#allocation8 + $0x2e8] sm:$0xff]
    %v461 = vld [vmem:[#allocation8 + $0x2f0] sm:$0xff]
    %v462 = vld [vmem:[#allocation8 + $0x2f8] sm:$0xff]
    %v463 = vld [vmem:[#allocation8 + $0x300] sm:$0xff]
    %v464 = vld [vmem:[#allocation8 + $0x308] sm:$0xff]
    %v465 = vld [vmem:[#allocation8 + $0x310] sm:$0xff]
    %v466 = vld [vmem:[#allocation8 + $0x318] sm:$0xff]
    %v467 = vld [vmem:[#allocation8 + $0x320] sm:$0xff]
    %v468 = vld [vmem:[#allocation8 + $0x328] sm:$0xff]
    %v469 = vld [vmem:[#allocation8 + $0x330] sm:$0xff]
    %v470 = vld [vmem:[#allocation8 + $0x338] sm:$0xff]
    %v471 = vld [vmem:[#allocation8 + $0x340] sm:$0xff]
    %v472 = vld [vmem:[#allocation8 + $0x348] sm:$0xff]
    %v473 = vld [vmem:[#allocation8 + $0x350] sm:$0xff]
    %v474 = vld [vmem:[#allocation8 + $0x358] sm:$0xff]
    %v475 = vld [vmem:[#allocation8 + $0x360] sm:$0xff]
    %v476 = vld [vmem:[#allocation8 + $0x368] sm:$0xff]
    %v477 = vld [vmem:[#allocation8 + $0x370] sm:$0xff]
    %v478 = vld [vmem:[#allocation8 + $0x378] sm:$0xff]
    %v479 = vld [vmem:[#allocation8 + $0x380] sm:$0xff]
    %v480 = vld [vmem:[#allocation8 + $0x388] sm:$0xff]
    %v481 = vld [vmem:[#allocation8 + $0x390] sm:$0xff]
    %v482 = vld [vmem:[#allocation8 + $0x398] sm:$0xff]
    %v483 = vld [vmem:[#allocation8 + $0x3a0] sm:$0xff]
    %v484 = vld [vmem:[#allocation8 + $0x3a8] sm:$0xff]
    %v485 = vld [vmem:[#allocation8 + $0x3b0] sm:$0xff]
    %v486 = vld [vmem:[#allocation8 + $0x3b8] sm:$0xff]
    %v487 = vld [vmem:[#allocation8 + $0x3c0] sm:$0xff]
    %v488 = vld [vmem:[#allocation8 + $0x3c8] sm:$0xff]
    %v489 = vld [vmem:[#allocation8 + $0x3d0] sm:$0xff]
    %v490 = vld [vmem:[#allocation8 + $0x3d8] sm:$0xff]
    %v491 = vld [vmem:[#allocation8 + $0x3e0] sm:$0xff]
    %v492 = vld [vmem:[#allocation8 + $0x3e8] sm:$0xff]
    %v493 = vld [vmem:[#allocation8 + $0x3f0] sm:$0xff]
    %v494 = vld [vmem:[#allocation8 + $0x3f8] sm:$0xff]
    %v495 = vld [vmem:[#allocation8 + $0x400] sm:$0xff]
    %v496 = vld [vmem:[#allocation8 + $0x408] sm:$0xff]
    %v497 = vld [vmem:[#allocation8 + $0x410] sm:$0xff]
    %v498 = vld [vmem:[#allocation8 + $0x418] sm:$0xff]
    %v499 = vld [vmem:[#allocation8 + $0x420] sm:$0xff]
    %v500 = vld [vmem:[#allocation8 + $0x428] sm:$0xff]
    %v501 = vld [vmem:[#allocation8 + $0x430] sm:$0xff]
    %v502 = vld [vmem:[#allocation8 + $0x438] sm:$0xff]
    %v503 = vld [vmem:[#allocation8 + $0x440] sm:$0xff]
    %v504 = vld [vmem:[#allocation8 + $0x448] sm:$0xff]
    %v505 = vld [vmem:[#allocation8 + $0x450] sm:$0xff]
    %v506 = vld [vmem:[#allocation8 + $0x458] sm:$0xff]
    %v507 = vld [vmem:[#allocation8 + $0x460] sm:$0xff]
    %v508 = vld [vmem:[#allocation8 + $0x468] sm:$0xff]
    %v509 = vld [vmem:[#allocation8 + $0x470] sm:$0xff]
    %v510 = vld [vmem:[#allocation8 + $0x478] sm:$0xff]
    %v511 = vld [vmem:[#allocation8 + $0x480] sm:$0xff]
    %v512 = vld [vmem:[#allocation8 + $0x488] sm:$0xff]
    %v513 = vld [vmem:[#allocation8 + $0x490] sm:$0xff]
    %v514 = vld [vmem:[#allocation8 + $0x498] sm:$0xff]
    %v515 = vld [vmem:[#allocation8 + $0x4a0] sm:$0xff]
    %v516 = vld [vmem:[#allocation8 + $0x4a8] sm:$0xff]
    %v517 = vld [vmem:[#allocation8 + $0x4b0] sm:$0xff]
    %v518 = vld [vmem:[#allocation8 + $0x4b8] sm:$0xff]
    %v519 = vld [vmem:[#allocation8 + $0x4c0] sm:$0xff]
    %v520 = vld [vmem:[#allocation8 + $0x4c8] sm:$0xff]
    %v521 = vld [vmem:[#allocation8 + $0x4d0] sm:$0xff]
    %v522 = vld [vmem:[#allocation8 + $0x4d8] sm:$0xff]
    %v523 = vld [vmem:[#allocation8 + $0x4e0] sm:$0xff]
    %v524 = vld [vmem:[#allocation8 + $0x4e8] sm:$0xff]
    %v525 = vld [vmem:[#allocation8 + $0x4f0] sm:$0xff]
    %v526 = vld [vmem:[#allocation8 + $0x4f8] sm:$0xff]
    %v527 = vld [vmem:[#allocation8 + $0x500] sm:$0xff]
    %v528 = vld [vmem:[#allocation8 + $0x508] sm:$0xff]
    %v529 = vld [vmem:[#allocation8 + $0x510] sm:$0xff]
    %v530 = vld [vmem:[#allocation8 + $0x518] sm:$0xff]
    %v531 = vld [vmem:[#allocation8 + $0x520] sm:$0xff]
    %v532 = vld [vmem:[#allocation8 + $0x528] sm:$0xff]
    %v533 = vld [vmem:[#allocation8 + $0x530] sm:$0xff]
    %v534 = vld [vmem:[#allocation8 + $0x538] sm:$0xff]
    %v535 = vld [vmem:[#allocation8 + $0x540] sm:$0xff]
    %v536 = vld [vmem:[#allocation8 + $0x548] sm:$0xff]
    %v537 = vld [vmem:[#allocation8 + $0x550] sm:$0xff]
    %v538 = vld [vmem:[#allocation8 + $0x558] sm:$0xff]
    %v539 = vld [vmem:[#allocation8 + $0x560] sm:$0xff]
    %v540 = vld [vmem:[#allocation8 + $0x568] sm:$0xff]
    %v541 = vld [vmem:[#allocation8 + $0x570] sm:$0xff]
    %v542 = vld [vmem:[#allocation8 + $0x578] sm:$0xff]
    %v543 = vld [vmem:[#allocation8 + $0x580] sm:$0xff]
    %v544 = vld [vmem:[#allocation8 + $0x588] sm:$0xff]
    %v545 = vld [vmem:[#allocation8 + $0x590] sm:$0xff]
    %v546 = vld [vmem:[#allocation8 + $0x598] sm:$0xff]
    %v547 = vld [vmem:[#allocation8 + $0x5a0] sm:$0xff]
    %v548 = vld [vmem:[#allocation8 + $0x5a8] sm:$0xff]
    %v549 = vld [vmem:[#allocation8 + $0x5b0] sm:$0xff]
    %v550 = vld [vmem:[#allocation8 + $0x5b8] sm:$0xff]
    %v551 = vld [vmem:[#allocation8 + $0x5c0] sm:$0xff]
    %v552 = vld [vmem:[#allocation8 + $0x5c8] sm:$0xff]
    %v553 = vld [vmem:[#allocation8 + $0x5d0] sm:$0xff]
    %v554 = vld [vmem:[#allocation8 + $0x5d8] sm:$0xff]
    %v555 = vld [vmem:[#allocation8 + $0x5e0] sm:$0xff]
    %v556 = vld [vmem:[#allocation8 + $0x5e8] sm:$0xff]
    %v557 = vld [vmem:[#allocation8 + $0x5f0] sm:$0xff]
    %v558 = vld [vmem:[#allocation8 + $0x5f8] sm:$0xff]
    %v559 = vld [vmem:[#allocation8 + $0x600] sm:$0xff]
    %v560 = vld [vmem:[#allocation8 + $0x608] sm:$0xff]
    %v561 = vld [vmem:[#allocation8 + $0x610] sm:$0xff]
    %v562 = vld [vmem:[#allocation8 + $0x618] sm:$0xff]
    %v563 = vld [vmem:[#allocation8 + $0x620] sm:$0xff]
    %v564 = vld [vmem:[#allocation8 + $0x628] sm:$0xff]
    %v565 = vld [vmem:[#allocation8 + $0x630] sm:$0xff]
    %v566 = vld [vmem:[#allocation8 + $0x638] sm:$0xff]
    %v567 = vld [vmem:[#allocation8 + $0x640] sm:$0xff]
    %v568 = vld [vmem:[#allocation8 + $0x648] sm:$0xff]
    %v569 = vld [vmem:[#allocation8 + $0x650] sm:$0xff]
    %v570 = vld [vmem:[#allocation8 + $0x658] sm:$0xff]
    %v571 = vld [vmem:[#allocation8 + $0x660] sm:$0xff]
    %v572 = vld [vmem:[#allocation8 + $0x668] sm:$0xff]
    %v573 = vld [vmem:[#allocation8 + $0x670] sm:$0xff]
    %v574 = vld [vmem:[#allocation8 + $0x678] sm:$0xff]
    %v575 = vld [vmem:[#allocation8 + $0x680] sm:$0xff]
    %v576 = vld [vmem:[#allocation8 + $0x688] sm:$0xff]
    %v577 = vld [vmem:[#allocation8 + $0x690] sm:$0xff]
    %v578 = vld [vmem:[#allocation8 + $0x698] sm:$0xff]
    %v579 = vld [vmem:[#allocation8 + $0x6a0] sm:$0xff]
    %v580 = vld [vmem:[#allocation8 + $0x6a8] sm:$0xff]
    %v581 = vld [vmem:[#allocation8 + $0x6b0] sm:$0xff]
    %v582 = vld [vmem:[#allocation8 + $0x6b8] sm:$0xff]
    %v583 = vld [vmem:[#allocation8 + $0x6c0] sm:$0xff]
    %v584 = vld [vmem:[#allocation8 + $0x6c8] sm:$0xff]
    %v585 = vld [vmem:[#allocation8 + $0x6d0] sm:$0xff]
    %v586 = vld [vmem:[#allocation8 + $0x6d8] sm:$0xff]
    %v587 = vld [vmem:[#allocation8 + $0x6e0] sm:$0xff]
    %v588 = vld [vmem:[#allocation8 + $0x6e8] sm:$0xff]
    %v589 = vld [vmem:[#allocation8 + $0x6f0] sm:$0xff]
    %v590 = vld [vmem:[#allocation8 + $0x6f8] sm:$0xff]
    %v591 = vld [vmem:[#allocation8 + $0x700] sm:$0xff]
    %v592 = vld [vmem:[#allocation8 + $0x708] sm:$0xff]
    %v593 = vld [vmem:[#allocation8 + $0x710] sm:$0xff]
    %v594 = vld [vmem:[#allocation8 + $0x718] sm:$0xff]
    %v595 = vld [vmem:[#allocation8 + $0x720] sm:$0xff]
    %v596 = vld [vmem:[#allocation8 + $0x728] sm:$0xff]
    %v597 = vld [vmem:[#allocation8 + $0x730] sm:$0xff]
    %v598 = vld [vmem:[#allocation8 + $0x738] sm:$0xff]
    %v599 = vld [vmem:[#allocation8 + $0x740] sm:$0xff]
    %v600 = vld [vmem:[#allocation8 + $0x748] sm:$0xff]
    %v601 = vld [vmem:[#allocation8 + $0x750] sm:$0xff]
    %v602 = vld [vmem:[#allocation8 + $0x758] sm:$0xff]
    %v603 = vld [vmem:[#allocation8 + $0x760] sm:$0xff]
    %v604 = vld [vmem:[#allocation8 + $0x768] sm:$0xff]
    %v605 = vld [vmem:[#allocation8 + $0x770] sm:$0xff]
    %v606 = vld [vmem:[#allocation8 + $0x778] sm:$0xff]
    %v607 = vld [vmem:[#allocation8 + $0x780] sm:$0xff]
    %v608 = vld [vmem:[#allocation8 + $0x788] sm:$0xff]
    %v609 = vld [vmem:[#allocation8 + $0x790] sm:$0xff]
    %v610 = vld [vmem:[#allocation8 + $0x798] sm:$0xff]
    %v611 = vld [vmem:[#allocation8 + $0x7a0] sm:$0xff]
    %v612 = vld [vmem:[#allocation8 + $0x7a8] sm:$0xff]
    %v613 = vld [vmem:[#allocation8 + $0x7b0] sm:$0xff]
    %v614 = vld [vmem:[#allocation8 + $0x7b8] sm:$0xff]
    %v615 = vld [vmem:[#allocation8 + $0x7c0] sm:$0xff]
    %v616 = vld [vmem:[#allocation8 + $0x7c8] sm:$0xff]
    %v617 = vld [vmem:[#allocation8 + $0x7d0] sm:$0xff]
    %v618 = vld [vmem:[#allocation8 + $0x7d8] sm:$0xff]
    %v619 = vld [vmem:[#allocation8 + $0x7e0] sm:$0xff]
    %v620 = vld [vmem:[#allocation8 + $0x7e8] sm:$0xff]
    %v621 = vld [vmem:[#allocation8 + $0x7f0] sm:$0xff]
    %v622 = vld [vmem:[#allocation8 + $0x7f8] sm:$0xff]
    %v623 = vld [vmem:[%s4] sm:$0xf]
    %v625 = vlaneseq
    %v626 = vshrl.u32 %v625, 7
    %v627 = vsub.s32 0, %v626
    %v628 = vrot.slane %v623, %v627
    %v629 = vlaneseq
    %v630 = vshrl.u32 %v629, 7
    %v631 = vsub.s32 1, %v630
    %v632 = vrot.slane %v623, %v631
    %v633 = vlaneseq
    %v634 = vshrl.u32 %v633, 7
    %v635 = vsub.s32 2, %v634
    %v636 = vrot.slane %v623, %v635
    %v637 = vlaneseq
    %v638 = vshrl.u32 %v637, 7
    %v639 = vsub.s32 3, %v638
    %v640 = vrot.slane %v623, %v639
    %v901 = vunpack.c.l.b16 %v367
    %v902 = vunpack.c.h.b16 %v367
    %v903 = vunpack.c.l.b16 %v368
    %v904 = vunpack.c.h.b16 %v368
    %v905 = vunpack.c.l.b16 %v369
    %v906 = vunpack.c.h.b16 %v369
    %v907 = vunpack.c.l.b16 %v370
    %v908 = vunpack.c.h.b16 %v370
    %v909 = vunpack.c.l.b16 %v371
    %v910 = vunpack.c.h.b16 %v371
    %v911 = vunpack.c.l.b16 %v372
    %v912 = vunpack.c.h.b16 %v372
    %v913 = vunpack.c.l.b16 %v373
    %v914 = vunpack.c.h.b16 %v373
    %v915 = vunpack.c.l.b16 %v374
    %v916 = vunpack.c.h.b16 %v374
    %v917 = vunpack.c.l.b16 %v375
    %v918 = vunpack.c.h.b16 %v375
    %v919 = vunpack.c.l.b16 %v376
    %v920 = vunpack.c.h.b16 %v376
    %v921 = vunpack.c.l.b16 %v377
    %v922 = vunpack.c.h.b16 %v377
    %v923 = vunpack.c.l.b16 %v378
    %v924 = vunpack.c.h.b16 %v378
    %v925 = vunpack.c.l.b16 %v379
    %v926 = vunpack.c.h.b16 %v379
    %v927 = vunpack.c.l.b16 %v380
    %v928 = vunpack.c.h.b16 %v380
    %v929 = vunpack.c.l.b16 %v381
    %v930 = vunpack.c.h.b16 %v381
    %v931 = vunpack.c.l.b16 %v382
    %v932 = vunpack.c.h.b16 %v382
    %v933 = vunpack.c.l.b16 %v383
    %v934 = vunpack.c.h.b16 %v383
    %v935 = vunpack.c.l.b16 %v384
    %v936 = vunpack.c.h.b16 %v384
    %v937 = vunpack.c.l.b16 %v385
    %v938 = vunpack.c.h.b16 %v385
    %v939 = vunpack.c.l.b16 %v386
    %v940 = vunpack.c.h.b16 %v386
    %v941 = vunpack.c.l.b16 %v387
    %v942 = vunpack.c.h.b16 %v387
    %v943 = vunpack.c.l.b16 %v388
    %v944 = vunpack.c.h.b16 %v388
    %v945 = vunpack.c.l.b16 %v389
    %v946 = vunpack.c.h.b16 %v389
    %v947 = vunpack.c.l.b16 %v390
    %v948 = vunpack.c.h.b16 %v390
    %v949 = vunpack.c.l.b16 %v391
    %v950 = vunpack.c.h.b16 %v391
    %v951 = vunpack.c.l.b16 %v392
    %v952 = vunpack.c.h.b16 %v392
    %v953 = vunpack.c.l.b16 %v393
    %v954 = vunpack.c.h.b16 %v393
    %v955 = vunpack.c.l.b16 %v394
    %v956 = vunpack.c.h.b16 %v394
    %v957 = vunpack.c.l.b16 %v395
    %v958 = vunpack.c.h.b16 %v395
    %v959 = vunpack.c.l.b16 %v396
    %v960 = vunpack.c.h.b16 %v396
    %v961 = vunpack.c.l.b16 %v397
    %v962 = vunpack.c.h.b16 %v397
    %v963 = vunpack.c.l.b16 %v398
    %v964 = vunpack.c.h.b16 %v398
    %v965 = vunpack.c.l.b16 %v399
    %v966 = vunpack.c.h.b16 %v399
    %v967 = vunpack.c.l.b16 %v400
    %v968 = vunpack.c.h.b16 %v400
    %v969 = vunpack.c.l.b16 %v401
    %v970 = vunpack.c.h.b16 %v401
    %v971 = vunpack.c.l.b16 %v402
    %v972 = vunpack.c.h.b16 %v402
    %v973 = vunpack.c.l.b16 %v403
    %v974 = vunpack.c.h.b16 %v403
    %v975 = vunpack.c.l.b16 %v404
    %v976 = vunpack.c.h.b16 %v404
    %v977 = vunpack.c.l.b16 %v405
    %v978 = vunpack.c.h.b16 %v405
    %v979 = vunpack.c.l.b16 %v406
    %v980 = vunpack.c.h.b16 %v406
    %v981 = vunpack.c.l.b16 %v407
    %v982 = vunpack.c.h.b16 %v407
    %v983 = vunpack.c.l.b16 %v408
    %v984 = vunpack.c.h.b16 %v408
    %v985 = vunpack.c.l.b16 %v409
    %v986 = vunpack.c.h.b16 %v409
    %v987 = vunpack.c.l.b16 %v410
    %v988 = vunpack.c.h.b16 %v410
    %v989 = vunpack.c.l.b16 %v411
    %v990 = vunpack.c.h.b16 %v411
    %v991 = vunpack.c.l.b16 %v412
    %v992 = vunpack.c.h.b16 %v412
    %v993 = vunpack.c.l.b16 %v413
    %v994 = vunpack.c.h.b16 %v413
    %v995 = vunpack.c.l.b16 %v414
    %v996 = vunpack.c.h.b16 %v414
    %v997 = vunpack.c.l.b16 %v415
    %v998 = vunpack.c.h.b16 %v415
    %v999 = vunpack.c.l.b16 %v416
    %v1000 = vunpack.c.h.b16 %v416
    %v1001 = vunpack.c.l.b16 %v417
    %v1002 = vunpack.c.h.b16 %v417
    %v1003 = vunpack.c.l.b16 %v418
    %v1004 = vunpack.c.h.b16 %v418
    %v1005 = vunpack.c.l.b16 %v419
    %v1006 = vunpack.c.h.b16 %v419
    %v1007 = vunpack.c.l.b16 %v420
    %v1008 = vunpack.c.h.b16 %v420
    %v1009 = vunpack.c.l.b16 %v421
    %v1010 = vunpack.c.h.b16 %v421
    %v1011 = vunpack.c.l.b16 %v422
    %v1012 = vunpack.c.h.b16 %v422
    %v1013 = vunpack.c.l.b16 %v423
    %v1014 = vunpack.c.h.b16 %v423
    %v1015 = vunpack.c.l.b16 %v424
    %v1016 = vunpack.c.h.b16 %v424
    %v1017 = vunpack.c.l.b16 %v425
    %v1018 = vunpack.c.h.b16 %v425
    %v1019 = vunpack.c.l.b16 %v426
    %v1020 = vunpack.c.h.b16 %v426
    %v1021 = vunpack.c.l.b16 %v427
    %v1022 = vunpack.c.h.b16 %v427
    %v1023 = vunpack.c.l.b16 %v428
    %v1024 = vunpack.c.h.b16 %v428
    %v1025 = vunpack.c.l.b16 %v429
    %v1026 = vunpack.c.h.b16 %v429
    %v1027 = vunpack.c.l.b16 %v430
    %v1028 = vunpack.c.h.b16 %v430
    %v1029 = vunpack.c.l.b16 %v431
    %v1030 = vunpack.c.h.b16 %v431
    %v1031 = vunpack.c.l.b16 %v432
    %v1032 = vunpack.c.h.b16 %v432
    %v1033 = vunpack.c.l.b16 %v433
    %v1034 = vunpack.c.h.b16 %v433
    %v1035 = vunpack.c.l.b16 %v434
    %v1036 = vunpack.c.h.b16 %v434
    %v1037 = vunpack.c.l.b16 %v435
    %v1038 = vunpack.c.h.b16 %v435
    %v1039 = vunpack.c.l.b16 %v436
    %v1040 = vunpack.c.h.b16 %v436
    %v1041 = vunpack.c.l.b16 %v437
    %v1042 = vunpack.c.h.b16 %v437
    %v1043 = vunpack.c.l.b16 %v438
    %v1044 = vunpack.c.h.b16 %v438
    %v1045 = vunpack.c.l.b16 %v439
    %v1046 = vunpack.c.h.b16 %v439
    %v1047 = vunpack.c.l.b16 %v440
    %v1048 = vunpack.c.h.b16 %v440
    %v1049 = vunpack.c.l.b16 %v441
    %v1050 = vunpack.c.h.b16 %v441
    %v1051 = vunpack.c.l.b16 %v442
    %v1052 = vunpack.c.h.b16 %v442
    %v1053 = vunpack.c.l.b16 %v443
    %v1054 = vunpack.c.h.b16 %v443
    %v1055 = vunpack.c.l.b16 %v444
    %v1056 = vunpack.c.h.b16 %v444
    %v1057 = vunpack.c.l.b16 %v445
    %v1058 = vunpack.c.h.b16 %v445
    %v1059 = vunpack.c.l.b16 %v446
    %v1060 = vunpack.c.h.b16 %v446
    %v1061 = vunpack.c.l.b16 %v447
    %v1062 = vunpack.c.h.b16 %v447
    %v1063 = vunpack.c.l.b16 %v448
    %v1064 = vunpack.c.h.b16 %v448
    %v1065 = vunpack.c.l.b16 %v449
    %v1066 = vunpack.c.h.b16 %v449
    %v1067 = vunpack.c.l.b16 %v450
    %v1068 = vunpack.c.h.b16 %v450
    %v1069 = vunpack.c.l.b16 %v451
    %v1070 = vunpack.c.h.b16 %v451
    %v1071 = vunpack.c.l.b16 %v452
    %v1072 = vunpack.c.h.b16 %v452
    %v1073 = vunpack.c.l.b16 %v453
    %v1074 = vunpack.c.h.b16 %v453
    %v1075 = vunpack.c.l.b16 %v454
    %v1076 = vunpack.c.h.b16 %v454
    %v1077 = vunpack.c.l.b16 %v455
    %v1078 = vunpack.c.h.b16 %v455
    %v1079 = vunpack.c.l.b16 %v456
    %v1080 = vunpack.c.h.b16 %v456
    %v1081 = vunpack.c.l.b16 %v457
    %v1082 = vunpack.c.h.b16 %v457
    %v1083 = vunpack.c.l.b16 %v458
    %v1084 = vunpack.c.h.b16 %v458
    %v1085 = vunpack.c.l.b16 %v459
    %v1086 = vunpack.c.h.b16 %v459
    %v1087 = vunpack.c.l.b16 %v460
    %v1088 = vunpack.c.h.b16 %v460
    %v1089 = vunpack.c.l.b16 %v461
    %v1090 = vunpack.c.h.b16 %v461
    %v1091 = vunpack.c.l.b16 %v462
    %v1092 = vunpack.c.h.b16 %v462
    %v1093 = vunpack.c.l.b16 %v463
    %v1094 = vunpack.c.h.b16 %v463
    %v1095 = vunpack.c.l.b16 %v464
    %v1096 = vunpack.c.h.b16 %v464
    %v1097 = vunpack.c.l.b16 %v465
    %v1098 = vunpack.c.h.b16 %v465
    %v1099 = vunpack.c.l.b16 %v466
    %v1100 = vunpack.c.h.b16 %v466
    %v1101 = vunpack.c.l.b16 %v467
    %v1102 = vunpack.c.h.b16 %v467
    %v1103 = vunpack.c.l.b16 %v468
    %v1104 = vunpack.c.h.b16 %v468
    %v1105 = vunpack.c.l.b16 %v469
    %v1106 = vunpack.c.h.b16 %v469
    %v1107 = vunpack.c.l.b16 %v470
    %v1108 = vunpack.c.h.b16 %v470
    %v1109 = vunpack.c.l.b16 %v471
    %v1110 = vunpack.c.h.b16 %v471
    %v1111 = vunpack.c.l.b16 %v472
    %v1112 = vunpack.c.h.b16 %v472
    %v1113 = vunpack.c.l.b16 %v473
    %v1114 = vunpack.c.h.b16 %v473
    %v1115 = vunpack.c.l.b16 %v474
    %v1116 = vunpack.c.h.b16 %v474
    %v1117 = vunpack.c.l.b16 %v475
    %v1118 = vunpack.c.h.b16 %v475
    %v1119 = vunpack.c.l.b16 %v476
    %v1120 = vunpack.c.h.b16 %v476
    %v1121 = vunpack.c.l.b16 %v477
    %v1122 = vunpack.c.h.b16 %v477
    %v1123 = vunpack.c.l.b16 %v478
    %v1124 = vunpack.c.h.b16 %v478
    %v1125 = vunpack.c.l.b16 %v479
    %v1126 = vunpack.c.h.b16 %v479
    %v1127 = vunpack.c.l.b16 %v480
    %v1128 = vunpack.c.h.b16 %v480
    %v1129 = vunpack.c.l.b16 %v481
    %v1130 = vunpack.c.h.b16 %v481
    %v1131 = vunpack.c.l.b16 %v482
    %v1132 = vunpack.c.h.b16 %v482
    %v1133 = vunpack.c.l.b16 %v483
    %v1134 = vunpack.c.h.b16 %v483
    %v1135 = vunpack.c.l.b16 %v484
    %v1136 = vunpack.c.h.b16 %v484
    %v1137 = vunpack.c.l.b16 %v485
    %v1138 = vunpack.c.h.b16 %v485
    %v1139 = vunpack.c.l.b16 %v486
    %v1140 = vunpack.c.h.b16 %v486
    %v1141 = vunpack.c.l.b16 %v487
    %v1142 = vunpack.c.h.b16 %v487
    %v1143 = vunpack.c.l.b16 %v488
    %v1144 = vunpack.c.h.b16 %v488
    %v1145 = vunpack.c.l.b16 %v489
    %v1146 = vunpack.c.h.b16 %v489
    %v1147 = vunpack.c.l.b16 %v490
    %v1148 = vunpack.c.h.b16 %v490
    %v1149 = vunpack.c.l.b16 %v491
    %v1150 = vunpack.c.h.b16 %v491
    %v1151 = vunpack.c.l.b16 %v492
    %v1152 = vunpack.c.h.b16 %v492
    %v1153 = vunpack.c.l.b16 %v493
    %v1154 = vunpack.c.h.b16 %v493
    %v1155 = vunpack.c.l.b16 %v494
    %v1156 = vunpack.c.h.b16 %v494
    %v1157 = vunpack.c.l.b16 %v495
    %v1158 = vunpack.c.h.b16 %v495
    %v1159 = vunpack.c.l.b16 %v496
    %v1160 = vunpack.c.h.b16 %v496
    %v1161 = vunpack.c.l.b16 %v497
    %v1162 = vunpack.c.h.b16 %v497
    %v1163 = vunpack.c.l.b16 %v498
    %v1164 = vunpack.c.h.b16 %v498
    %v1165 = vunpack.c.l.b16 %v499
    %v1166 = vunpack.c.h.b16 %v499
    %v1167 = vunpack.c.l.b16 %v500
    %v1168 = vunpack.c.h.b16 %v500
    %v1169 = vunpack.c.l.b16 %v501
    %v1170 = vunpack.c.h.b16 %v501
    %v1171 = vunpack.c.l.b16 %v502
    %v1172 = vunpack.c.h.b16 %v502
    %v1173 = vunpack.c.l.b16 %v503
    %v1174 = vunpack.c.h.b16 %v503
    %v1175 = vunpack.c.l.b16 %v504
    %v1176 = vunpack.c.h.b16 %v504
    %v1177 = vunpack.c.l.b16 %v505
    %v1178 = vunpack.c.h.b16 %v505
    %v1179 = vunpack.c.l.b16 %v506
    %v1180 = vunpack.c.h.b16 %v506
    %v1181 = vunpack.c.l.b16 %v507
    %v1182 = vunpack.c.h.b16 %v507
    %v1183 = vunpack.c.l.b16 %v508
    %v1184 = vunpack.c.h.b16 %v508
    %v1185 = vunpack.c.l.b16 %v509
    %v1186 = vunpack.c.h.b16 %v509
    %v1187 = vunpack.c.l.b16 %v510
    %v1188 = vunpack.c.h.b16 %v510
    %v1189 = vunpack.c.l.b16 %v511
    %v1190 = vunpack.c.h.b16 %v511
    %v1191 = vunpack.c.l.b16 %v512
    %v1192 = vunpack.c.h.b16 %v512
    %v1193 = vunpack.c.l.b16 %v513
    %v1194 = vunpack.c.h.b16 %v513
    %v1195 = vunpack.c.l.b16 %v514
    %v1196 = vunpack.c.h.b16 %v514
    %v1197 = vunpack.c.l.b16 %v515
    %v1198 = vunpack.c.h.b16 %v515
    %v1199 = vunpack.c.l.b16 %v516
    %v1200 = vunpack.c.h.b16 %v516
    %v1201 = vunpack.c.l.b16 %v517
    %v1202 = vunpack.c.h.b16 %v517
    %v1203 = vunpack.c.l.b16 %v518
    %v1204 = vunpack.c.h.b16 %v518
    %v1205 = vunpack.c.l.b16 %v519
    %v1206 = vunpack.c.h.b16 %v519
    %v1207 = vunpack.c.l.b16 %v520
    %v1208 = vunpack.c.h.b16 %v520
    %v1209 = vunpack.c.l.b16 %v521
    %v1210 = vunpack.c.h.b16 %v521
    %v1211 = vunpack.c.l.b16 %v522
    %v1212 = vunpack.c.h.b16 %v522
    %v1213 = vunpack.c.l.b16 %v523
    %v1214 = vunpack.c.h.b16 %v523
    %v1215 = vunpack.c.l.b16 %v524
    %v1216 = vunpack.c.h.b16 %v524
    %v1217 = vunpack.c.l.b16 %v525
    %v1218 = vunpack.c.h.b16 %v525
    %v1219 = vunpack.c.l.b16 %v526
    %v1220 = vunpack.c.h.b16 %v526
    %v1221 = vunpack.c.l.b16 %v527
    %v1222 = vunpack.c.h.b16 %v527
    %v1223 = vunpack.c.l.b16 %v528
    %v1224 = vunpack.c.h.b16 %v528
    %v1225 = vunpack.c.l.b16 %v529
    %v1226 = vunpack.c.h.b16 %v529
    %v1227 = vunpack.c.l.b16 %v530
    %v1228 = vunpack.c.h.b16 %v530
    %v1229 = vunpack.c.l.b16 %v531
    %v1230 = vunpack.c.h.b16 %v531
    %v1231 = vunpack.c.l.b16 %v532
    %v1232 = vunpack.c.h.b16 %v532
    %v1233 = vunpack.c.l.b16 %v533
    %v1234 = vunpack.c.h.b16 %v533
    %v1235 = vunpack.c.l.b16 %v534
    %v1236 = vunpack.c.h.b16 %v534
    %v1237 = vunpack.c.l.b16 %v535
    %v1238 = vunpack.c.h.b16 %v535
    %v1239 = vunpack.c.l.b16 %v536
    %v1240 = vunpack.c.h.b16 %v536
    %v1241 = vunpack.c.l.b16 %v537
    %v1242 = vunpack.c.h.b16 %v537
    %v1243 = vunpack.c.l.b16 %v538
    %v1244 = vunpack.c.h.b16 %v538
    %v1245 = vunpack.c.l.b16 %v539
    %v1246 = vunpack.c.h.b16 %v539
    %v1247 = vunpack.c.l.b16 %v540
    %v1248 = vunpack.c.h.b16 %v540
    %v1249 = vunpack.c.l.b16 %v541
    %v1250 = vunpack.c.h.b16 %v541
    %v1251 = vunpack.c.l.b16 %v542
    %v1252 = vunpack.c.h.b16 %v542
    %v1253 = vunpack.c.l.b16 %v543
    %v1254 = vunpack.c.h.b16 %v543
    %v1255 = vunpack.c.l.b16 %v544
    %v1256 = vunpack.c.h.b16 %v544
    %v1257 = vunpack.c.l.b16 %v545
    %v1258 = vunpack.c.h.b16 %v545
    %v1259 = vunpack.c.l.b16 %v546
    %v1260 = vunpack.c.h.b16 %v546
    %v1261 = vunpack.c.l.b16 %v547
    %v1262 = vunpack.c.h.b16 %v547
    %v1263 = vunpack.c.l.b16 %v548
    %v1264 = vunpack.c.h.b16 %v548
    %v1265 = vunpack.c.l.b16 %v549
    %v1266 = vunpack.c.h.b16 %v549
    %v1267 = vunpack.c.l.b16 %v550
    %v1268 = vunpack.c.h.b16 %v550
    %v1269 = vunpack.c.l.b16 %v551
    %v1270 = vunpack.c.h.b16 %v551
    %v1271 = vunpack.c.l.b16 %v552
    %v1272 = vunpack.c.h.b16 %v552
    %v1273 = vunpack.c.l.b16 %v553
    %v1274 = vunpack.c.h.b16 %v553
    %v1275 = vunpack.c.l.b16 %v554
    %v1276 = vunpack.c.h.b16 %v554
    %v1277 = vunpack.c.l.b16 %v555
    %v1278 = vunpack.c.h.b16 %v555
    %v1279 = vunpack.c.l.b16 %v556
    %v1280 = vunpack.c.h.b16 %v556
    %v1281 = vunpack.c.l.b16 %v557
    %v1282 = vunpack.c.h.b16 %v557
    %v1283 = vunpack.c.l.b16 %v558
    %v1284 = vunpack.c.h.b16 %v558
    %v1285 = vunpack.c.l.b16 %v559
    %v1286 = vunpack.c.h.b16 %v559
    %v1287 = vunpack.c.l.b16 %v560
    %v1288 = vunpack.c.h.b16 %v560
    %v1289 = vunpack.c.l.b16 %v561
    %v1290 = vunpack.c.h.b16 %v561
    %v1291 = vunpack.c.l.b16 %v562
    %v1292 = vunpack.c.h.b16 %v562
    %v1293 = vunpack.c.l.b16 %v563
    %v1294 = vunpack.c.h.b16 %v563
    %v1295 = vunpack.c.l.b16 %v564
    %v1296 = vunpack.c.h.b16 %v564
    %v1297 = vunpack.c.l.b16 %v565
    %v1298 = vunpack.c.h.b16 %v565
    %v1299 = vunpack.c.l.b16 %v566
    %v1300 = vunpack.c.h.b16 %v566
    %v1301 = vunpack.c.l.b16 %v567
    %v1302 = vunpack.c.h.b16 %v567
    %v1303 = vunpack.c.l.b16 %v568
    %v1304 = vunpack.c.h.b16 %v568
    %v1305 = vunpack.c.l.b16 %v569
    %v1306 = vunpack.c.h.b16 %v569
    %v1307 = vunpack.c.l.b16 %v570
    %v1308 = vunpack.c.h.b16 %v570
    %v1309 = vunpack.c.l.b16 %v571
    %v1310 = vunpack.c.h.b16 %v571
    %v1311 = vunpack.c.l.b16 %v572
    %v1312 = vunpack.c.h.b16 %v572
    %v1313 = vunpack.c.l.b16 %v573
    %v1314 = vunpack.c.h.b16 %v573
    %v1315 = vunpack.c.l.b16 %v574
    %v1316 = vunpack.c.h.b16 %v574
    %v1317 = vunpack.c.l.b16 %v575
    %v1318 = vunpack.c.h.b16 %v575
    %v1319 = vunpack.c.l.b16 %v576
    %v1320 = vunpack.c.h.b16 %v576
    %v1321 = vunpack.c.l.b16 %v577
    %v1322 = vunpack.c.h.b16 %v577
    %v1323 = vunpack.c.l.b16 %v578
    %v1324 = vunpack.c.h.b16 %v578
    %v1325 = vunpack.c.l.b16 %v579
    %v1326 = vunpack.c.h.b16 %v579
    %v1327 = vunpack.c.l.b16 %v580
    %v1328 = vunpack.c.h.b16 %v580
    %v1329 = vunpack.c.l.b16 %v581
    %v1330 = vunpack.c.h.b16 %v581
    %v1331 = vunpack.c.l.b16 %v582
    %v1332 = vunpack.c.h.b16 %v582
    %v1333 = vunpack.c.l.b16 %v583
    %v1334 = vunpack.c.h.b16 %v583
    %v1335 = vunpack.c.l.b16 %v584
    %v1336 = vunpack.c.h.b16 %v584
    %v1337 = vunpack.c.l.b16 %v585
    %v1338 = vunpack.c.h.b16 %v585
    %v1339 = vunpack.c.l.b16 %v586
    %v1340 = vunpack.c.h.b16 %v586
    %v1341 = vunpack.c.l.b16 %v587
    %v1342 = vunpack.c.h.b16 %v587
    %v1343 = vunpack.c.l.b16 %v588
    %v1344 = vunpack.c.h.b16 %v588
    %v1345 = vunpack.c.l.b16 %v589
    %v1346 = vunpack.c.h.b16 %v589
    %v1347 = vunpack.c.l.b16 %v590
    %v1348 = vunpack.c.h.b16 %v590
    %v1349 = vunpack.c.l.b16 %v591
    %v1350 = vunpack.c.h.b16 %v591
    %v1351 = vunpack.c.l.b16 %v592
    %v1352 = vunpack.c.h.b16 %v592
    %v1353 = vunpack.c.l.b16 %v593
    %v1354 = vunpack.c.h.b16 %v593
    %v1355 = vunpack.c.l.b16 %v594
    %v1356 = vunpack.c.h.b16 %v594
    %v1357 = vunpack.c.l.b16 %v595
    %v1358 = vunpack.c.h.b16 %v595
    %v1359 = vunpack.c.l.b16 %v596
    %v1360 = vunpack.c.h.b16 %v596
    %v1361 = vunpack.c.l.b16 %v597
    %v1362 = vunpack.c.h.b16 %v597
    %v1363 = vunpack.c.l.b16 %v598
    %v1364 = vunpack.c.h.b16 %v598
    %v1365 = vunpack.c.l.b16 %v599
    %v1366 = vunpack.c.h.b16 %v599
    %v1367 = vunpack.c.l.b16 %v600
    %v1368 = vunpack.c.h.b16 %v600
    %v1369 = vunpack.c.l.b16 %v601
    %v1370 = vunpack.c.h.b16 %v601
    %v1371 = vunpack.c.l.b16 %v602
    %v1372 = vunpack.c.h.b16 %v602
    %v1373 = vunpack.c.l.b16 %v603
    %v1374 = vunpack.c.h.b16 %v603
    %v1375 = vunpack.c.l.b16 %v604
    %v1376 = vunpack.c.h.b16 %v604
    %v1377 = vunpack.c.l.b16 %v605
    %v1378 = vunpack.c.h.b16 %v605
    %v1379 = vunpack.c.l.b16 %v606
    %v1380 = vunpack.c.h.b16 %v606
    %v1381 = vunpack.c.l.b16 %v607
    %v1382 = vunpack.c.h.b16 %v607
    %v1383 = vunpack.c.l.b16 %v608
    %v1384 = vunpack.c.h.b16 %v608
    %v1385 = vunpack.c.l.b16 %v609
    %v1386 = vunpack.c.h.b16 %v609
    %v1387 = vunpack.c.l.b16 %v610
    %v1388 = vunpack.c.h.b16 %v610
    %v1389 = vunpack.c.l.b16 %v611
    %v1390 = vunpack.c.h.b16 %v611
    %v1391 = vunpack.c.l.b16 %v612
    %v1392 = vunpack.c.h.b16 %v612
    %v1393 = vunpack.c.l.b16 %v613
    %v1394 = vunpack.c.h.b16 %v613
    %v1395 = vunpack.c.l.b16 %v614
    %v1396 = vunpack.c.h.b16 %v614
    %v1397 = vunpack.c.l.b16 %v615
    %v1398 = vunpack.c.h.b16 %v615
    %v1399 = vunpack.c.l.b16 %v616
    %v1400 = vunpack.c.h.b16 %v616
    %v1401 = vunpack.c.l.b16 %v617
    %v1402 = vunpack.c.h.b16 %v617
    %v1403 = vunpack.c.l.b16 %v618
    %v1404 = vunpack.c.h.b16 %v618
    %v1405 = vunpack.c.l.b16 %v619
    %v1406 = vunpack.c.h.b16 %v619
    %v1407 = vunpack.c.l.b16 %v620
    %v1408 = vunpack.c.h.b16 %v620
    %v1409 = vunpack.c.l.b16 %v621
    %v1410 = vunpack.c.h.b16 %v621
    %v1411 = vunpack.c.l.b16 %v622
    %v1412 = vunpack.c.h.b16 %v622
    %v1413 = vpack.c.b16 %v905, %v901
    %v1414 = vpack.c.b16 %v906, %v902
    %v1415 = vpack.c.b16 %v907, %v903
    %v1416 = vpack.c.b16 %v908, %v904
    %v1417 = vpack.c.b16 %v913, %v909
    %v1418 = vpack.c.b16 %v914, %v910
    %v1419 = vpack.c.b16 %v915, %v911
    %v1420 = vpack.c.b16 %v916, %v912
    %v1421 = vpack.c.b16 %v921, %v917
    %v1422 = vpack.c.b16 %v922, %v918
    %v1423 = vpack.c.b16 %v923, %v919
    %v1424 = vpack.c.b16 %v924, %v920
    %v1425 = vpack.c.b16 %v929, %v925
    %v1426 = vpack.c.b16 %v930, %v926
    %v1427 = vpack.c.b16 %v931, %v927
    %v1428 = vpack.c.b16 %v932, %v928
    %v1429 = vpack.c.b16 %v937, %v933
    %v1430 = vpack.c.b16 %v938, %v934
    %v1431 = vpack.c.b16 %v939, %v935
    %v1432 = vpack.c.b16 %v940, %v936
    %v1433 = vpack.c.b16 %v945, %v941
    %v1434 = vpack.c.b16 %v946, %v942
    %v1435 = vpack.c.b16 %v947, %v943
    %v1436 = vpack.c.b16 %v948, %v944
    %v1437 = vpack.c.b16 %v953, %v949
    %v1438 = vpack.c.b16 %v954, %v950
    %v1439 = vpack.c.b16 %v955, %v951
    %v1440 = vpack.c.b16 %v956, %v952
    %v1441 = vpack.c.b16 %v961, %v957
    %v1442 = vpack.c.b16 %v962, %v958
    %v1443 = vpack.c.b16 %v963, %v959
    %v1444 = vpack.c.b16 %v964, %v960
    %v1445 = vpack.c.b16 %v969, %v965
    %v1446 = vpack.c.b16 %v970, %v966
    %v1447 = vpack.c.b16 %v971, %v967
    %v1448 = vpack.c.b16 %v972, %v968
    %v1449 = vpack.c.b16 %v977, %v973
    %v1450 = vpack.c.b16 %v978, %v974
    %v1451 = vpack.c.b16 %v979, %v975
    %v1452 = vpack.c.b16 %v980, %v976
    %v1453 = vpack.c.b16 %v985, %v981
    %v1454 = vpack.c.b16 %v986, %v982
    %v1455 = vpack.c.b16 %v987, %v983
    %v1456 = vpack.c.b16 %v988, %v984
    %v1457 = vpack.c.b16 %v993, %v989
    %v1458 = vpack.c.b16 %v994, %v990
    %v1459 = vpack.c.b16 %v995, %v991
    %v1460 = vpack.c.b16 %v996, %v992
    %v1461 = vpack.c.b16 %v1001, %v997
    %v1462 = vpack.c.b16 %v1002, %v998
    %v1463 = vpack.c.b16 %v1003, %v999
    %v1464 = vpack.c.b16 %v1004, %v1000
    %v1465 = vpack.c.b16 %v1009, %v1005
    %v1466 = vpack.c.b16 %v1010, %v1006
    %v1467 = vpack.c.b16 %v1011, %v1007
    %v1468 = vpack.c.b16 %v1012, %v1008
    %v1469 = vpack.c.b16 %v1017, %v1013
    %v1470 = vpack.c.b16 %v1018, %v1014
    %v1471 = vpack.c.b16 %v1019, %v1015
    %v1472 = vpack.c.b16 %v1020, %v1016
    %v1473 = vpack.c.b16 %v1025, %v1021
    %v1474 = vpack.c.b16 %v1026, %v1022
    %v1475 = vpack.c.b16 %v1027, %v1023
    %v1476 = vpack.c.b16 %v1028, %v1024
    %v1477 = vpack.c.b16 %v1033, %v1029
    %v1478 = vpack.c.b16 %v1034, %v1030
    %v1479 = vpack.c.b16 %v1035, %v1031
    %v1480 = vpack.c.b16 %v1036, %v1032
    %v1481 = vpack.c.b16 %v1041, %v1037
    %v1482 = vpack.c.b16 %v1042, %v1038
    %v1483 = vpack.c.b16 %v1043, %v1039
    %v1484 = vpack.c.b16 %v1044, %v1040
    %v1485 = vpack.c.b16 %v1049, %v1045
    %v1486 = vpack.c.b16 %v1050, %v1046
    %v1487 = vpack.c.b16 %v1051, %v1047
    %v1488 = vpack.c.b16 %v1052, %v1048
    %v1489 = vpack.c.b16 %v1057, %v1053
    %v1490 = vpack.c.b16 %v1058, %v1054
    %v1491 = vpack.c.b16 %v1059, %v1055
    %v1492 = vpack.c.b16 %v1060, %v1056
    %v1493 = vpack.c.b16 %v1065, %v1061
    %v1494 = vpack.c.b16 %v1066, %v1062
    %v1495 = vpack.c.b16 %v1067, %v1063
    %v1496 = vpack.c.b16 %v1068, %v1064
    %v1497 = vpack.c.b16 %v1073, %v1069
    %v1498 = vpack.c.b16 %v1074, %v1070
    %v1499 = vpack.c.b16 %v1075, %v1071
    %v1500 = vpack.c.b16 %v1076, %v1072
    %v1501 = vpack.c.b16 %v1081, %v1077
    %v1502 = vpack.c.b16 %v1082, %v1078
    %v1503 = vpack.c.b16 %v1083, %v1079
    %v1504 = vpack.c.b16 %v1084, %v1080
    %v1505 = vpack.c.b16 %v1089, %v1085
    %v1506 = vpack.c.b16 %v1090, %v1086
    %v1507 = vpack.c.b16 %v1091, %v1087
    %v1508 = vpack.c.b16 %v1092, %v1088
    %v1509 = vpack.c.b16 %v1097, %v1093
    %v1510 = vpack.c.b16 %v1098, %v1094
    %v1511 = vpack.c.b16 %v1099, %v1095
    %v1512 = vpack.c.b16 %v1100, %v1096
    %v1513 = vpack.c.b16 %v1105, %v1101
    %v1514 = vpack.c.b16 %v1106, %v1102
    %v1515 = vpack.c.b16 %v1107, %v1103
    %v1516 = vpack.c.b16 %v1108, %v1104
    %v1517 = vpack.c.b16 %v1113, %v1109
    %v1518 = vpack.c.b16 %v1114, %v1110
    %v1519 = vpack.c.b16 %v1115, %v1111
    %v1520 = vpack.c.b16 %v1116, %v1112
    %v1521 = vpack.c.b16 %v1121, %v1117
    %v1522 = vpack.c.b16 %v1122, %v1118
    %v1523 = vpack.c.b16 %v1123, %v1119
    %v1524 = vpack.c.b16 %v1124, %v1120
    %v1525 = vpack.c.b16 %v1129, %v1125
    %v1526 = vpack.c.b16 %v1130, %v1126
    %v1527 = vpack.c.b16 %v1131, %v1127
    %v1528 = vpack.c.b16 %v1132, %v1128
    %v1529 = vpack.c.b16 %v1137, %v1133
    %v1530 = vpack.c.b16 %v1138, %v1134
    %v1531 = vpack.c.b16 %v1139, %v1135
    %v1532 = vpack.c.b16 %v1140, %v1136
    %v1533 = vpack.c.b16 %v1145, %v1141
    %v1534 = vpack.c.b16 %v1146, %v1142
    %v1535 = vpack.c.b16 %v1147, %v1143
    %v1536 = vpack.c.b16 %v1148, %v1144
    %v1537 = vpack.c.b16 %v1153, %v1149
    %v1538 = vpack.c.b16 %v1154, %v1150
    %v1539 = vpack.c.b16 %v1155, %v1151
    %v1540 = vpack.c.b16 %v1156, %v1152
    %v1541 = vpack.c.b16 %v1161, %v1157
    %v1542 = vpack.c.b16 %v1162, %v1158
    %v1543 = vpack.c.b16 %v1163, %v1159
    %v1544 = vpack.c.b16 %v1164, %v1160
    %v1545 = vpack.c.b16 %v1169, %v1165
    %v1546 = vpack.c.b16 %v1170, %v1166
    %v1547 = vpack.c.b16 %v1171, %v1167
    %v1548 = vpack.c.b16 %v1172, %v1168
    %v1549 = vpack.c.b16 %v1177, %v1173
    %v1550 = vpack.c.b16 %v1178, %v1174
    %v1551 = vpack.c.b16 %v1179, %v1175
    %v1552 = vpack.c.b16 %v1180, %v1176
    %v1553 = vpack.c.b16 %v1185, %v1181
    %v1554 = vpack.c.b16 %v1186, %v1182
    %v1555 = vpack.c.b16 %v1187, %v1183
    %v1556 = vpack.c.b16 %v1188, %v1184
    %v1557 = vpack.c.b16 %v1193, %v1189
    %v1558 = vpack.c.b16 %v1194, %v1190
    %v1559 = vpack.c.b16 %v1195, %v1191
    %v1560 = vpack.c.b16 %v1196, %v1192
    %v1561 = vpack.c.b16 %v1201, %v1197
    %v1562 = vpack.c.b16 %v1202, %v1198
    %v1563 = vpack.c.b16 %v1203, %v1199
    %v1564 = vpack.c.b16 %v1204, %v1200
    %v1565 = vpack.c.b16 %v1209, %v1205
    %v1566 = vpack.c.b16 %v1210, %v1206
    %v1567 = vpack.c.b16 %v1211, %v1207
    %v1568 = vpack.c.b16 %v1212, %v1208
    %v1569 = vpack.c.b16 %v1217, %v1213
    %v1570 = vpack.c.b16 %v1218, %v1214
    %v1571 = vpack.c.b16 %v1219, %v1215
    %v1572 = vpack.c.b16 %v1220, %v1216
    %v1573 = vpack.c.b16 %v1225, %v1221
    %v1574 = vpack.c.b16 %v1226, %v1222
    %v1575 = vpack.c.b16 %v1227, %v1223
    %v1576 = vpack.c.b16 %v1228, %v1224
    %v1577 = vpack.c.b16 %v1233, %v1229
    %v1578 = vpack.c.b16 %v1234, %v1230
    %v1579 = vpack.c.b16 %v1235, %v1231
    %v1580 = vpack.c.b16 %v1236, %v1232
    %v1581 = vpack.c.b16 %v1241, %v1237
    %v1582 = vpack.c.b16 %v1242, %v1238
    %v1583 = vpack.c.b16 %v1243, %v1239
    %v1584 = vpack.c.b16 %v1244, %v1240
    %v1585 = vpack.c.b16 %v1249, %v1245
    %v1586 = vpack.c.b16 %v1250, %v1246
    %v1587 = vpack.c.b16 %v1251, %v1247
    %v1588 = vpack.c.b16 %v1252, %v1248
    %v1589 = vpack.c.b16 %v1257, %v1253
    %v1590 = vpack.c.b16 %v1258, %v1254
    %v1591 = vpack.c.b16 %v1259, %v1255
    %v1592 = vpack.c.b16 %v1260, %v1256
    %v1593 = vpack.c.b16 %v1265, %v1261
    %v1594 = vpack.c.b16 %v1266, %v1262
    %v1595 = vpack.c.b16 %v1267, %v1263
    %v1596 = vpack.c.b16 %v1268, %v1264
    %v1597 = vpack.c.b16 %v1273, %v1269
    %v1598 = vpack.c.b16 %v1274, %v1270
    %v1599 = vpack.c.b16 %v1275, %v1271
    %v1600 = vpack.c.b16 %v1276, %v1272
    %v1601 = vpack.c.b16 %v1281, %v1277
    %v1602 = vpack.c.b16 %v1282, %v1278
    %v1603 = vpack.c.b16 %v1283, %v1279
    %v1604 = vpack.c.b16 %v1284, %v1280
    %v1605 = vpack.c.b16 %v1289, %v1285
    %v1606 = vpack.c.b16 %v1290, %v1286
    %v1607 = vpack.c.b16 %v1291, %v1287
    %v1608 = vpack.c.b16 %v1292, %v1288
    %v1609 = vpack.c.b16 %v1297, %v1293
    %v1610 = vpack.c.b16 %v1298, %v1294
    %v1611 = vpack.c.b16 %v1299, %v1295
    %v1612 = vpack.c.b16 %v1300, %v1296
    %v1613 = vpack.c.b16 %v1305, %v1301
    %v1614 = vpack.c.b16 %v1306, %v1302
    %v1615 = vpack.c.b16 %v1307, %v1303
    %v1616 = vpack.c.b16 %v1308, %v1304
    %v1617 = vpack.c.b16 %v1313, %v1309
    %v1618 = vpack.c.b16 %v1314, %v1310
    %v1619 = vpack.c.b16 %v1315, %v1311
    %v1620 = vpack.c.b16 %v1316, %v1312
    %v1621 = vpack.c.b16 %v1321, %v1317
    %v1622 = vpack.c.b16 %v1322, %v1318
    %v1623 = vpack.c.b16 %v1323, %v1319
    %v1624 = vpack.c.b16 %v1324, %v1320
    %v1625 = vpack.c.b16 %v1329, %v1325
    %v1626 = vpack.c.b16 %v1330, %v1326
    %v1627 = vpack.c.b16 %v1331, %v1327
    %v1628 = vpack.c.b16 %v1332, %v1328
    %v1629 = vpack.c.b16 %v1337, %v1333
    %v1630 = vpack.c.b16 %v1338, %v1334
    %v1631 = vpack.c.b16 %v1339, %v1335
    %v1632 = vpack.c.b16 %v1340, %v1336
    %v1633 = vpack.c.b16 %v1345, %v1341
    %v1634 = vpack.c.b16 %v1346, %v1342
    %v1635 = vpack.c.b16 %v1347, %v1343
    %v1636 = vpack.c.b16 %v1348, %v1344
    %v1637 = vpack.c.b16 %v1353, %v1349
    %v1638 = vpack.c.b16 %v1354, %v1350
    %v1639 = vpack.c.b16 %v1355, %v1351
    %v1640 = vpack.c.b16 %v1356, %v1352
    %v1641 = vpack.c.b16 %v1361, %v1357
    %v1642 = vpack.c.b16 %v1362, %v1358
    %v1643 = vpack.c.b16 %v1363, %v1359
    %v1644 = vpack.c.b16 %v1364, %v1360
    %v1645 = vpack.c.b16 %v1369, %v1365
    %v1646 = vpack.c.b16 %v1370, %v1366
    %v1647 = vpack.c.b16 %v1371, %v1367
    %v1648 = vpack.c.b16 %v1372, %v1368
    %v1649 = vpack.c.b16 %v1377, %v1373
    %v1650 = vpack.c.b16 %v1378, %v1374
    %v1651 = vpack.c.b16 %v1379, %v1375
    %v1652 = vpack.c.b16 %v1380, %v1376
    %v1653 = vpack.c.b16 %v1385, %v1381
    %v1654 = vpack.c.b16 %v1386, %v1382
    %v1655 = vpack.c.b16 %v1387, %v1383
    %v1656 = vpack.c.b16 %v1388, %v1384
    %v1657 = vpack.c.b16 %v1393, %v1389
    %v1658 = vpack.c.b16 %v1394, %v1390
    %v1659 = vpack.c.b16 %v1395, %v1391
    %v1660 = vpack.c.b16 %v1396, %v1392
    %v1661 = vpack.c.b16 %v1401, %v1397
    %v1662 = vpack.c.b16 %v1402, %v1398
    %v1663 = vpack.c.b16 %v1403, %v1399
    %v1664 = vpack.c.b16 %v1404, %v1400
    %v1665 = vpack.c.b16 %v1409, %v1405
    %v1666 = vpack.c.b16 %v1410, %v1406
    %v1667 = vpack.c.b16 %v1411, %v1407
    %v1668 = vpack.c.b16 %v1412, %v1408
    %1925 = vmatprep.subr.bf16.mxu0 %v1414
    %1926 = vmatpush1.bf16.msra.mxu0 %v1413
    %1927 = vmatprep.subr.bf16.mxu0 %v1418
    %1928 = vmatpush1.bf16.msra.mxu0 %v1417
    %1929 = vmatprep.subr.bf16.mxu0 %v1422
    %1930 = vmatpush1.bf16.msra.mxu0 %v1421
    %1931 = vmatprep.subr.bf16.mxu0 %v1426
    %1932 = vmatpush1.bf16.msra.mxu0 %v1425
    %1933 = vmatprep.subr.bf16.mxu0 %v1430
    %1934 = vmatpush1.bf16.msra.mxu0 %v1429
    %1935 = vmatprep.subr.bf16.mxu0 %v1434
    %1936 = vmatpush1.bf16.msra.mxu0 %v1433
    %1937 = vmatprep.subr.bf16.mxu0 %v1438
    %1938 = vmatpush1.bf16.msra.mxu0 %v1437
    %1939 = vmatprep.subr.bf16.mxu0 %v1442
    %1940 = vmatpush1.bf16.msra.mxu0 %v1441
    %1941 = vmatprep.subr.bf16.mxu0 %v1446
    %1942 = vmatpush1.bf16.msra.mxu0 %v1445
    %1943 = vmatprep.subr.bf16.mxu0 %v1450
    %1944 = vmatpush1.bf16.msra.mxu0 %v1449
    %1945 = vmatprep.subr.bf16.mxu0 %v1454
    %1946 = vmatpush1.bf16.msra.mxu0 %v1453
    %1947 = vmatprep.subr.bf16.mxu0 %v1458
    %1948 = vmatpush1.bf16.msra.mxu0 %v1457
    %1949 = vmatprep.subr.bf16.mxu0 %v1462
    %1950 = vmatpush1.bf16.msra.mxu0 %v1461
    %1951 = vmatprep.subr.bf16.mxu0 %v1466
    %1952 = vmatpush1.bf16.msra.mxu0 %v1465
    %1953 = vmatprep.subr.bf16.mxu0 %v1470
    %1954 = vmatpush1.bf16.msra.mxu0 %v1469
    %1955 = vmatprep.subr.bf16.mxu0 %v1474
    %1956 = vmatpush1.bf16.msra.mxu0 %v1473
    %1957 = vmatprep.mubr.bf16.mxu0 %v360
    %1958 = vmatmul.mubr.bf16.gmra.mrb[0].mxu0 %v359
    %v1959 = vpop.f32.mrb[0].mxu0
    %v1960 = vadd.f32 %v628, %v1959
    %v1961 = vpop.f32.mrb[0].mxu0
    %v1962 = vadd.f32 %v632, %v1961
    %v1963 = vpop.f32.mrb[0].mxu0
    %v1964 = vpop.f32.mrb[0].mxu0
    %1965 = vdwg.mxu0
    %1966 = vmatprep.subr.bf16.mxu0 %v1478
    %1967 = vmatpush1.bf16.msra.mxu0 %v1477
    %1968 = vmatprep.subr.bf16.mxu0 %v1482
    %1969 = vmatpush1.bf16.msra.mxu0 %v1481
    %1970 = vmatprep.subr.bf16.mxu0 %v1486
    %1971 = vmatpush1.bf16.msra.mxu0 %v1485
    %1972 = vmatprep.subr.bf16.mxu0 %v1490
    %1973 = vmatpush1.bf16.msra.mxu0 %v1489
    %1974 = vmatprep.subr.bf16.mxu0 %v1494
    %1975 = vmatpush1.bf16.msra.mxu0 %v1493
    %1976 = vmatprep.subr.bf16.mxu0 %v1498
    %1977 = vmatpush1.bf16.msra.mxu0 %v1497
    %1978 = vmatprep.subr.bf16.mxu0 %v1502
    %1979 = vmatpush1.bf16.msra.mxu0 %v1501
    %1980 = vmatprep.subr.bf16.mxu0 %v1506
    %1981 = vmatpush1.bf16.msra.mxu0 %v1505
    %1982 = vmatprep.subr.bf16.mxu0 %v1510
    %1983 = vmatpush1.bf16.msra.mxu0 %v1509
    %1984 = vmatprep.subr.bf16.mxu0 %v1514
    %1985 = vmatpush1.bf16.msra.mxu0 %v1513
    %1986 = vmatprep.subr.bf16.mxu0 %v1518
    %1987 = vmatpush1.bf16.msra.mxu0 %v1517
    %1988 = vmatprep.subr.bf16.mxu0 %v1522
    %1989 = vmatpush1.bf16.msra.mxu0 %v1521
    %1990 = vmatprep.subr.bf16.mxu0 %v1526
    %1991 = vmatpush1.bf16.msra.mxu0 %v1525
    %1992 = vmatprep.subr.bf16.mxu0 %v1530
    %1993 = vmatpush1.bf16.msra.mxu0 %v1529
    %1994 = vmatprep.subr.bf16.mxu0 %v1534
    %1995 = vmatpush1.bf16.msra.mxu0 %v1533
    %1996 = vmatprep.subr.bf16.mxu0 %v1538
    %1997 = vmatpush1.bf16.msra.mxu0 %v1537
    %1998 = vmatprep.mubr.bf16.mxu0 %v362
    %1999 = vmatmul.mubr.bf16.gmra.mrb[0].mxu0 %v361
    %v2000 = vpop.f32.mrb[0].mxu0
    %v2001 = vadd.f32 %v1960, %v2000
    %v2002 = vpop.f32.mrb[0].mxu0
    %v2003 = vadd.f32 %v1962, %v2002
    %v2004 = vpop.f32.mrb[0].mxu0
    %v2005 = vpop.f32.mrb[0].mxu0
    %2006 = vdwg.mxu0
    %2007 = vmatprep.subr.bf16.mxu0 %v1542
    %2008 = vmatpush1.bf16.msra.mxu0 %v1541
    %2009 = vmatprep.subr.bf16.mxu0 %v1546
    %2010 = vmatpush1.bf16.msra.mxu0 %v1545
    %2011 = vmatprep.subr.bf16.mxu0 %v1550
    %2012 = vmatpush1.bf16.msra.mxu0 %v1549
    %2013 = vmatprep.subr.bf16.mxu0 %v1554
    %2014 = vmatpush1.bf16.msra.mxu0 %v1553
    %2015 = vmatprep.subr.bf16.mxu0 %v1558
    %2016 = vmatpush1.bf16.msra.mxu0 %v1557
    %2017 = vmatprep.subr.bf16.mxu0 %v1562
    %2018 = vmatpush1.bf16.msra.mxu0 %v1561
    %2019 = vmatprep.subr.bf16.mxu0 %v1566
    %2020 = vmatpush1.bf16.msra.mxu0 %v1565
    %2021 = vmatprep.subr.bf16.mxu0 %v1570
    %2022 = vmatpush1.bf16.msra.mxu0 %v1569
    %2023 = vmatprep.subr.bf16.mxu0 %v1574
    %2024 = vmatpush1.bf16.msra.mxu0 %v1573
    %2025 = vmatprep.subr.bf16.mxu0 %v1578
    %2026 = vmatpush1.bf16.msra.mxu0 %v1577
    %2027 = vmatprep.subr.bf16.mxu0 %v1582
    %2028 = vmatpush1.bf16.msra.mxu0 %v1581
    %2029 = vmatprep.subr.bf16.mxu0 %v1586
    %2030 = vmatpush1.bf16.msra.mxu0 %v1585
    %2031 = vmatprep.subr.bf16.mxu0 %v1590
    %2032 = vmatpush1.bf16.msra.mxu0 %v1589
    %2033 = vmatprep.subr.bf16.mxu0 %v1594
    %2034 = vmatpush1.bf16.msra.mxu0 %v1593
    %2035 = vmatprep.subr.bf16.mxu0 %v1598
    %2036 = vmatpush1.bf16.msra.mxu0 %v1597
    %2037 = vmatprep.subr.bf16.mxu0 %v1602
    %2038 = vmatpush1.bf16.msra.mxu0 %v1601
    %2039 = vmatprep.mubr.bf16.mxu0 %v364
    %2040 = vmatmul.mubr.bf16.gmra.mrb[0].mxu0 %v363
    %v2041 = vpop.f32.mrb[0].mxu0
    %v2042 = vadd.f32 %v2001, %v2041
    %v2043 = vpop.f32.mrb[0].mxu0
    %v2044 = vadd.f32 %v2003, %v2043
    %v2045 = vpop.f32.mrb[0].mxu0
    %v2046 = vpop.f32.mrb[0].mxu0
    %2047 = vdwg.mxu0
    %2048 = vmatprep.subr.bf16.mxu0 %v1606
    %2049 = vmatpush1.bf16.msra.mxu0 %v1605
    %2050 = vmatprep.subr.bf16.mxu0 %v1610
    %2051 = vmatpush1.bf16.msra.mxu0 %v1609
    %2052 = vmatprep.subr.bf16.mxu0 %v1614
    %2053 = vmatpush1.bf16.msra.mxu0 %v1613
    %2054 = vmatprep.subr.bf16.mxu0 %v1618
    %2055 = vmatpush1.bf16.msra.mxu0 %v1617
    %2056 = vmatprep.subr.bf16.mxu0 %v1622
    %2057 = vmatpush1.bf16.msra.mxu0 %v1621
    %2058 = vmatprep.subr.bf16.mxu0 %v1626
    %2059 = vmatpush1.bf16.msra.mxu0 %v1625
    %2060 = vmatprep.subr.bf16.mxu0 %v1630
    %2061 = vmatpush1.bf16.msra.mxu0 %v1629
    %2062 = vmatprep.subr.bf16.mxu0 %v1634
    %2063 = vmatpush1.bf16.msra.mxu0 %v1633
    %2064 = vmatprep.subr.bf16.mxu0 %v1638
    %2065 = vmatpush1.bf16.msra.mxu0 %v1637
    %2066 = vmatprep.subr.bf16.mxu0 %v1642
    %2067 = vmatpush1.bf16.msra.mxu0 %v1641
    %2068 = vmatprep.subr.bf16.mxu0 %v1646
    %2069 = vmatpush1.bf16.msra.mxu0 %v1645
    %2070 = vmatprep.subr.bf16.mxu0 %v1650
    %2071 = vmatpush1.bf16.msra.mxu0 %v1649
    %2072 = vmatprep.subr.bf16.mxu0 %v1654
    %2073 = vmatpush1.bf16.msra.mxu0 %v1653
    %2074 = vmatprep.subr.bf16.mxu0 %v1658
    %2075 = vmatpush1.bf16.msra.mxu0 %v1657
    %2076 = vmatprep.subr.bf16.mxu0 %v1662
    %2077 = vmatpush1.bf16.msra.mxu0 %v1661
    %2078 = vmatprep.subr.bf16.mxu0 %v1666
    %2079 = vmatpush1.bf16.msra.mxu0 %v1665
    %2080 = vmatprep.mubr.bf16.mxu0 %v366
    %2081 = vmatmul.mubr.bf16.gmra.mrb[0].mxu0 %v365
    %v2082 = vpop.f32.mrb[0].mxu0
    %v2083 = vadd.f32 %v2042, %v2082
    %v2084 = vpop.f32.mrb[0].mxu0
    %v2085 = vadd.f32 %v2044, %v2084
    %v2086 = vpop.f32.mrb[0].mxu0
    %v2087 = vpop.f32.mrb[0].mxu0
    %2088 = vdwg.mxu0
    %2089 = vmatprep.subr.bf16.mxu0 %v1416
    %2090 = vmatpush1.bf16.msra.mxu0 %v1415
    %2091 = vmatprep.subr.bf16.mxu0 %v1420
    %2092 = vmatpush1.bf16.msra.mxu0 %v1419
    %2093 = vmatprep.subr.bf16.mxu0 %v1424
    %2094 = vmatpush1.bf16.msra.mxu0 %v1423
    %2095 = vmatprep.subr.bf16.mxu0 %v1428
    %2096 = vmatpush1.bf16.msra.mxu0 %v1427
    %2097 = vmatprep.subr.bf16.mxu0 %v1432
    %2098 = vmatpush1.bf16.msra.mxu0 %v1431
    %2099 = vmatprep.subr.bf16.mxu0 %v1436
    %2100 = vmatpush1.bf16.msra.mxu0 %v1435
    %2101 = vmatprep.subr.bf16.mxu0 %v1440
    %2102 = vmatpush1.bf16.msra.mxu0 %v1439
    %2103 = vmatprep.subr.bf16.mxu0 %v1444
    %2104 = vmatpush1.bf16.msra.mxu0 %v1443
    %2105 = vmatprep.subr.bf16.mxu0 %v1448
    %2106 = vmatpush1.bf16.msra.mxu0 %v1447
    %2107 = vmatprep.subr.bf16.mxu0 %v1452
    %2108 = vmatpush1.bf16.msra.mxu0 %v1451
    %2109 = vmatprep.subr.bf16.mxu0 %v1456
    %2110 = vmatpush1.bf16.msra.mxu0 %v1455
    %2111 = vmatprep.subr.bf16.mxu0 %v1460
    %2112 = vmatpush1.bf16.msra.mxu0 %v1459
    %2113 = vmatprep.subr.bf16.mxu0 %v1464
    %2114 = vmatpush1.bf16.msra.mxu0 %v1463
    %2115 = vmatprep.subr.bf16.mxu0 %v1468
    %2116 = vmatpush1.bf16.msra.mxu0 %v1467
    %2117 = vmatprep.subr.bf16.mxu0 %v1472
    %2118 = vmatpush1.bf16.msra.mxu0 %v1471
    %2119 = vmatprep.subr.bf16.mxu0 %v1476
    %2120 = vmatpush1.bf16.msra.mxu0 %v1475
    %2121 = vmatprep.mubr.bf16.mxu0 %v360
    %2122 = vmatmul.mubr.bf16.gmra.mrb[0].mxu0 %v359
    %v2123 = vpop.f32.mrb[0].mxu0
    %v2124 = vadd.f32 %v636, %v2123
    %v2125 = vpop.f32.mrb[0].mxu0
    %v2126 = vadd.f32 %v640, %v2125
    %v2127 = vpop.f32.mrb[0].mxu0
    %v2128 = vpop.f32.mrb[0].mxu0
    %2129 = vdwg.mxu0
    %2130 = vmatprep.subr.bf16.mxu0 %v1480
    %2131 = vmatpush1.bf16.msra.mxu0 %v1479
    %2132 = vmatprep.subr.bf16.mxu0 %v1484
    %2133 = vmatpush1.bf16.msra.mxu0 %v1483
    %2134 = vmatprep.subr.bf16.mxu0 %v1488
    %2135 = vmatpush1.bf16.msra.mxu0 %v1487
    %2136 = vmatprep.subr.bf16.mxu0 %v1492
    %2137 = vmatpush1.bf16.msra.mxu0 %v1491
    %2138 = vmatprep.subr.bf16.mxu0 %v1496
    %2139 = vmatpush1.bf16.msra.mxu0 %v1495
    %2140 = vmatprep.subr.bf16.mxu0 %v1500
    %2141 = vmatpush1.bf16.msra.mxu0 %v1499
    %2142 = vmatprep.subr.bf16.mxu0 %v1504
    %2143 = vmatpush1.bf16.msra.mxu0 %v1503
    %2144 = vmatprep.subr.bf16.mxu0 %v1508
    %2145 = vmatpush1.bf16.msra.mxu0 %v1507
    %2146 = vmatprep.subr.bf16.mxu0 %v1512
    %2147 = vmatpush1.bf16.msra.mxu0 %v1511
    %2148 = vmatprep.subr.bf16.mxu0 %v1516
    %2149 = vmatpush1.bf16.msra.mxu0 %v1515
    %2150 = vmatprep.subr.bf16.mxu0 %v1520
    %2151 = vmatpush1.bf16.msra.mxu0 %v1519
    %2152 = vmatprep.subr.bf16.mxu0 %v1524
    %2153 = vmatpush1.bf16.msra.mxu0 %v1523
    %2154 = vmatprep.subr.bf16.mxu0 %v1528
    %2155 = vmatpush1.bf16.msra.mxu0 %v1527
    %2156 = vmatprep.subr.bf16.mxu0 %v1532
    %2157 = vmatpush1.bf16.msra.mxu0 %v1531
    %2158 = vmatprep.subr.bf16.mxu0 %v1536
    %2159 = vmatpush1.bf16.msra.mxu0 %v1535
    %2160 = vmatprep.subr.bf16.mxu0 %v1540
    %2161 = vmatpush1.bf16.msra.mxu0 %v1539
    %2162 = vmatprep.mubr.bf16.mxu0 %v362
    %2163 = vmatmul.mubr.bf16.gmra.mrb[0].mxu0 %v361
    %v2164 = vpop.f32.mrb[0].mxu0
    %v2165 = vadd.f32 %v2124, %v2164
    %v2166 = vpop.f32.mrb[0].mxu0
    %v2167 = vadd.f32 %v2126, %v2166
    %v2168 = vpop.f32.mrb[0].mxu0
    %v2169 = vpop.f32.mrb[0].mxu0
    %2170 = vdwg.mxu0
    %2171 = vmatprep.subr.bf16.mxu0 %v1544
    %2172 = vmatpush1.bf16.msra.mxu0 %v1543
    %2173 = vmatprep.subr.bf16.mxu0 %v1548
    %2174 = vmatpush1.bf16.msra.mxu0 %v1547
    %2175 = vmatprep.subr.bf16.mxu0 %v1552
    %2176 = vmatpush1.bf16.msra.mxu0 %v1551
    %2177 = vmatprep.subr.bf16.mxu0 %v1556
    %2178 = vmatpush1.bf16.msra.mxu0 %v1555
    %2179 = vmatprep.subr.bf16.mxu0 %v1560
    %2180 = vmatpush1.bf16.msra.mxu0 %v1559
    %2181 = vmatprep.subr.bf16.mxu0 %v1564
    %2182 = vmatpush1.bf16.msra.mxu0 %v1563
    %2183 = vmatprep.subr.bf16.mxu0 %v1568
    %2184 = vmatpush1.bf16.msra.mxu0 %v1567
    %2185 = vmatprep.subr.bf16.mxu0 %v1572
    %2186 = vmatpush1.bf16.msra.mxu0 %v1571
    %2187 = vmatprep.subr.bf16.mxu0 %v1576
    %2188 = vmatpush1.bf16.msra.mxu0 %v1575
    %2189 = vmatprep.subr.bf16.mxu0 %v1580
    %2190 = vmatpush1.bf16.msra.mxu0 %v1579
    %2191 = vmatprep.subr.bf16.mxu0 %v1584
    %2192 = vmatpush1.bf16.msra.mxu0 %v1583
    %2193 = vmatprep.subr.bf16.mxu0 %v1588
    %2194 = vmatpush1.bf16.msra.mxu0 %v1587
    %2195 = vmatprep.subr.bf16.mxu0 %v1592
    %2196 = vmatpush1.bf16.msra.mxu0 %v1591
    %2197 = vmatprep.subr.bf16.mxu0 %v1596
    %2198 = vmatpush1.bf16.msra.mxu0 %v1595
    %2199 = vmatprep.subr.bf16.mxu0 %v1600
    %2200 = vmatpush1.bf16.msra.mxu0 %v1599
    %2201 = vmatprep.subr.bf16.mxu0 %v1604
    %2202 = vmatpush1.bf16.msra.mxu0 %v1603
    %2203 = vmatprep.mubr.bf16.mxu0 %v364
    %2204 = vmatmul.mubr.bf16.gmra.mrb[0].mxu0 %v363
    %v2205 = vpop.f32.mrb[0].mxu0
    %v2206 = vadd.f32 %v2165, %v2205
    %v2207 = vpop.f32.mrb[0].mxu0
    %v2208 = vadd.f32 %v2167, %v2207
    %v2209 = vpop.f32.mrb[0].mxu0
    %v2210 = vpop.f32.mrb[0].mxu0
    %2211 = vdwg.mxu0
    %2212 = vmatprep.subr.bf16.mxu0 %v1608
    %2213 = vmatpush1.bf16.msra.mxu0 %v1607
    %2214 = vmatprep.subr.bf16.mxu0 %v1612
    %2215 = vmatpush1.bf16.msra.mxu0 %v1611
    %2216 = vmatprep.subr.bf16.mxu0 %v1616
    %2217 = vmatpush1.bf16.msra.mxu0 %v1615
    %2218 = vmatprep.subr.bf16.mxu0 %v1620
    %2219 = vmatpush1.bf16.msra.mxu0 %v1619
    %2220 = vmatprep.subr.bf16.mxu0 %v1624
    %2221 = vmatpush1.bf16.msra.mxu0 %v1623
    %2222 = vmatprep.subr.bf16.mxu0 %v1628
    %2223 = vmatpush1.bf16.msra.mxu0 %v1627
    %2224 = vmatprep.subr.bf16.mxu0 %v1632
    %2225 = vmatpush1.bf16.msra.mxu0 %v1631
    %2226 = vmatprep.subr.bf16.mxu0 %v1636
    %2227 = vmatpush1.bf16.msra.mxu0 %v1635
    %2228 = vmatprep.subr.bf16.mxu0 %v1640
    %2229 = vmatpush1.bf16.msra.mxu0 %v1639
    %2230 = vmatprep.subr.bf16.mxu0 %v1644
    %2231 = vmatpush1.bf16.msra.mxu0 %v1643
    %2232 = vmatprep.subr.bf16.mxu0 %v1648
    %2233 = vmatpush1.bf16.msra.mxu0 %v1647
    %2234 = vmatprep.subr.bf16.mxu0 %v1652
    %2235 = vmatpush1.bf16.msra.mxu0 %v1651
    %2236 = vmatprep.subr.bf16.mxu0 %v1656
    %2237 = vmatpush1.bf16.msra.mxu0 %v1655
    %2238 = vmatprep.subr.bf16.mxu0 %v1660
    %2239 = vmatpush1.bf16.msra.mxu0 %v1659
    %2240 = vmatprep.subr.bf16.mxu0 %v1664
    %2241 = vmatpush1.bf16.msra.mxu0 %v1663
    %2242 = vmatprep.subr.bf16.mxu0 %v1668
    %2243 = vmatpush1.bf16.msra.mxu0 %v1667
    %2244 = vmatprep.mubr.bf16.mxu0 %v366
    %2245 = vmatmul.mubr.bf16.gmra.mrb[0].mxu0 %v365
    %v2246 = vpop.f32.mrb[0].mxu0
    %v2247 = vadd.f32 %v2206, %v2246
    %v2248 = vpop.f32.mrb[0].mxu0
    %v2249 = vadd.f32 %v2208, %v2248
    %v2250 = vpop.f32.mrb[0].mxu0
    %v2251 = vpop.f32.mrb[0].mxu0
    %2252 = vdwg.mxu0
    %v2253 = vmax.f32 %v2083, 0.0
    %v2254 = vmax.f32 %v2085, 0.0
    %v2255 = vmax.f32 %v2247, 0.0
    %v2256 = vmax.f32 %v2249, 0.0
    %v2257 = vpack.c.bf16 %v2253, %v2253
    %v2258 = vpack.c.bf16 %v2254, %v2254
    %v2259 = vpack.c.bf16 %v2255, %v2255
    %v2260 = vpack.c.bf16 %v2256, %v2256
    %v2261 = vld [vmem:[#allocation10] sm:$0xf]
    %v2262 = vld [vmem:[#allocation10 + $0x4] sm:$0xf]
    %v2263 = vld [vmem:[#allocation10 + $0x8] sm:$0xf]
    %v2264 = vld [vmem:[#allocation10 + $0xc] sm:$0xf]
    %v2265 = vld [vmem:[#allocation10 + $0x10] sm:$0xf]
    %v2266 = vld [vmem:[#allocation10 + $0x14] sm:$0xf]
    %v2267 = vld [vmem:[#allocation10 + $0x18] sm:$0xf]
    %v2268 = vld [vmem:[#allocation10 + $0x1c] sm:$0xf]
    %v2269 = vld [vmem:[#allocation10 + $0x20] sm:$0xf]
    %v2270 = vld [vmem:[#allocation10 + $0x24] sm:$0xf]
    %v2271 = vld [vmem:[#allocation10 + $0x28] sm:$0xf]
    %v2272 = vld [vmem:[#allocation10 + $0x2c] sm:$0xf]
    %v2273 = vld [vmem:[#allocation10 + $0x30] sm:$0xf]
    %v2274 = vld [vmem:[#allocation10 + $0x34] sm:$0xf]
    %v2275 = vld [vmem:[#allocation10 + $0x38] sm:$0xf]
    %v2276 = vld [vmem:[#allocation10 + $0x3c] sm:$0xf]
    %v2277 = vld [vmem:[#allocation10 + $0x40] sm:$0xf]
    %v2278 = vld [vmem:[#allocation10 + $0x44] sm:$0xf]
    %v2279 = vld [vmem:[#allocation10 + $0x48] sm:$0xf]
    %v2280 = vld [vmem:[#allocation10 + $0x4c] sm:$0xf]
    %v2281 = vld [vmem:[#allocation10 + $0x50] sm:$0xf]
    %v2282 = vld [vmem:[#allocation10 + $0x54] sm:$0xf]
    %v2283 = vld [vmem:[#allocation10 + $0x58] sm:$0xf]
    %v2284 = vld [vmem:[#allocation10 + $0x5c] sm:$0xf]
    %v2285 = vld [vmem:[#allocation10 + $0x60] sm:$0xf]
    %v2286 = vld [vmem:[#allocation10 + $0x64] sm:$0xf]
    %v2287 = vld [vmem:[#allocation10 + $0x68] sm:$0xf]
    %v2288 = vld [vmem:[#allocation10 + $0x6c] sm:$0xf]
    %v2289 = vld [vmem:[#allocation10 + $0x70] sm:$0xf]
    %v2290 = vld [vmem:[#allocation10 + $0x74] sm:$0xf]
    %v2291 = vld [vmem:[#allocation10 + $0x78] sm:$0xf]
    %v2292 = vld [vmem:[#allocation10 + $0x7c] sm:$0xf]
    %v2293 = vld [vmem:[#allocation10 + $0x80] sm:$0xf]
    %v2294 = vld [vmem:[#allocation10 + $0x84] sm:$0xf]
    %v2295 = vld [vmem:[#allocation10 + $0x88] sm:$0xf]
    %v2296 = vld [vmem:[#allocation10 + $0x8c] sm:$0xf]
    %v2297 = vld [vmem:[#allocation10 + $0x90] sm:$0xf]
    %v2298 = vld [vmem:[#allocation10 + $0x94] sm:$0xf]
    %v2299 = vld [vmem:[#allocation10 + $0x98] sm:$0xf]
    %v2300 = vld [vmem:[#allocation10 + $0x9c] sm:$0xf]
    %v2301 = vld [vmem:[#allocation10 + $0xa0] sm:$0xf]
    %v2302 = vld [vmem:[#allocation10 + $0xa4] sm:$0xf]
    %v2303 = vld [vmem:[#allocation10 + $0xa8] sm:$0xf]
    %v2304 = vld [vmem:[#allocation10 + $0xac] sm:$0xf]
    %v2305 = vld [vmem:[#allocation10 + $0xb0] sm:$0xf]
    %v2306 = vld [vmem:[#allocation10 + $0xb4] sm:$0xf]
    %v2307 = vld [vmem:[#allocation10 + $0xb8] sm:$0xf]
    %v2308 = vld [vmem:[#allocation10 + $0xbc] sm:$0xf]
    %v2309 = vld [vmem:[#allocation10 + $0xc0] sm:$0xf]
    %v2310 = vld [vmem:[#allocation10 + $0xc4] sm:$0xf]
    %v2311 = vld [vmem:[#allocation10 + $0xc8] sm:$0xf]
    %v2312 = vld [vmem:[#allocation10 + $0xcc] sm:$0xf]
    %v2313 = vld [vmem:[#allocation10 + $0xd0] sm:$0xf]
    %v2314 = vld [vmem:[#allocation10 + $0xd4] sm:$0xf]
    %v2315 = vld [vmem:[#allocation10 + $0xd8] sm:$0xf]
    %v2316 = vld [vmem:[#allocation10 + $0xdc] sm:$0xf]
    %v2317 = vld [vmem:[#allocation10 + $0xe0] sm:$0xf]
    %v2318 = vld [vmem:[#allocation10 + $0xe4] sm:$0xf]
    %v2319 = vld [vmem:[#allocation10 + $0xe8] sm:$0xf]
    %v2320 = vld [vmem:[#allocation10 + $0xec] sm:$0xf]
    %v2321 = vld [vmem:[#allocation10 + $0xf0] sm:$0xf]
    %v2322 = vld [vmem:[#allocation10 + $0xf4] sm:$0xf]
    %v2323 = vld [vmem:[#allocation10 + $0xf8] sm:$0xf]
    %v2324 = vld [vmem:[#allocation10 + $0xfc] sm:$0xf]
    %v2325 = vld [vmem:[%s6] sm:$0x1]
    %v2327 = vlaneseq
    %v2328 = vshrl.u32 %v2327, 7
    %v2329 = vsub.s32 0, %v2328
    %v2330 = vrot.slane %v2325, %v2329
    %v2396 = vunpack.c.l.b16 %v2261
    %v2397 = vunpack.c.l.b16 %v2262
    %v2398 = vunpack.c.l.b16 %v2263
    %v2399 = vunpack.c.l.b16 %v2264
    %v2400 = vunpack.c.l.b16 %v2265
    %v2401 = vunpack.c.l.b16 %v2266
    %v2402 = vunpack.c.l.b16 %v2267
    %v2403 = vunpack.c.l.b16 %v2268
    %v2404 = vunpack.c.l.b16 %v2269
    %v2405 = vunpack.c.l.b16 %v2270
    %v2406 = vunpack.c.l.b16 %v2271
    %v2407 = vunpack.c.l.b16 %v2272
    %v2408 = vunpack.c.l.b16 %v2273
    %v2409 = vunpack.c.l.b16 %v2274
    %v2410 = vunpack.c.l.b16 %v2275
    %v2411 = vunpack.c.l.b16 %v2276
    %v2412 = vunpack.c.l.b16 %v2277
    %v2413 = vunpack.c.l.b16 %v2278
    %v2414 = vunpack.c.l.b16 %v2279
    %v2415 = vunpack.c.l.b16 %v2280
    %v2416 = vunpack.c.l.b16 %v2281
    %v2417 = vunpack.c.l.b16 %v2282
    %v2418 = vunpack.c.l.b16 %v2283
    %v2419 = vunpack.c.l.b16 %v2284
    %v2420 = vunpack.c.l.b16 %v2285
    %v2421 = vunpack.c.l.b16 %v2286
    %v2422 = vunpack.c.l.b16 %v2287
    %v2423 = vunpack.c.l.b16 %v2288
    %v2424 = vunpack.c.l.b16 %v2289
    %v2425 = vunpack.c.l.b16 %v2290
    %v2426 = vunpack.c.l.b16 %v2291
    %v2427 = vunpack.c.l.b16 %v2292
    %v2428 = vunpack.c.l.b16 %v2293
    %v2429 = vunpack.c.l.b16 %v2294
    %v2430 = vunpack.c.l.b16 %v2295
    %v2431 = vunpack.c.l.b16 %v2296
    %v2432 = vunpack.c.l.b16 %v2297
    %v2433 = vunpack.c.l.b16 %v2298
    %v2434 = vunpack.c.l.b16 %v2299
    %v2435 = vunpack.c.l.b16 %v2300
    %v2436 = vunpack.c.l.b16 %v2301
    %v2437 = vunpack.c.l.b16 %v2302
    %v2438 = vunpack.c.l.b16 %v2303
    %v2439 = vunpack.c.l.b16 %v2304
    %v2440 = vunpack.c.l.b16 %v2305
    %v2441 = vunpack.c.l.b16 %v2306
    %v2442 = vunpack.c.l.b16 %v2307
    %v2443 = vunpack.c.l.b16 %v2308
    %v2444 = vunpack.c.l.b16 %v2309
    %v2445 = vunpack.c.l.b16 %v2310
    %v2446 = vunpack.c.l.b16 %v2311
    %v2447 = vunpack.c.l.b16 %v2312
    %v2448 = vunpack.c.l.b16 %v2313
    %v2449 = vunpack.c.l.b16 %v2314
    %v2450 = vunpack.c.l.b16 %v2315
    %v2451 = vunpack.c.l.b16 %v2316
    %v2452 = vunpack.c.l.b16 %v2317
    %v2453 = vunpack.c.l.b16 %v2318
    %v2454 = vunpack.c.l.b16 %v2319
    %v2455 = vunpack.c.l.b16 %v2320
    %v2456 = vunpack.c.l.b16 %v2321
    %v2457 = vunpack.c.l.b16 %v2322
    %v2458 = vunpack.c.l.b16 %v2323
    %v2459 = vunpack.c.l.b16 %v2324
    %v2460 = vpack.c.b16 %v2397, %v2396
    %v2461 = vpack.c.b16 %v2399, %v2398
    %v2462 = vpack.c.b16 %v2401, %v2400
    %v2463 = vpack.c.b16 %v2403, %v2402
    %v2464 = vpack.c.b16 %v2405, %v2404
    %v2465 = vpack.c.b16 %v2407, %v2406
    %v2466 = vpack.c.b16 %v2409, %v2408
    %v2467 = vpack.c.b16 %v2411, %v2410
    %v2468 = vpack.c.b16 %v2413, %v2412
    %v2469 = vpack.c.b16 %v2415, %v2414
    %v2470 = vpack.c.b16 %v2417, %v2416
    %v2471 = vpack.c.b16 %v2419, %v2418
    %v2472 = vpack.c.b16 %v2421, %v2420
    %v2473 = vpack.c.b16 %v2423, %v2422
    %v2474 = vpack.c.b16 %v2425, %v2424
    %v2475 = vpack.c.b16 %v2427, %v2426
    %v2476 = vpack.c.b16 %v2429, %v2428
    %v2477 = vpack.c.b16 %v2431, %v2430
    %v2478 = vpack.c.b16 %v2433, %v2432
    %v2479 = vpack.c.b16 %v2435, %v2434
    %v2480 = vpack.c.b16 %v2437, %v2436
    %v2481 = vpack.c.b16 %v2439, %v2438
    %v2482 = vpack.c.b16 %v2441, %v2440
    %v2483 = vpack.c.b16 %v2443, %v2442
    %v2484 = vpack.c.b16 %v2445, %v2444
    %v2485 = vpack.c.b16 %v2447, %v2446
    %v2486 = vpack.c.b16 %v2449, %v2448
    %v2487 = vpack.c.b16 %v2451, %v2450
    %v2488 = vpack.c.b16 %v2453, %v2452
    %v2489 = vpack.c.b16 %v2455, %v2454
    %v2490 = vpack.c.b16 %v2457, %v2456
    %v2491 = vpack.c.b16 %v2459, %v2458
    %2524 = vmatprep.subr.bf16.mxu0 0
    %2525 = vmatpush1.bf16.msra.mxu0 %v2460
    %2526 = vmatprep.subr.bf16.mxu0 0
    %2527 = vmatpush1.bf16.msra.mxu0 %v2461
    %2528 = vmatprep.subr.bf16.mxu0 0
    %2529 = vmatpush1.bf16.msra.mxu0 %v2462
    %2530 = vmatprep.subr.bf16.mxu0 0
    %2531 = vmatpush1.bf16.msra.mxu0 %v2463
    %2532 = vmatprep.subr.bf16.mxu0 0
    %2533 = vmatpush1.bf16.msra.mxu0 %v2464
    %2534 = vmatprep.subr.bf16.mxu0 0
    %2535 = vmatpush1.bf16.msra.mxu0 %v2465
    %2536 = vmatprep.subr.bf16.mxu0 0
    %2537 = vmatpush1.bf16.msra.mxu0 %v2466
    %2538 = vmatprep.subr.bf16.mxu0 0
    %2539 = vmatpush1.bf16.msra.mxu0 %v2467
    %2540 = vmatprep.subr.bf16.mxu0 0
    %2541 = vmatpush1.bf16.msra.mxu0 %v2468
    %2542 = vmatprep.subr.bf16.mxu0 0
    %2543 = vmatpush1.bf16.msra.mxu0 %v2469
    %2544 = vmatprep.subr.bf16.mxu0 0
    %2545 = vmatpush1.bf16.msra.mxu0 %v2470
    %2546 = vmatprep.subr.bf16.mxu0 0
    %2547 = vmatpush1.bf16.msra.mxu0 %v2471
    %2548 = vmatprep.subr.bf16.mxu0 0
    %2549 = vmatpush1.bf16.msra.mxu0 %v2472
    %2550 = vmatprep.subr.bf16.mxu0 0
    %2551 = vmatpush1.bf16.msra.mxu0 %v2473
    %2552 = vmatprep.subr.bf16.mxu0 0
    %2553 = vmatpush1.bf16.msra.mxu0 %v2474
    %2554 = vmatprep.subr.bf16.mxu0 0
    %2555 = vmatpush1.bf16.msra.mxu0 %v2475
    %2556 = vmatprep.mubr.bf16.mxu0 %v2258
    %2557 = vmatmul.mubr.bf16.gmra.mrb[0].mxu0 %v2257
    %v2558 = vpop.f32.mrb[0].mxu0
    %v2559 = vadd.f32 %v2330, %v2558
    %v2560 = vpop.f32.mrb[0].mxu0
    %v2561 = vpop.f32.mrb[0].mxu0
    %v2562 = vpop.f32.mrb[0].mxu0
    %2563 = vdwg.mxu0
    %2564 = vmatprep.subr.bf16.mxu0 0
    %2565 = vmatpush1.bf16.msra.mxu0 %v2476
    %2566 = vmatprep.subr.bf16.mxu0 0
    %2567 = vmatpush1.bf16.msra.mxu0 %v2477
    %2568 = vmatprep.subr.bf16.mxu0 0
    %2569 = vmatpush1.bf16.msra.mxu0 %v2478
    %2570 = vmatprep.subr.bf16.mxu0 0
    %2571 = vmatpush1.bf16.msra.mxu0 %v2479
    %2572 = vmatprep.subr.bf16.mxu0 0
    %2573 = vmatpush1.bf16.msra.mxu0 %v2480
    %2574 = vmatprep.subr.bf16.mxu0 0
    %2575 = vmatpush1.bf16.msra.mxu0 %v2481
    %2576 = vmatprep.subr.bf16.mxu0 0
    %2577 = vmatpush1.bf16.msra.mxu0 %v2482
    %2578 = vmatprep.subr.bf16.mxu0 0
    %2579 = vmatpush1.bf16.msra.mxu0 %v2483
    %2580 = vmatprep.subr.bf16.mxu0 0
    %2581 = vmatpush1.bf16.msra.mxu0 %v2484
    %2582 = vmatprep.subr.bf16.mxu0 0
    %2583 = vmatpush1.bf16.msra.mxu0 %v2485
    %2584 = vmatprep.subr.bf16.mxu0 0
    %2585 = vmatpush1.bf16.msra.mxu0 %v2486
    %2586 = vmatprep.subr.bf16.mxu0 0
    %2587 = vmatpush1.bf16.msra.mxu0 %v2487
    %2588 = vmatprep.subr.bf16.mxu0 0
    %2589 = vmatpush1.bf16.msra.mxu0 %v2488
    %2590 = vmatprep.subr.bf16.mxu0 0
    %2591 = vmatpush1.bf16.msra.mxu0 %v2489
    %2592 = vmatprep.subr.bf16.mxu0 0
    %2593 = vmatpush1.bf16.msra.mxu0 %v2490
    %2594 = vmatprep.subr.bf16.mxu0 0
    %2595 = vmatpush1.bf16.msra.mxu0 %v2491
    %2596 = vmatprep.mubr.bf16.mxu0 %v2260
    %2597 = vmatmul.mubr.bf16.gmra.mrb[0].mxu0 %v2259
    %v2598 = vpop.f32.mrb[0].mxu0
    %v2599 = vadd.f32 %v2559, %v2598
    %v2600 = vpop.f32.mrb[0].mxu0
    %v2601 = vpop.f32.mrb[0].mxu0
    %v2602 = vpop.f32.mrb[0].mxu0
    %2603 = vdwg.mxu0
    %2604 = vst [vmem:[#allocation11] sm:$0xff] %v2599
    // Predicated region
    $region50: #{tpu_custom_call.1} parent=1 // pred_check
      _
    $region51: #{tpu_custom_call.1} parent=1 // pred_check_branch
      %2606 = sbr.rel (0) target = $region53
    $region52: #{tpu_custom_call.1} parent=1 // pred_region
      %s2608 = ssub.s32 128, 128
      %2609 = vsyncadd [#allocation4], %s2608
      %s2611 = sshll.u32 [#allocation11], 4
      %s2612 = int_to_ptr.vmem [resolvable:$true] %s2611
      %2614 = dma.vmem_to_hbm [thread:$0]  %s2612, 128, %s7, [#allocation4]
    $region53: #{tpu_custom_call.1} parent=1 // pred_fallthru
      _
    // Predicated region
    $region54: #{tpu_custom_call.1} parent=1 // pred_check
      _
    $region55: #{tpu_custom_call.1} parent=1 // pred_check_branch
      %2616 = sbr.rel (0) target = $region57
    $region56: #{tpu_custom_call.1} parent=1 // pred_region
      %2617 = dma.done [#allocation4], 128
    $region57: #{tpu_custom_call.1} parent=1 // pred_fallthru
      _
    %2618 = vsyncpa [#allocation3], 1
    %2619 = vsyncpa [#allocation6], 1
    %2620 = vsyncpa [#allocation9], 1
    %2621 = vsyncpa [#allocation4], 1

</llo_original>
